<compile_context>
chip_gen: v7x
topology: tpu7x:2x2x1
jax: 0.10.0
libtpu: 0.0.40
codegen_flags: <defaults>
</compile_context>

<pallas_src>
import functools

import jax
import jax.numpy as jnp
import numpy as np
from jax.experimental import pallas as pl
from jax.experimental.pallas import tpu as pltpu

N_FEATURE = 32
NEG_SLOPE = 0.01        # PyTorch F.leaky_relu default
K = 5                   # Conv1d kernel size
CIN = 2                 # conv1 input channels (x_h, x_v)
LANE = 128
STRIP_LB = 8            # inner strip = 1024 lanes -> accumulators stay in vregs
MAX_BLOCK_LB = 32       # batch block = up to 4096 lanes per grid step


def _leaky_relu(v):
    # mul + max (2 VALU ops) instead of mul + cmp + select (3).
    return jnp.maximum(v, NEG_SLOPE * v)


def feature_block_kernel(x_ref, w1_ref, b1_ref, w2_ref, b2_ref, out_ref,
                         xv_scr, f1_scr, *, perm):
    """One batch block (batch on the 128-wide lane axis).

    x_ref   : (L, B_blk)       VMEM, x_h plane (row-major board flatten)
    w1_ref  : (C1*CIN*K,)      SMEM, flat [c_out, c_in, k]
    b1_ref  : (C1,)            SMEM
    w2_ref  : (C2*C1*K,)       SMEM, flat [c_out, c_in, k]
    b2_ref  : (C2,)            SMEM
    out_ref : (C2, L2, B_blk)  VMEM, lane-dense stores
    xv_scr  : (L, B_blk)       VMEM scratch, x_v plane (board transpose)
    f1_scr  : (C1, L1, B_blk)  VMEM scratch, conv1 activations
    perm    : static tuple, x_v[t] = x_h[perm[t]]
    """
    L, bblk = x_ref.shape
    c1 = b1_ref.shape[0]
    c2, l2, _ = out_ref.shape
    l1 = L - K + 1

    # ---- build the board-transpose plane once per block (static row perm) ----
    for t in range(L):
        p = perm[t]
        xv_scr[t:t + 1, :] = x_ref[p:p + 1, :]

    # ---- lane strips: each strip's accumulator + tap slab fit in registers ---
    sw = min(bblk, STRIP_LB * LANE)
    for s0 in range(0, bblk, sw):
        w = min(sw, bblk - s0)
        lanes = slice(s0, s0 + w)

        # conv1: output-channel outermost, bias-initialized register accumulator
        for co in range(c1):
            acc = jnp.full((l1, w), b1_ref[co], jnp.float32)
            for kk in range(K):
                acc = acc + w1_ref[(co * CIN + 0) * K + kk] * x_ref[kk:kk + l1, lanes]
                acc = acc + w1_ref[(co * CIN + 1) * K + kk] * xv_scr[kk:kk + l1, lanes]
            f1_scr[co, :, lanes] = _leaky_relu(acc)

        # conv2: same structure, taps ref-sliced from the f1 VMEM scratch
        for co in range(c2):
            acc = jnp.full((l2, w), b2_ref[co], jnp.float32)
            for ci in range(c1):
                for kk in range(K):
                    acc = acc + (w2_ref[(co * c1 + ci) * K + kk]
                                 * f1_scr[ci, kk:kk + l2, lanes])
            out_ref[co, :, lanes] = _leaky_relu(acc).astype(out_ref.dtype)


def feature_block_forward(x, w1, b1, w2, b2):
    """x: (B, H, W); w1: (C1, 2, K); b1: (C1,); w2: (C2, C1, K); b2: (C2,).
    Returns (B, C2, H*W - 2*(K-1)) exactly like the PyTorch module."""
    B, H, W = x.shape
    L = H * W
    l1 = L - (K - 1)
    l2 = L - 2 * (K - 1)
    c1 = w1.shape[0]
    c2 = w2.shape[0]

    # Single wrapper-side relayout: (B,H,W) -> (L, B) x_h plane, batch on lanes.
    # (x_v is rebuilt inside the kernel, halving the pre-kernel HBM traffic.)
    xh = jnp.transpose(x.astype(jnp.float32).reshape(B, L))          # (L, B)

    # Batch blocking: lane-dense (multiples of 128); large blocks to amortize
    # grid-step overhead; >= 2 even blocks when possible so v7x's two
    # TensorCores both get work via dimension_semantics=("parallel",).
    nlb = -(-B // LANE)                      # lane-blocks needed for the batch
    if nlb <= 1:
        n_blk, blk_lb = 1, 1
    else:
        n_blk = max(2, -(-nlb // MAX_BLOCK_LB))
        n_blk += n_blk % 2                   # even -> both v7x TCs busy
        blk_lb = -(-nlb // n_blk)
    bblk = blk_lb * LANE
    b_pad = n_blk * bblk
    if b_pad != B:
        xh = jnp.pad(xh, ((0, 0), (0, b_pad - B)))

    # Static permutation: x_v[t] = x_h[(t % H) * W + (t // H)]
    # (matches x.transpose(2,1).reshape(B,1,-1)).
    perm = tuple((t % H) * W + (t // H) for t in range(L))

    # Tiny parameter tensors -> flat 1-D f32 in SMEM (no 2-D SMEM padding).
    w1_flat = w1.astype(jnp.float32).reshape(-1)
    w2_flat = w2.astype(jnp.float32).reshape(-1)
    b1_f = b1.astype(jnp.float32)
    b2_f = b2.astype(jnp.float32)

    smem = pl.BlockSpec(memory_space=pltpu.MemorySpace.SMEM)
    out_clb = pl.pallas_call(
        functools.partial(feature_block_kernel, perm=perm),
        out_shape=jax.ShapeDtypeStruct((c2, l2, b_pad), jnp.float32),
        grid=(n_blk,),
        in_specs=[
            pl.BlockSpec((L, bblk), lambda i: (0, i)),
            smem, smem, smem, smem,
        ],
        out_specs=pl.BlockSpec((c2, l2, bblk), lambda i: (0, 0, i)),
        scratch_shapes=[
            pltpu.VMEM((L, bblk), jnp.float32),       # x_v plane
            pltpu.VMEM((c1, l1, bblk), jnp.float32),  # conv1 activations
        ],
        compiler_params=pltpu.CompilerParams(
            dimension_semantics=("parallel",)),
    )(xh, w1_flat, b1_f, w2_flat, b2_f)

    # One small transpose back to the PyTorch NCW layout.
    # TODO(synk): skip if the consumer accepts (C2, L2, B) batch-minor layout.
    return jnp.transpose(out_clb[:, :, :B], (2, 0, 1))               # (B,C2,L2)


def ref_forward(x, w1, b1, w2, b2):
    """Pure-JAX reference using lax.conv (independent of the kernel math)."""
    B = x.shape[0]
    x_h = x.reshape(B, 1, -1)
    x_v = jnp.transpose(x, (0, 2, 1)).reshape(B, 1, -1)
    inp = jnp.concatenate([x_h, x_v], axis=1)
    dn1 = jax.lax.conv_dimension_numbers(inp.shape, w1.shape, ('NCH', 'OIH', 'NCH'))
    f1 = jax.lax.conv_general_dilated(inp, w1, (1,), 'VALID', dimension_numbers=dn1)
    f1 = jnp.where(f1 >= 0, f1, NEG_SLOPE * f1) if False else None  # unused branch guard
    # (recompute with bias, keeping reference fully independent)
    f1 = jax.lax.conv_general_dilated(inp, w1, (1,), 'VALID', dimension_numbers=dn1)
    f1 = f1 + b1[None, :, None]
    f1 = jnp.where(f1 >= 0, f1, NEG_SLOPE * f1)
    dn2 = jax.lax.conv_dimension_numbers(f1.shape, w2.shape, ('NCH', 'OIH', 'NCH'))
    f2 = jax.lax.conv_general_dilated(f1, w2, (1,), 'VALID', dimension_numbers=dn2)
    f2 = f2 + b2[None, :, None]
    return jnp.where(f2 >= 0, f2, NEG_SLOPE * f2)


if __name__ == "__main__":
    key = jax.random.PRNGKey(0)
    kx, kw1, kb1, kw2, kb2, kx2 = jax.random.split(key, 6)

    # Small shapes consistent with the module: 4x4 board -> L = 16.
    B, H, W = 2, 4, 4
    n_conv1, n_conv2 = 4, 8

    x = jax.random.normal(kx, (B, H, W), jnp.float32)
    # Deterministic synthetic parameters (PyTorch Conv1d weight/bias shapes).
    w1 = 0.3 * jax.random.normal(kw1, (n_conv1, 2, K), jnp.float32)
    b1 = 0.1 * jax.random.normal(kb1, (n_conv1,), jnp.float32)
    w2 = 0.3 * jax.random.normal(kw2, (n_conv2, n_conv1, K), jnp.float32)
    b2 = 0.1 * jax.random.normal(kb2, (n_conv2,), jnp.float32)

    out = feature_block_forward(x, w1, b1, w2, b2)
    jax.block_until_ready(out)
    assert out.shape == (B, n_conv2, H * W - 2 * (K - 1)), out.shape
    ref = ref_forward(x, w1, b1, w2, b2)
    np.testing.assert_allclose(np.asarray(out), np.asarray(ref),
                               rtol=1e-5, atol=1e-5)

    # Second check: batch spanning several lane-blocks (exercises the even
    # multi-block grid, padding, and scratch reuse paths).
    B2 = 260
    x2 = jax.random.normal(kx2, (B2, H, W), jnp.float32)
    out2 = feature_block_forward(x2, w1, b1, w2, b2)
    jax.block_until_ready(out2)
    ref2 = ref_forward(x2, w1, b1, w2, b2)
    np.testing.assert_allclose(np.asarray(out2), np.asarray(ref2),
                               rtol=1e-5, atol=1e-5)

    print("KERNEL_OK")
</pallas_src>

<mosaic_0001>
module attributes {stable_mosaic.version = 11 : i64} {
  func.func @feature_block_kernel(%arg0: i32, %arg1: memref<16x128xf32, #tpu.memory_space<vmem>>, %arg2: memref<40xf32, #tpu.memory_space<smem>>, %arg3: memref<4xf32, #tpu.memory_space<smem>>, %arg4: memref<160xf32, #tpu.memory_space<smem>>, %arg5: memref<8xf32, #tpu.memory_space<smem>>, %arg6: memref<8x8x128xf32, #tpu.memory_space<vmem>>, %arg7: memref<16x128xf32, #tpu.memory_space<vmem>>, %arg8: memref<4x12x128xf32, #tpu.memory_space<vmem>>) attributes {dimension_semantics = [#tpu.dimension_semantics<parallel>], iteration_bounds = array<i64: 1>, scalar_prefetch = 0 : i64, scratch_operands = 2 : i64, tpu.core_type = #tpu.core_type<tc>, window_params = [{transform_indices = @transform_0, window_bounds = array<i64: 16, 128>}, {transform_indices = @transform_1, window_bounds = array<i64: 40>}, {transform_indices = @transform_2, window_bounds = array<i64: 4>}, {transform_indices = @transform_3, window_bounds = array<i64: 160>}, {transform_indices = @transform_4, window_bounds = array<i64: 8>}, {transform_indices = @transform_5, window_bounds = array<i64: 8, 8, 128>}]} {
    %c0 = arith.constant 0 : index
    %c0_0 = arith.constant 0 : index
    %0 = vector.load %arg1[%c0, %c0_0] : memref<16x128xf32, #tpu.memory_space<vmem>>, vector<1x128xf32>
    %c0_1 = arith.constant 0 : index
    %c0_2 = arith.constant 0 : index
    %1 = vector.load %arg7[%c0_1, %c0_2] : memref<16x128xf32, #tpu.memory_space<vmem>>, vector<1x128xf32>
    tpu.vector_store %arg7[%c0_1, %c0_2], %0 {strides = array<i32>} : memref<16x128xf32, #tpu.memory_space<vmem>>, vector<1x128xf32>,
    %c4 = arith.constant 4 : index
    %c0_3 = arith.constant 0 : index
    %2 = vector.load %arg1[%c4, %c0_3] : memref<16x128xf32, #tpu.memory_space<vmem>>, vector<1x128xf32>
    %c1 = arith.constant 1 : index
    %c0_4 = arith.constant 0 : index
    %3 = vector.load %arg7[%c1, %c0_4] : memref<16x128xf32, #tpu.memory_space<vmem>>, vector<1x128xf32>
    tpu.vector_store %arg7[%c1, %c0_4], %2 {strides = array<i32>} : memref<16x128xf32, #tpu.memory_space<vmem>>, vector<1x128xf32>,
    %c8 = arith.constant 8 : index
    %c0_5 = arith.constant 0 : index
    %4 = vector.load %arg1[%c8, %c0_5] : memref<16x128xf32, #tpu.memory_space<vmem>>, vector<1x128xf32>
    %c2 = arith.constant 2 : index
    %c0_6 = arith.constant 0 : index
    %5 = vector.load %arg7[%c2, %c0_6] : memref<16x128xf32, #tpu.memory_space<vmem>>, vector<1x128xf32>
    tpu.vector_store %arg7[%c2, %c0_6], %4 {strides = array<i32>} : memref<16x128xf32, #tpu.memory_space<vmem>>, vector<1x128xf32>,
    %c12 = arith.constant 12 : index
    %c0_7 = arith.constant 0 : index
    %6 = vector.load %arg1[%c12, %c0_7] : memref<16x128xf32, #tpu.memory_space<vmem>>, vector<1x128xf32>
    %c3 = arith.constant 3 : index
    %c0_8 = arith.constant 0 : index
    %7 = vector.load %arg7[%c3, %c0_8] : memref<16x128xf32, #tpu.memory_space<vmem>>, vector<1x128xf32>
    tpu.vector_store %arg7[%c3, %c0_8], %6 {strides = array<i32>} : memref<16x128xf32, #tpu.memory_space<vmem>>, vector<1x128xf32>,
    %c1_9 = arith.constant 1 : index
    %c0_10 = arith.constant 0 : index
    %8 = vector.load %arg1[%c1_9, %c0_10] : memref<16x128xf32, #tpu.memory_space<vmem>>, vector<1x128xf32>
    %c4_11 = arith.constant 4 : index
    %c0_12 = arith.constant 0 : index
    %9 = vector.load %arg7[%c4_11, %c0_12] : memref<16x128xf32, #tpu.memory_space<vmem>>, vector<1x128xf32>
    tpu.vector_store %arg7[%c4_11, %c0_12], %8 {strides = array<i32>} : memref<16x128xf32, #tpu.memory_space<vmem>>, vector<1x128xf32>,
    %c5 = arith.constant 5 : index
    %c0_13 = arith.constant 0 : index
    %10 = vector.load %arg1[%c5, %c0_13] : memref<16x128xf32, #tpu.memory_space<vmem>>, vector<1x128xf32>
    %c5_14 = arith.constant 5 : index
    %c0_15 = arith.constant 0 : index
    %11 = vector.load %arg7[%c5_14, %c0_15] : memref<16x128xf32, #tpu.memory_space<vmem>>, vector<1x128xf32>
    tpu.vector_store %arg7[%c5_14, %c0_15], %10 {strides = array<i32>} : memref<16x128xf32, #tpu.memory_space<vmem>>, vector<1x128xf32>,
    %c9 = arith.constant 9 : index
    %c0_16 = arith.constant 0 : index
    %12 = vector.load %arg1[%c9, %c0_16] : memref<16x128xf32, #tpu.memory_space<vmem>>, vector<1x128xf32>
    %c6 = arith.constant 6 : index
    %c0_17 = arith.constant 0 : index
    %13 = vector.load %arg7[%c6, %c0_17] : memref<16x128xf32, #tpu.memory_space<vmem>>, vector<1x128xf32>
    tpu.vector_store %arg7[%c6, %c0_17], %12 {strides = array<i32>} : memref<16x128xf32, #tpu.memory_space<vmem>>, vector<1x128xf32>,
    %c13 = arith.constant 13 : index
    %c0_18 = arith.constant 0 : index
    %14 = vector.load %arg1[%c13, %c0_18] : memref<16x128xf32, #tpu.memory_space<vmem>>, vector<1x128xf32>
    %c7 = arith.constant 7 : index
    %c0_19 = arith.constant 0 : index
    %15 = vector.load %arg7[%c7, %c0_19] : memref<16x128xf32, #tpu.memory_space<vmem>>, vector<1x128xf32>
    tpu.vector_store %arg7[%c7, %c0_19], %14 {strides = array<i32>} : memref<16x128xf32, #tpu.memory_space<vmem>>, vector<1x128xf32>,
    %c2_20 = arith.constant 2 : index
    %c0_21 = arith.constant 0 : index
    %16 = vector.load %arg1[%c2_20, %c0_21] : memref<16x128xf32, #tpu.memory_space<vmem>>, vector<1x128xf32>
    %c8_22 = arith.constant 8 : index
    %c0_23 = arith.constant 0 : index
    %17 = vector.load %arg7[%c8_22, %c0_23] : memref<16x128xf32, #tpu.memory_space<vmem>>, vector<1x128xf32>
    tpu.vector_store %arg7[%c8_22, %c0_23], %16 {strides = array<i32>} : memref<16x128xf32, #tpu.memory_space<vmem>>, vector<1x128xf32>,
    %c6_24 = arith.constant 6 : index
    %c0_25 = arith.constant 0 : index
    %18 = vector.load %arg1[%c6_24, %c0_25] : memref<16x128xf32, #tpu.memory_space<vmem>>, vector<1x128xf32>
    %c9_26 = arith.constant 9 : index
    %c0_27 = arith.constant 0 : index
    %19 = vector.load %arg7[%c9_26, %c0_27] : memref<16x128xf32, #tpu.memory_space<vmem>>, vector<1x128xf32>
    tpu.vector_store %arg7[%c9_26, %c0_27], %18 {strides = array<i32>} : memref<16x128xf32, #tpu.memory_space<vmem>>, vector<1x128xf32>,
    %c10 = arith.constant 10 : index
    %c0_28 = arith.constant 0 : index
    %20 = vector.load %arg1[%c10, %c0_28] : memref<16x128xf32, #tpu.memory_space<vmem>>, vector<1x128xf32>
    %c10_29 = arith.constant 10 : index
    %c0_30 = arith.constant 0 : index
    %21 = vector.load %arg7[%c10_29, %c0_30] : memref<16x128xf32, #tpu.memory_space<vmem>>, vector<1x128xf32>
    tpu.vector_store %arg7[%c10_29, %c0_30], %20 {strides = array<i32>} : memref<16x128xf32, #tpu.memory_space<vmem>>, vector<1x128xf32>,
    %c14 = arith.constant 14 : index
    %c0_31 = arith.constant 0 : index
    %22 = vector.load %arg1[%c14, %c0_31] : memref<16x128xf32, #tpu.memory_space<vmem>>, vector<1x128xf32>
    %c11 = arith.constant 11 : index
    %c0_32 = arith.constant 0 : index
    %23 = vector.load %arg7[%c11, %c0_32] : memref<16x128xf32, #tpu.memory_space<vmem>>, vector<1x128xf32>
    tpu.vector_store %arg7[%c11, %c0_32], %22 {strides = array<i32>} : memref<16x128xf32, #tpu.memory_space<vmem>>, vector<1x128xf32>,
    %c3_33 = arith.constant 3 : index
    %c0_34 = arith.constant 0 : index
    %24 = vector.load %arg1[%c3_33, %c0_34] : memref<16x128xf32, #tpu.memory_space<vmem>>, vector<1x128xf32>
    %c12_35 = arith.constant 12 : index
    %c0_36 = arith.constant 0 : index
    %25 = vector.load %arg7[%c12_35, %c0_36] : memref<16x128xf32, #tpu.memory_space<vmem>>, vector<1x128xf32>
    tpu.vector_store %arg7[%c12_35, %c0_36], %24 {strides = array<i32>} : memref<16x128xf32, #tpu.memory_space<vmem>>, vector<1x128xf32>,
    %c7_37 = arith.constant 7 : index
    %c0_38 = arith.constant 0 : index
    %26 = vector.load %arg1[%c7_37, %c0_38] : memref<16x128xf32, #tpu.memory_space<vmem>>, vector<1x128xf32>
    %c13_39 = arith.constant 13 : index
    %c0_40 = arith.constant 0 : index
    %27 = vector.load %arg7[%c13_39, %c0_40] : memref<16x128xf32, #tpu.memory_space<vmem>>, vector<1x128xf32>
    tpu.vector_store %arg7[%c13_39, %c0_40], %26 {strides = array<i32>} : memref<16x128xf32, #tpu.memory_space<vmem>>, vector<1x128xf32>,
    %c11_41 = arith.constant 11 : index
    %c0_42 = arith.constant 0 : index
    %28 = vector.load %arg1[%c11_41, %c0_42] : memref<16x128xf32, #tpu.memory_space<vmem>>, vector<1x128xf32>
    %c14_43 = arith.constant 14 : index
    %c0_44 = arith.constant 0 : index
    %29 = vector.load %arg7[%c14_43, %c0_44] : memref<16x128xf32, #tpu.memory_space<vmem>>, vector<1x128xf32>
    tpu.vector_store %arg7[%c14_43, %c0_44], %28 {strides = array<i32>} : memref<16x128xf32, #tpu.memory_space<vmem>>, vector<1x128xf32>,
    %c15 = arith.constant 15 : index
    %c0_45 = arith.constant 0 : index
    %30 = vector.load %arg1[%c15, %c0_45] : memref<16x128xf32, #tpu.memory_space<vmem>>, vector<1x128xf32>
    %c15_46 = arith.constant 15 : index
    %c0_47 = arith.constant 0 : index
    %31 = vector.load %arg7[%c15_46, %c0_47] : memref<16x128xf32, #tpu.memory_space<vmem>>, vector<1x128xf32>
    tpu.vector_store %arg7[%c15_46, %c0_47], %30 {strides = array<i32>} : memref<16x128xf32, #tpu.memory_space<vmem>>, vector<1x128xf32>,
    %c0_48 = arith.constant 0 : index
    %32 = memref.load %arg3[%c0_48] : memref<4xf32, #tpu.memory_space<smem>>
    %33 = vector.broadcast %32 : f32 to vector<12x128xf32>
    %c0_49 = arith.constant 0 : index
    %34 = memref.load %arg2[%c0_49] : memref<40xf32, #tpu.memory_space<smem>>
    %c0_50 = arith.constant 0 : index
    %c0_51 = arith.constant 0 : index
    %35 = vector.load %arg1[%c0_50, %c0_51] : memref<16x128xf32, #tpu.memory_space<vmem>>, vector<12x128xf32>
    %36 = vector.broadcast %34 : f32 to vector<12x128xf32>
    %37 = arith.mulf %36, %35 : vector<12x128xf32>
    %38 = arith.addf %33, %37 : vector<12x128xf32>
    %c5_52 = arith.constant 5 : index
    %39 = memref.load %arg2[%c5_52] : memref<40xf32, #tpu.memory_space<smem>>
    %c0_53 = arith.constant 0 : index
    %c0_54 = arith.constant 0 : index
    %40 = vector.load %arg7[%c0_53, %c0_54] : memref<16x128xf32, #tpu.memory_space<vmem>>, vector<12x128xf32>
    %41 = vector.broadcast %39 : f32 to vector<12x128xf32>
    %42 = arith.mulf %41, %40 : vector<12x128xf32>
    %43 = arith.addf %38, %42 : vector<12x128xf32>
    %c1_55 = arith.constant 1 : index
    %44 = memref.load %arg2[%c1_55] : memref<40xf32, #tpu.memory_space<smem>>
    %c1_56 = arith.constant 1 : index
    %c0_57 = arith.constant 0 : index
    %45 = vector.load %arg1[%c1_56, %c0_57] : memref<16x128xf32, #tpu.memory_space<vmem>>, vector<12x128xf32>
    %46 = vector.broadcast %44 : f32 to vector<12x128xf32>
    %47 = arith.mulf %46, %45 : vector<12x128xf32>
    %48 = arith.addf %43, %47 : vector<12x128xf32>
    %c6_58 = arith.constant 6 : index
    %49 = memref.load %arg2[%c6_58] : memref<40xf32, #tpu.memory_space<smem>>
    %c1_59 = arith.constant 1 : index
    %c0_60 = arith.constant 0 : index
    %50 = vector.load %arg7[%c1_59, %c0_60] : memref<16x128xf32, #tpu.memory_space<vmem>>, vector<12x128xf32>
    %51 = vector.broadcast %49 : f32 to vector<12x128xf32>
    %52 = arith.mulf %51, %50 : vector<12x128xf32>
    %53 = arith.addf %48, %52 : vector<12x128xf32>
    %c2_61 = arith.constant 2 : index
    %54 = memref.load %arg2[%c2_61] : memref<40xf32, #tpu.memory_space<smem>>
    %c2_62 = arith.constant 2 : index
    %c0_63 = arith.constant 0 : index
    %55 = vector.load %arg1[%c2_62, %c0_63] : memref<16x128xf32, #tpu.memory_space<vmem>>, vector<12x128xf32>
    %56 = vector.broadcast %54 : f32 to vector<12x128xf32>
    %57 = arith.mulf %56, %55 : vector<12x128xf32>
    %58 = arith.addf %53, %57 : vector<12x128xf32>
    %c7_64 = arith.constant 7 : index
    %59 = memref.load %arg2[%c7_64] : memref<40xf32, #tpu.memory_space<smem>>
    %c2_65 = arith.constant 2 : index
    %c0_66 = arith.constant 0 : index
    %60 = vector.load %arg7[%c2_65, %c0_66] : memref<16x128xf32, #tpu.memory_space<vmem>>, vector<12x128xf32>
    %61 = vector.broadcast %59 : f32 to vector<12x128xf32>
    %62 = arith.mulf %61, %60 : vector<12x128xf32>
    %63 = arith.addf %58, %62 : vector<12x128xf32>
    %c3_67 = arith.constant 3 : index
    %64 = memref.load %arg2[%c3_67] : memref<40xf32, #tpu.memory_space<smem>>
    %c3_68 = arith.constant 3 : index
    %c0_69 = arith.constant 0 : index
    %65 = vector.load %arg1[%c3_68, %c0_69] : memref<16x128xf32, #tpu.memory_space<vmem>>, vector<12x128xf32>
    %66 = vector.broadcast %64 : f32 to vector<12x128xf32>
    %67 = arith.mulf %66, %65 : vector<12x128xf32>
    %68 = arith.addf %63, %67 : vector<12x128xf32>
    %c8_70 = arith.constant 8 : index
    %69 = memref.load %arg2[%c8_70] : memref<40xf32, #tpu.memory_space<smem>>
    %c3_71 = arith.constant 3 : index
    %c0_72 = arith.constant 0 : index
    %70 = vector.load %arg7[%c3_71, %c0_72] : memref<16x128xf32, #tpu.memory_space<vmem>>, vector<12x128xf32>
    %71 = vector.broadcast %69 : f32 to vector<12x128xf32>
    %72 = arith.mulf %71, %70 : vector<12x128xf32>
    %73 = arith.addf %68, %72 : vector<12x128xf32>
    %c4_73 = arith.constant 4 : index
    %74 = memref.load %arg2[%c4_73] : memref<40xf32, #tpu.memory_space<smem>>
    %c4_74 = arith.constant 4 : index
    %c0_75 = arith.constant 0 : index
    %75 = vector.load %arg1[%c4_74, %c0_75] : memref<16x128xf32, #tpu.memory_space<vmem>>, vector<12x128xf32>
    %76 = vector.broadcast %74 : f32 to vector<12x128xf32>
    %77 = arith.mulf %76, %75 : vector<12x128xf32>
    %78 = arith.addf %73, %77 : vector<12x128xf32>
    %c9_76 = arith.constant 9 : index
    %79 = memref.load %arg2[%c9_76] : memref<40xf32, #tpu.memory_space<smem>>
    %c4_77 = arith.constant 4 : index
    %c0_78 = arith.constant 0 : index
    %80 = vector.load %arg7[%c4_77, %c0_78] : memref<16x128xf32, #tpu.memory_space<vmem>>, vector<12x128xf32>
    %81 = vector.broadcast %79 : f32 to vector<12x128xf32>
    %82 = arith.mulf %81, %80 : vector<12x128xf32>
    %83 = arith.addf %78, %82 : vector<12x128xf32>
    %cst = arith.constant 0.00999999977 : f32
    %84 = vector.broadcast %cst : f32 to vector<12x128xf32>
    %85 = arith.mulf %84, %83 : vector<12x128xf32>
    %86 = arith.maximumf %83, %85 : vector<12x128xf32>
    %c0_79 = arith.constant 0 : index
    %c0_80 = arith.constant 0 : index
    %c0_81 = arith.constant 0 : index
    %87 = vector.load %arg8[%c0_79, %c0_80, %c0_81] : memref<4x12x128xf32, #tpu.memory_space<vmem>>, vector<1x12x128xf32>
    %88 = vector.shape_cast %87 : vector<1x12x128xf32> to vector<12x128xf32>
    %89 = vector.shape_cast %86 : vector<12x128xf32> to vector<1x12x128xf32>
    tpu.vector_store %arg8[%c0_79, %c0_80, %c0_81], %89 {strides = array<i32>} : memref<4x12x128xf32, #tpu.memory_space<vmem>>, vector<1x12x128xf32>,
    %c1_82 = arith.constant 1 : index
    %90 = memref.load %arg3[%c1_82] : memref<4xf32, #tpu.memory_space<smem>>
    %91 = vector.broadcast %90 : f32 to vector<12x128xf32>
    %c10_83 = arith.constant 10 : index
    %92 = memref.load %arg2[%c10_83] : memref<40xf32, #tpu.memory_space<smem>>
    %c0_84 = arith.constant 0 : index
    %c0_85 = arith.constant 0 : index
    %93 = vector.load %arg1[%c0_84, %c0_85] : memref<16x128xf32, #tpu.memory_space<vmem>>, vector<12x128xf32>
    %94 = vector.broadcast %92 : f32 to vector<12x128xf32>
    %95 = arith.mulf %94, %93 : vector<12x128xf32>
    %96 = arith.addf %91, %95 : vector<12x128xf32>
    %c15_86 = arith.constant 15 : index
    %97 = memref.load %arg2[%c15_86] : memref<40xf32, #tpu.memory_space<smem>>
    %c0_87 = arith.constant 0 : index
    %c0_88 = arith.constant 0 : index
    %98 = vector.load %arg7[%c0_87, %c0_88] : memref<16x128xf32, #tpu.memory_space<vmem>>, vector<12x128xf32>
    %99 = vector.broadcast %97 : f32 to vector<12x128xf32>
    %100 = arith.mulf %99, %98 : vector<12x128xf32>
    %101 = arith.addf %96, %100 : vector<12x128xf32>
    %c11_89 = arith.constant 11 : index
    %102 = memref.load %arg2[%c11_89] : memref<40xf32, #tpu.memory_space<smem>>
    %c1_90 = arith.constant 1 : index
    %c0_91 = arith.constant 0 : index
    %103 = vector.load %arg1[%c1_90, %c0_91] : memref<16x128xf32, #tpu.memory_space<vmem>>, vector<12x128xf32>
    %104 = vector.broadcast %102 : f32 to vector<12x128xf32>
    %105 = arith.mulf %104, %103 : vector<12x128xf32>
    %106 = arith.addf %101, %105 : vector<12x128xf32>
    %c16 = arith.constant 16 : index
    %107 = memref.load %arg2[%c16] : memref<40xf32, #tpu.memory_space<smem>>
    %c1_92 = arith.constant 1 : index
    %c0_93 = arith.constant 0 : index
    %108 = vector.load %arg7[%c1_92, %c0_93] : memref<16x128xf32, #tpu.memory_space<vmem>>, vector<12x128xf32>
    %109 = vector.broadcast %107 : f32 to vector<12x128xf32>
    %110 = arith.mulf %109, %108 : vector<12x128xf32>
    %111 = arith.addf %106, %110 : vector<12x128xf32>
    %c12_94 = arith.constant 12 : index
    %112 = memref.load %arg2[%c12_94] : memref<40xf32, #tpu.memory_space<smem>>
    %c2_95 = arith.constant 2 : index
    %c0_96 = arith.constant 0 : index
    %113 = vector.load %arg1[%c2_95, %c0_96] : memref<16x128xf32, #tpu.memory_space<vmem>>, vector<12x128xf32>
    %114 = vector.broadcast %112 : f32 to vector<12x128xf32>
    %115 = arith.mulf %114, %113 : vector<12x128xf32>
    %116 = arith.addf %111, %115 : vector<12x128xf32>
    %c17 = arith.constant 17 : index
    %117 = memref.load %arg2[%c17] : memref<40xf32, #tpu.memory_space<smem>>
    %c2_97 = arith.constant 2 : index
    %c0_98 = arith.constant 0 : index
    %118 = vector.load %arg7[%c2_97, %c0_98] : memref<16x128xf32, #tpu.memory_space<vmem>>, vector<12x128xf32>
    %119 = vector.broadcast %117 : f32 to vector<12x128xf32>
    %120 = arith.mulf %119, %118 : vector<12x128xf32>
    %121 = arith.addf %116, %120 : vector<12x128xf32>
    %c13_99 = arith.constant 13 : index
    %122 = memref.load %arg2[%c13_99] : memref<40xf32, #tpu.memory_space<smem>>
    %c3_100 = arith.constant 3 : index
    %c0_101 = arith.constant 0 : index
    %123 = vector.load %arg1[%c3_100, %c0_101] : memref<16x128xf32, #tpu.memory_space<vmem>>, vector<12x128xf32>
    %124 = vector.broadcast %122 : f32 to vector<12x128xf32>
    %125 = arith.mulf %124, %123 : vector<12x128xf32>
    %126 = arith.addf %121, %125 : vector<12x128xf32>
    %c18 = arith.constant 18 : index
    %127 = memref.load %arg2[%c18] : memref<40xf32, #tpu.memory_space<smem>>
    %c3_102 = arith.constant 3 : index
    %c0_103 = arith.constant 0 : index
    %128 = vector.load %arg7[%c3_102, %c0_103] : memref<16x128xf32, #tpu.memory_space<vmem>>, vector<12x128xf32>
    %129 = vector.broadcast %127 : f32 to vector<12x128xf32>
    %130 = arith.mulf %129, %128 : vector<12x128xf32>
    %131 = arith.addf %126, %130 : vector<12x128xf32>
    %c14_104 = arith.constant 14 : index
    %132 = memref.load %arg2[%c14_104] : memref<40xf32, #tpu.memory_space<smem>>
    %c4_105 = arith.constant 4 : index
    %c0_106 = arith.constant 0 : index
    %133 = vector.load %arg1[%c4_105, %c0_106] : memref<16x128xf32, #tpu.memory_space<vmem>>, vector<12x128xf32>
    %134 = vector.broadcast %132 : f32 to vector<12x128xf32>
    %135 = arith.mulf %134, %133 : vector<12x128xf32>
    %136 = arith.addf %131, %135 : vector<12x128xf32>
    %c19 = arith.constant 19 : index
    %137 = memref.load %arg2[%c19] : memref<40xf32, #tpu.memory_space<smem>>
    %c4_107 = arith.constant 4 : index
    %c0_108 = arith.constant 0 : index
    %138 = vector.load %arg7[%c4_107, %c0_108] : memref<16x128xf32, #tpu.memory_space<vmem>>, vector<12x128xf32>
    %139 = vector.broadcast %137 : f32 to vector<12x128xf32>
    %140 = arith.mulf %139, %138 : vector<12x128xf32>
    %141 = arith.addf %136, %140 : vector<12x128xf32>
    %cst_109 = arith.constant 0.00999999977 : f32
    %142 = vector.broadcast %cst_109 : f32 to vector<12x128xf32>
    %143 = arith.mulf %142, %141 : vector<12x128xf32>
    %144 = arith.maximumf %141, %143 : vector<12x128xf32>
    %c1_110 = arith.constant 1 : index
    %c0_111 = arith.constant 0 : index
    %c0_112 = arith.constant 0 : index
    %145 = vector.load %arg8[%c1_110, %c0_111, %c0_112] : memref<4x12x128xf32, #tpu.memory_space<vmem>>, vector<1x12x128xf32>
    %146 = vector.shape_cast %145 : vector<1x12x128xf32> to vector<12x128xf32>
    %147 = vector.shape_cast %144 : vector<12x128xf32> to vector<1x12x128xf32>
    tpu.vector_store %arg8[%c1_110, %c0_111, %c0_112], %147 {strides = array<i32>} : memref<4x12x128xf32, #tpu.memory_space<vmem>>, vector<1x12x128xf32>,
    %c2_113 = arith.constant 2 : index
    %148 = memref.load %arg3[%c2_113] : memref<4xf32, #tpu.memory_space<smem>>
    %149 = vector.broadcast %148 : f32 to vector<12x128xf32>
    %c20 = arith.constant 20 : index
    %150 = memref.load %arg2[%c20] : memref<40xf32, #tpu.memory_space<smem>>
    %c0_114 = arith.constant 0 : index
    %c0_115 = arith.constant 0 : index
    %151 = vector.load %arg1[%c0_114, %c0_115] : memref<16x128xf32, #tpu.memory_space<vmem>>, vector<12x128xf32>
    %152 = vector.broadcast %150 : f32 to vector<12x128xf32>
    %153 = arith.mulf %152, %151 : vector<12x128xf32>
    %154 = arith.addf %149, %153 : vector<12x128xf32>
    %c25 = arith.constant 25 : index
    %155 = memref.load %arg2[%c25] : memref<40xf32, #tpu.memory_space<smem>>
    %c0_116 = arith.constant 0 : index
    %c0_117 = arith.constant 0 : index
    %156 = vector.load %arg7[%c0_116, %c0_117] : memref<16x128xf32, #tpu.memory_space<vmem>>, vector<12x128xf32>
    %157 = vector.broadcast %155 : f32 to vector<12x128xf32>
    %158 = arith.mulf %157, %156 : vector<12x128xf32>
    %159 = arith.addf %154, %158 : vector<12x128xf32>
    %c21 = arith.constant 21 : index
    %160 = memref.load %arg2[%c21] : memref<40xf32, #tpu.memory_space<smem>>
    %c1_118 = arith.constant 1 : index
    %c0_119 = arith.constant 0 : index
    %161 = vector.load %arg1[%c1_118, %c0_119] : memref<16x128xf32, #tpu.memory_space<vmem>>, vector<12x128xf32>
    %162 = vector.broadcast %160 : f32 to vector<12x128xf32>
    %163 = arith.mulf %162, %161 : vector<12x128xf32>
    %164 = arith.addf %159, %163 : vector<12x128xf32>
    %c26 = arith.constant 26 : index
    %165 = memref.load %arg2[%c26] : memref<40xf32, #tpu.memory_space<smem>>
    %c1_120 = arith.constant 1 : index
    %c0_121 = arith.constant 0 : index
    %166 = vector.load %arg7[%c1_120, %c0_121] : memref<16x128xf32, #tpu.memory_space<vmem>>, vector<12x128xf32>
    %167 = vector.broadcast %165 : f32 to vector<12x128xf32>
    %168 = arith.mulf %167, %166 : vector<12x128xf32>
    %169 = arith.addf %164, %168 : vector<12x128xf32>
    %c22 = arith.constant 22 : index
    %170 = memref.load %arg2[%c22] : memref<40xf32, #tpu.memory_space<smem>>
    %c2_122 = arith.constant 2 : index
    %c0_123 = arith.constant 0 : index
    %171 = vector.load %arg1[%c2_122, %c0_123] : memref<16x128xf32, #tpu.memory_space<vmem>>, vector<12x128xf32>
    %172 = vector.broadcast %170 : f32 to vector<12x128xf32>
    %173 = arith.mulf %172, %171 : vector<12x128xf32>
    %174 = arith.addf %169, %173 : vector<12x128xf32>
    %c27 = arith.constant 27 : index
    %175 = memref.load %arg2[%c27] : memref<40xf32, #tpu.memory_space<smem>>
    %c2_124 = arith.constant 2 : index
    %c0_125 = arith.constant 0 : index
    %176 = vector.load %arg7[%c2_124, %c0_125] : memref<16x128xf32, #tpu.memory_space<vmem>>, vector<12x128xf32>
    %177 = vector.broadcast %175 : f32 to vector<12x128xf32>
    %178 = arith.mulf %177, %176 : vector<12x128xf32>
    %179 = arith.addf %174, %178 : vector<12x128xf32>
    %c23 = arith.constant 23 : index
    %180 = memref.load %arg2[%c23] : memref<40xf32, #tpu.memory_space<smem>>
    %c3_126 = arith.constant 3 : index
    %c0_127 = arith.constant 0 : index
    %181 = vector.load %arg1[%c3_126, %c0_127] : memref<16x128xf32, #tpu.memory_space<vmem>>, vector<12x128xf32>
    %182 = vector.broadcast %180 : f32 to vector<12x128xf32>
    %183 = arith.mulf %182, %181 : vector<12x128xf32>
    %184 = arith.addf %179, %183 : vector<12x128xf32>
    %c28 = arith.constant 28 : index
    %185 = memref.load %arg2[%c28] : memref<40xf32, #tpu.memory_space<smem>>
    %c3_128 = arith.constant 3 : index
    %c0_129 = arith.constant 0 : index
    %186 = vector.load %arg7[%c3_128, %c0_129] : memref<16x128xf32, #tpu.memory_space<vmem>>, vector<12x128xf32>
    %187 = vector.broadcast %185 : f32 to vector<12x128xf32>
    %188 = arith.mulf %187, %186 : vector<12x128xf32>
    %189 = arith.addf %184, %188 : vector<12x128xf32>
    %c24 = arith.constant 24 : index
    %190 = memref.load %arg2[%c24] : memref<40xf32, #tpu.memory_space<smem>>
    %c4_130 = arith.constant 4 : index
    %c0_131 = arith.constant 0 : index
    %191 = vector.load %arg1[%c4_130, %c0_131] : memref<16x128xf32, #tpu.memory_space<vmem>>, vector<12x128xf32>
    %192 = vector.broadcast %190 : f32 to vector<12x128xf32>
    %193 = arith.mulf %192, %191 : vector<12x128xf32>
    %194 = arith.addf %189, %193 : vector<12x128xf32>
    %c29 = arith.constant 29 : index
    %195 = memref.load %arg2[%c29] : memref<40xf32, #tpu.memory_space<smem>>
    %c4_132 = arith.constant 4 : index
    %c0_133 = arith.constant 0 : index
    %196 = vector.load %arg7[%c4_132, %c0_133] : memref<16x128xf32, #tpu.memory_space<vmem>>, vector<12x128xf32>
    %197 = vector.broadcast %195 : f32 to vector<12x128xf32>
    %198 = arith.mulf %197, %196 : vector<12x128xf32>
    %199 = arith.addf %194, %198 : vector<12x128xf32>
    %cst_134 = arith.constant 0.00999999977 : f32
    %200 = vector.broadcast %cst_134 : f32 to vector<12x128xf32>
    %201 = arith.mulf %200, %199 : vector<12x128xf32>
    %202 = arith.maximumf %199, %201 : vector<12x128xf32>
    %c2_135 = arith.constant 2 : index
    %c0_136 = arith.constant 0 : index
    %c0_137 = arith.constant 0 : index
    %203 = vector.load %arg8[%c2_135, %c0_136, %c0_137] : memref<4x12x128xf32, #tpu.memory_space<vmem>>, vector<1x12x128xf32>
    %204 = vector.shape_cast %203 : vector<1x12x128xf32> to vector<12x128xf32>
    %205 = vector.shape_cast %202 : vector<12x128xf32> to vector<1x12x128xf32>
    tpu.vector_store %arg8[%c2_135, %c0_136, %c0_137], %205 {strides = array<i32>} : memref<4x12x128xf32, #tpu.memory_space<vmem>>, vector<1x12x128xf32>,
    %c3_138 = arith.constant 3 : index
    %206 = memref.load %arg3[%c3_138] : memref<4xf32, #tpu.memory_space<smem>>
    %207 = vector.broadcast %206 : f32 to vector<12x128xf32>
    %c30 = arith.constant 30 : index
    %208 = memref.load %arg2[%c30] : memref<40xf32, #tpu.memory_space<smem>>
    %c0_139 = arith.constant 0 : index
    %c0_140 = arith.constant 0 : index
    %209 = vector.load %arg1[%c0_139, %c0_140] : memref<16x128xf32, #tpu.memory_space<vmem>>, vector<12x128xf32>
    %210 = vector.broadcast %208 : f32 to vector<12x128xf32>
    %211 = arith.mulf %210, %209 : vector<12x128xf32>
    %212 = arith.addf %207, %211 : vector<12x128xf32>
    %c35 = arith.constant 35 : index
    %213 = memref.load %arg2[%c35] : memref<40xf32, #tpu.memory_space<smem>>
    %c0_141 = arith.constant 0 : index
    %c0_142 = arith.constant 0 : index
    %214 = vector.load %arg7[%c0_141, %c0_142] : memref<16x128xf32, #tpu.memory_space<vmem>>, vector<12x128xf32>
    %215 = vector.broadcast %213 : f32 to vector<12x128xf32>
    %216 = arith.mulf %215, %214 : vector<12x128xf32>
    %217 = arith.addf %212, %216 : vector<12x128xf32>
    %c31 = arith.constant 31 : index
    %218 = memref.load %arg2[%c31] : memref<40xf32, #tpu.memory_space<smem>>
    %c1_143 = arith.constant 1 : index
    %c0_144 = arith.constant 0 : index
    %219 = vector.load %arg1[%c1_143, %c0_144] : memref<16x128xf32, #tpu.memory_space<vmem>>, vector<12x128xf32>
    %220 = vector.broadcast %218 : f32 to vector<12x128xf32>
    %221 = arith.mulf %220, %219 : vector<12x128xf32>
    %222 = arith.addf %217, %221 : vector<12x128xf32>
    %c36 = arith.constant 36 : index
    %223 = memref.load %arg2[%c36] : memref<40xf32, #tpu.memory_space<smem>>
    %c1_145 = arith.constant 1 : index
    %c0_146 = arith.constant 0 : index
    %224 = vector.load %arg7[%c1_145, %c0_146] : memref<16x128xf32, #tpu.memory_space<vmem>>, vector<12x128xf32>
    %225 = vector.broadcast %223 : f32 to vector<12x128xf32>
    %226 = arith.mulf %225, %224 : vector<12x128xf32>
    %227 = arith.addf %222, %226 : vector<12x128xf32>
    %c32 = arith.constant 32 : index
    %228 = memref.load %arg2[%c32] : memref<40xf32, #tpu.memory_space<smem>>
    %c2_147 = arith.constant 2 : index
    %c0_148 = arith.constant 0 : index
    %229 = vector.load %arg1[%c2_147, %c0_148] : memref<16x128xf32, #tpu.memory_space<vmem>>, vector<12x128xf32>
    %230 = vector.broadcast %228 : f32 to vector<12x128xf32>
    %231 = arith.mulf %230, %229 : vector<12x128xf32>
    %232 = arith.addf %227, %231 : vector<12x128xf32>
    %c37 = arith.constant 37 : index
    %233 = memref.load %arg2[%c37] : memref<40xf32, #tpu.memory_space<smem>>
    %c2_149 = arith.constant 2 : index
    %c0_150 = arith.constant 0 : index
    %234 = vector.load %arg7[%c2_149, %c0_150] : memref<16x128xf32, #tpu.memory_space<vmem>>, vector<12x128xf32>
    %235 = vector.broadcast %233 : f32 to vector<12x128xf32>
    %236 = arith.mulf %235, %234 : vector<12x128xf32>
    %237 = arith.addf %232, %236 : vector<12x128xf32>
    %c33 = arith.constant 33 : index
    %238 = memref.load %arg2[%c33] : memref<40xf32, #tpu.memory_space<smem>>
    %c3_151 = arith.constant 3 : index
    %c0_152 = arith.constant 0 : index
    %239 = vector.load %arg1[%c3_151, %c0_152] : memref<16x128xf32, #tpu.memory_space<vmem>>, vector<12x128xf32>
    %240 = vector.broadcast %238 : f32 to vector<12x128xf32>
    %241 = arith.mulf %240, %239 : vector<12x128xf32>
    %242 = arith.addf %237, %241 : vector<12x128xf32>
    %c38 = arith.constant 38 : index
    %243 = memref.load %arg2[%c38] : memref<40xf32, #tpu.memory_space<smem>>
    %c3_153 = arith.constant 3 : index
    %c0_154 = arith.constant 0 : index
    %244 = vector.load %arg7[%c3_153, %c0_154] : memref<16x128xf32, #tpu.memory_space<vmem>>, vector<12x128xf32>
    %245 = vector.broadcast %243 : f32 to vector<12x128xf32>
    %246 = arith.mulf %245, %244 : vector<12x128xf32>
    %247 = arith.addf %242, %246 : vector<12x128xf32>
    %c34 = arith.constant 34 : index
    %248 = memref.load %arg2[%c34] : memref<40xf32, #tpu.memory_space<smem>>
    %c4_155 = arith.constant 4 : index
    %c0_156 = arith.constant 0 : index
    %249 = vector.load %arg1[%c4_155, %c0_156] : memref<16x128xf32, #tpu.memory_space<vmem>>, vector<12x128xf32>
    %250 = vector.broadcast %248 : f32 to vector<12x128xf32>
    %251 = arith.mulf %250, %249 : vector<12x128xf32>
    %252 = arith.addf %247, %251 : vector<12x128xf32>
    %c39 = arith.constant 39 : index
    %253 = memref.load %arg2[%c39] : memref<40xf32, #tpu.memory_space<smem>>
    %c4_157 = arith.constant 4 : index
    %c0_158 = arith.constant 0 : index
    %254 = vector.load %arg7[%c4_157, %c0_158] : memref<16x128xf32, #tpu.memory_space<vmem>>, vector<12x128xf32>
    %255 = vector.broadcast %253 : f32 to vector<12x128xf32>
    %256 = arith.mulf %255, %254 : vector<12x128xf32>
    %257 = arith.addf %252, %256 : vector<12x128xf32>
    %cst_159 = arith.constant 0.00999999977 : f32
    %258 = vector.broadcast %cst_159 : f32 to vector<12x128xf32>
    %259 = arith.mulf %258, %257 : vector<12x128xf32>
    %260 = arith.maximumf %257, %259 : vector<12x128xf32>
    %c3_160 = arith.constant 3 : index
    %c0_161 = arith.constant 0 : index
    %c0_162 = arith.constant 0 : index
    %261 = vector.load %arg8[%c3_160, %c0_161, %c0_162] : memref<4x12x128xf32, #tpu.memory_space<vmem>>, vector<1x12x128xf32>
    %262 = vector.shape_cast %261 : vector<1x12x128xf32> to vector<12x128xf32>
    %263 = vector.shape_cast %260 : vector<12x128xf32> to vector<1x12x128xf32>
    tpu.vector_store %arg8[%c3_160, %c0_161, %c0_162], %263 {strides = array<i32>} : memref<4x12x128xf32, #tpu.memory_space<vmem>>, vector<1x12x128xf32>,
    %c0_163 = arith.constant 0 : index
    %264 = memref.load %arg5[%c0_163] : memref<8xf32, #tpu.memory_space<smem>>
    %265 = vector.broadcast %264 : f32 to vector<8x128xf32>
    %c0_164 = arith.constant 0 : index
    %266 = memref.load %arg4[%c0_164] : memref<160xf32, #tpu.memory_space<smem>>
    %c0_165 = arith.constant 0 : index
    %c0_166 = arith.constant 0 : index
    %c0_167 = arith.constant 0 : index
    %267 = vector.load %arg8[%c0_165, %c0_166, %c0_167] : memref<4x12x128xf32, #tpu.memory_space<vmem>>, vector<1x8x128xf32>
    %268 = vector.shape_cast %267 : vector<1x8x128xf32> to vector<8x128xf32>
    %269 = vector.broadcast %266 : f32 to vector<8x128xf32>
    %270 = arith.mulf %269, %268 : vector<8x128xf32>
    %271 = arith.addf %265, %270 : vector<8x128xf32>
    %c1_168 = arith.constant 1 : index
    %272 = memref.load %arg4[%c1_168] : memref<160xf32, #tpu.memory_space<smem>>
    %c0_169 = arith.constant 0 : index
    %c1_170 = arith.constant 1 : index
    %c0_171 = arith.constant 0 : index
    %273 = vector.load %arg8[%c0_169, %c1_170, %c0_171] : memref<4x12x128xf32, #tpu.memory_space<vmem>>, vector<1x8x128xf32>
    %274 = vector.shape_cast %273 : vector<1x8x128xf32> to vector<8x128xf32>
    %275 = vector.broadcast %272 : f32 to vector<8x128xf32>
    %276 = arith.mulf %275, %274 : vector<8x128xf32>
    %277 = arith.addf %271, %276 : vector<8x128xf32>
    %c2_172 = arith.constant 2 : index
    %278 = memref.load %arg4[%c2_172] : memref<160xf32, #tpu.memory_space<smem>>
    %c0_173 = arith.constant 0 : index
    %c2_174 = arith.constant 2 : index
    %c0_175 = arith.constant 0 : index
    %279 = vector.load %arg8[%c0_173, %c2_174, %c0_175] : memref<4x12x128xf32, #tpu.memory_space<vmem>>, vector<1x8x128xf32>
    %280 = vector.shape_cast %279 : vector<1x8x128xf32> to vector<8x128xf32>
    %281 = vector.broadcast %278 : f32 to vector<8x128xf32>
    %282 = arith.mulf %281, %280 : vector<8x128xf32>
    %283 = arith.addf %277, %282 : vector<8x128xf32>
    %c3_176 = arith.constant 3 : index
    %284 = memref.load %arg4[%c3_176] : memref<160xf32, #tpu.memory_space<smem>>
    %c0_177 = arith.constant 0 : index
    %c3_178 = arith.constant 3 : index
    %c0_179 = arith.constant 0 : index
    %285 = vector.load %arg8[%c0_177, %c3_178, %c0_179] : memref<4x12x128xf32, #tpu.memory_space<vmem>>, vector<1x8x128xf32>
    %286 = vector.shape_cast %285 : vector<1x8x128xf32> to vector<8x128xf32>
    %287 = vector.broadcast %284 : f32 to vector<8x128xf32>
    %288 = arith.mulf %287, %286 : vector<8x128xf32>
    %289 = arith.addf %283, %288 : vector<8x128xf32>
    %c4_180 = arith.constant 4 : index
    %290 = memref.load %arg4[%c4_180] : memref<160xf32, #tpu.memory_space<smem>>
    %c0_181 = arith.constant 0 : index
    %c4_182 = arith.constant 4 : index
    %c0_183 = arith.constant 0 : index
    %291 = vector.load %arg8[%c0_181, %c4_182, %c0_183] : memref<4x12x128xf32, #tpu.memory_space<vmem>>, vector<1x8x128xf32>
    %292 = vector.shape_cast %291 : vector<1x8x128xf32> to vector<8x128xf32>
    %293 = vector.broadcast %290 : f32 to vector<8x128xf32>
    %294 = arith.mulf %293, %292 : vector<8x128xf32>
    %295 = arith.addf %289, %294 : vector<8x128xf32>
    %c5_184 = arith.constant 5 : index
    %296 = memref.load %arg4[%c5_184] : memref<160xf32, #tpu.memory_space<smem>>
    %c1_185 = arith.constant 1 : index
    %c0_186 = arith.constant 0 : index
    %c0_187 = arith.constant 0 : index
    %297 = vector.load %arg8[%c1_185, %c0_186, %c0_187] : memref<4x12x128xf32, #tpu.memory_space<vmem>>, vector<1x8x128xf32>
    %298 = vector.shape_cast %297 : vector<1x8x128xf32> to vector<8x128xf32>
    %299 = vector.broadcast %296 : f32 to vector<8x128xf32>
    %300 = arith.mulf %299, %298 : vector<8x128xf32>
    %301 = arith.addf %295, %300 : vector<8x128xf32>
    %c6_188 = arith.constant 6 : index
    %302 = memref.load %arg4[%c6_188] : memref<160xf32, #tpu.memory_space<smem>>
    %c1_189 = arith.constant 1 : index
    %c1_190 = arith.constant 1 : index
    %c0_191 = arith.constant 0 : index
    %303 = vector.load %arg8[%c1_189, %c1_190, %c0_191] : memref<4x12x128xf32, #tpu.memory_space<vmem>>, vector<1x8x128xf32>
    %304 = vector.shape_cast %303 : vector<1x8x128xf32> to vector<8x128xf32>
    %305 = vector.broadcast %302 : f32 to vector<8x128xf32>
    %306 = arith.mulf %305, %304 : vector<8x128xf32>
    %307 = arith.addf %301, %306 : vector<8x128xf32>
    %c7_192 = arith.constant 7 : index
    %308 = memref.load %arg4[%c7_192] : memref<160xf32, #tpu.memory_space<smem>>
    %c1_193 = arith.constant 1 : index
    %c2_194 = arith.constant 2 : index
    %c0_195 = arith.constant 0 : index
    %309 = vector.load %arg8[%c1_193, %c2_194, %c0_195] : memref<4x12x128xf32, #tpu.memory_space<vmem>>, vector<1x8x128xf32>
    %310 = vector.shape_cast %309 : vector<1x8x128xf32> to vector<8x128xf32>
    %311 = vector.broadcast %308 : f32 to vector<8x128xf32>
    %312 = arith.mulf %311, %310 : vector<8x128xf32>
    %313 = arith.addf %307, %312 : vector<8x128xf32>
    %c8_196 = arith.constant 8 : index
    %314 = memref.load %arg4[%c8_196] : memref<160xf32, #tpu.memory_space<smem>>
    %c1_197 = arith.constant 1 : index
    %c3_198 = arith.constant 3 : index
    %c0_199 = arith.constant 0 : index
    %315 = vector.load %arg8[%c1_197, %c3_198, %c0_199] : memref<4x12x128xf32, #tpu.memory_space<vmem>>, vector<1x8x128xf32>
    %316 = vector.shape_cast %315 : vector<1x8x128xf32> to vector<8x128xf32>
    %317 = vector.broadcast %314 : f32 to vector<8x128xf32>
    %318 = arith.mulf %317, %316 : vector<8x128xf32>
    %319 = arith.addf %313, %318 : vector<8x128xf32>
    %c9_200 = arith.constant 9 : index
    %320 = memref.load %arg4[%c9_200] : memref<160xf32, #tpu.memory_space<smem>>
    %c1_201 = arith.constant 1 : index
    %c4_202 = arith.constant 4 : index
    %c0_203 = arith.constant 0 : index
    %321 = vector.load %arg8[%c1_201, %c4_202, %c0_203] : memref<4x12x128xf32, #tpu.memory_space<vmem>>, vector<1x8x128xf32>
    %322 = vector.shape_cast %321 : vector<1x8x128xf32> to vector<8x128xf32>
    %323 = vector.broadcast %320 : f32 to vector<8x128xf32>
    %324 = arith.mulf %323, %322 : vector<8x128xf32>
    %325 = arith.addf %319, %324 : vector<8x128xf32>
    %c10_204 = arith.constant 10 : index
    %326 = memref.load %arg4[%c10_204] : memref<160xf32, #tpu.memory_space<smem>>
    %c2_205 = arith.constant 2 : index
    %c0_206 = arith.constant 0 : index
    %c0_207 = arith.constant 0 : index
    %327 = vector.load %arg8[%c2_205, %c0_206, %c0_207] : memref<4x12x128xf32, #tpu.memory_space<vmem>>, vector<1x8x128xf32>
    %328 = vector.shape_cast %327 : vector<1x8x128xf32> to vector<8x128xf32>
    %329 = vector.broadcast %326 : f32 to vector<8x128xf32>
    %330 = arith.mulf %329, %328 : vector<8x128xf32>
    %331 = arith.addf %325, %330 : vector<8x128xf32>
    %c11_208 = arith.constant 11 : index
    %332 = memref.load %arg4[%c11_208] : memref<160xf32, #tpu.memory_space<smem>>
    %c2_209 = arith.constant 2 : index
    %c1_210 = arith.constant 1 : index
    %c0_211 = arith.constant 0 : index
    %333 = vector.load %arg8[%c2_209, %c1_210, %c0_211] : memref<4x12x128xf32, #tpu.memory_space<vmem>>, vector<1x8x128xf32>
    %334 = vector.shape_cast %333 : vector<1x8x128xf32> to vector<8x128xf32>
    %335 = vector.broadcast %332 : f32 to vector<8x128xf32>
    %336 = arith.mulf %335, %334 : vector<8x128xf32>
    %337 = arith.addf %331, %336 : vector<8x128xf32>
    %c12_212 = arith.constant 12 : index
    %338 = memref.load %arg4[%c12_212] : memref<160xf32, #tpu.memory_space<smem>>
    %c2_213 = arith.constant 2 : index
    %c2_214 = arith.constant 2 : index
    %c0_215 = arith.constant 0 : index
    %339 = vector.load %arg8[%c2_213, %c2_214, %c0_215] : memref<4x12x128xf32, #tpu.memory_space<vmem>>, vector<1x8x128xf32>
    %340 = vector.shape_cast %339 : vector<1x8x128xf32> to vector<8x128xf32>
    %341 = vector.broadcast %338 : f32 to vector<8x128xf32>
    %342 = arith.mulf %341, %340 : vector<8x128xf32>
    %343 = arith.addf %337, %342 : vector<8x128xf32>
    %c13_216 = arith.constant 13 : index
    %344 = memref.load %arg4[%c13_216] : memref<160xf32, #tpu.memory_space<smem>>
    %c2_217 = arith.constant 2 : index
    %c3_218 = arith.constant 3 : index
    %c0_219 = arith.constant 0 : index
    %345 = vector.load %arg8[%c2_217, %c3_218, %c0_219] : memref<4x12x128xf32, #tpu.memory_space<vmem>>, vector<1x8x128xf32>
    %346 = vector.shape_cast %345 : vector<1x8x128xf32> to vector<8x128xf32>
    %347 = vector.broadcast %344 : f32 to vector<8x128xf32>
    %348 = arith.mulf %347, %346 : vector<8x128xf32>
    %349 = arith.addf %343, %348 : vector<8x128xf32>
    %c14_220 = arith.constant 14 : index
    %350 = memref.load %arg4[%c14_220] : memref<160xf32, #tpu.memory_space<smem>>
    %c2_221 = arith.constant 2 : index
    %c4_222 = arith.constant 4 : index
    %c0_223 = arith.constant 0 : index
    %351 = vector.load %arg8[%c2_221, %c4_222, %c0_223] : memref<4x12x128xf32, #tpu.memory_space<vmem>>, vector<1x8x128xf32>
    %352 = vector.shape_cast %351 : vector<1x8x128xf32> to vector<8x128xf32>
    %353 = vector.broadcast %350 : f32 to vector<8x128xf32>
    %354 = arith.mulf %353, %352 : vector<8x128xf32>
    %355 = arith.addf %349, %354 : vector<8x128xf32>
    %c15_224 = arith.constant 15 : index
    %356 = memref.load %arg4[%c15_224] : memref<160xf32, #tpu.memory_space<smem>>
    %c3_225 = arith.constant 3 : index
    %c0_226 = arith.constant 0 : index
    %c0_227 = arith.constant 0 : index
    %357 = vector.load %arg8[%c3_225, %c0_226, %c0_227] : memref<4x12x128xf32, #tpu.memory_space<vmem>>, vector<1x8x128xf32>
    %358 = vector.shape_cast %357 : vector<1x8x128xf32> to vector<8x128xf32>
    %359 = vector.broadcast %356 : f32 to vector<8x128xf32>
    %360 = arith.mulf %359, %358 : vector<8x128xf32>
    %361 = arith.addf %355, %360 : vector<8x128xf32>
    %c16_228 = arith.constant 16 : index
    %362 = memref.load %arg4[%c16_228] : memref<160xf32, #tpu.memory_space<smem>>
    %c3_229 = arith.constant 3 : index
    %c1_230 = arith.constant 1 : index
    %c0_231 = arith.constant 0 : index
    %363 = vector.load %arg8[%c3_229, %c1_230, %c0_231] : memref<4x12x128xf32, #tpu.memory_space<vmem>>, vector<1x8x128xf32>
    %364 = vector.shape_cast %363 : vector<1x8x128xf32> to vector<8x128xf32>
    %365 = vector.broadcast %362 : f32 to vector<8x128xf32>
    %366 = arith.mulf %365, %364 : vector<8x128xf32>
    %367 = arith.addf %361, %366 : vector<8x128xf32>
    %c17_232 = arith.constant 17 : index
    %368 = memref.load %arg4[%c17_232] : memref<160xf32, #tpu.memory_space<smem>>
    %c3_233 = arith.constant 3 : index
    %c2_234 = arith.constant 2 : index
    %c0_235 = arith.constant 0 : index
    %369 = vector.load %arg8[%c3_233, %c2_234, %c0_235] : memref<4x12x128xf32, #tpu.memory_space<vmem>>, vector<1x8x128xf32>
    %370 = vector.shape_cast %369 : vector<1x8x128xf32> to vector<8x128xf32>
    %371 = vector.broadcast %368 : f32 to vector<8x128xf32>
    %372 = arith.mulf %371, %370 : vector<8x128xf32>
    %373 = arith.addf %367, %372 : vector<8x128xf32>
    %c18_236 = arith.constant 18 : index
    %374 = memref.load %arg4[%c18_236] : memref<160xf32, #tpu.memory_space<smem>>
    %c3_237 = arith.constant 3 : index
    %c3_238 = arith.constant 3 : index
    %c0_239 = arith.constant 0 : index
    %375 = vector.load %arg8[%c3_237, %c3_238, %c0_239] : memref<4x12x128xf32, #tpu.memory_space<vmem>>, vector<1x8x128xf32>
    %376 = vector.shape_cast %375 : vector<1x8x128xf32> to vector<8x128xf32>
    %377 = vector.broadcast %374 : f32 to vector<8x128xf32>
    %378 = arith.mulf %377, %376 : vector<8x128xf32>
    %379 = arith.addf %373, %378 : vector<8x128xf32>
    %c19_240 = arith.constant 19 : index
    %380 = memref.load %arg4[%c19_240] : memref<160xf32, #tpu.memory_space<smem>>
    %c3_241 = arith.constant 3 : index
    %c4_242 = arith.constant 4 : index
    %c0_243 = arith.constant 0 : index
    %381 = vector.load %arg8[%c3_241, %c4_242, %c0_243] : memref<4x12x128xf32, #tpu.memory_space<vmem>>, vector<1x8x128xf32>
    %382 = vector.shape_cast %381 : vector<1x8x128xf32> to vector<8x128xf32>
    %383 = vector.broadcast %380 : f32 to vector<8x128xf32>
    %384 = arith.mulf %383, %382 : vector<8x128xf32>
    %385 = arith.addf %379, %384 : vector<8x128xf32>
    %cst_244 = arith.constant 0.00999999977 : f32
    %386 = vector.broadcast %cst_244 : f32 to vector<8x128xf32>
    %387 = arith.mulf %386, %385 : vector<8x128xf32>
    %388 = arith.maximumf %385, %387 : vector<8x128xf32>
    %c0_245 = arith.constant 0 : index
    %c0_246 = arith.constant 0 : index
    %c0_247 = arith.constant 0 : index
    %389 = vector.load %arg6[%c0_245, %c0_246, %c0_247] : memref<8x8x128xf32, #tpu.memory_space<vmem>>, vector<1x8x128xf32>
    %390 = vector.shape_cast %389 : vector<1x8x128xf32> to vector<8x128xf32>
    %391 = vector.shape_cast %388 : vector<8x128xf32> to vector<1x8x128xf32>
    tpu.vector_store %arg6[%c0_245, %c0_246, %c0_247], %391 {strides = array<i32>} : memref<8x8x128xf32, #tpu.memory_space<vmem>>, vector<1x8x128xf32>,
    %c1_248 = arith.constant 1 : index
    %392 = memref.load %arg5[%c1_248] : memref<8xf32, #tpu.memory_space<smem>>
    %393 = vector.broadcast %392 : f32 to vector<8x128xf32>
    %c20_249 = arith.constant 20 : index
    %394 = memref.load %arg4[%c20_249] : memref<160xf32, #tpu.memory_space<smem>>
    %c0_250 = arith.constant 0 : index
    %c0_251 = arith.constant 0 : index
    %c0_252 = arith.constant 0 : index
    %395 = vector.load %arg8[%c0_250, %c0_251, %c0_252] : memref<4x12x128xf32, #tpu.memory_space<vmem>>, vector<1x8x128xf32>
    %396 = vector.shape_cast %395 : vector<1x8x128xf32> to vector<8x128xf32>
    %397 = vector.broadcast %394 : f32 to vector<8x128xf32>
    %398 = arith.mulf %397, %396 : vector<8x128xf32>
    %399 = arith.addf %393, %398 : vector<8x128xf32>
    %c21_253 = arith.constant 21 : index
    %400 = memref.load %arg4[%c21_253] : memref<160xf32, #tpu.memory_space<smem>>
    %c0_254 = arith.constant 0 : index
    %c1_255 = arith.constant 1 : index
    %c0_256 = arith.constant 0 : index
    %401 = vector.load %arg8[%c0_254, %c1_255, %c0_256] : memref<4x12x128xf32, #tpu.memory_space<vmem>>, vector<1x8x128xf32>
    %402 = vector.shape_cast %401 : vector<1x8x128xf32> to vector<8x128xf32>
    %403 = vector.broadcast %400 : f32 to vector<8x128xf32>
    %404 = arith.mulf %403, %402 : vector<8x128xf32>
    %405 = arith.addf %399, %404 : vector<8x128xf32>
    %c22_257 = arith.constant 22 : index
    %406 = memref.load %arg4[%c22_257] : memref<160xf32, #tpu.memory_space<smem>>
    %c0_258 = arith.constant 0 : index
    %c2_259 = arith.constant 2 : index
    %c0_260 = arith.constant 0 : index
    %407 = vector.load %arg8[%c0_258, %c2_259, %c0_260] : memref<4x12x128xf32, #tpu.memory_space<vmem>>, vector<1x8x128xf32>
    %408 = vector.shape_cast %407 : vector<1x8x128xf32> to vector<8x128xf32>
    %409 = vector.broadcast %406 : f32 to vector<8x128xf32>
    %410 = arith.mulf %409, %408 : vector<8x128xf32>
    %411 = arith.addf %405, %410 : vector<8x128xf32>
    %c23_261 = arith.constant 23 : index
    %412 = memref.load %arg4[%c23_261] : memref<160xf32, #tpu.memory_space<smem>>
    %c0_262 = arith.constant 0 : index
    %c3_263 = arith.constant 3 : index
    %c0_264 = arith.constant 0 : index
    %413 = vector.load %arg8[%c0_262, %c3_263, %c0_264] : memref<4x12x128xf32, #tpu.memory_space<vmem>>, vector<1x8x128xf32>
    %414 = vector.shape_cast %413 : vector<1x8x128xf32> to vector<8x128xf32>
    %415 = vector.broadcast %412 : f32 to vector<8x128xf32>
    %416 = arith.mulf %415, %414 : vector<8x128xf32>
    %417 = arith.addf %411, %416 : vector<8x128xf32>
    %c24_265 = arith.constant 24 : index
    %418 = memref.load %arg4[%c24_265] : memref<160xf32, #tpu.memory_space<smem>>
    %c0_266 = arith.constant 0 : index
    %c4_267 = arith.constant 4 : index
    %c0_268 = arith.constant 0 : index
    %419 = vector.load %arg8[%c0_266, %c4_267, %c0_268] : memref<4x12x128xf32, #tpu.memory_space<vmem>>, vector<1x8x128xf32>
    %420 = vector.shape_cast %419 : vector<1x8x128xf32> to vector<8x128xf32>
    %421 = vector.broadcast %418 : f32 to vector<8x128xf32>
    %422 = arith.mulf %421, %420 : vector<8x128xf32>
    %423 = arith.addf %417, %422 : vector<8x128xf32>
    %c25_269 = arith.constant 25 : index
    %424 = memref.load %arg4[%c25_269] : memref<160xf32, #tpu.memory_space<smem>>
    %c1_270 = arith.constant 1 : index
    %c0_271 = arith.constant 0 : index
    %c0_272 = arith.constant 0 : index
    %425 = vector.load %arg8[%c1_270, %c0_271, %c0_272] : memref<4x12x128xf32, #tpu.memory_space<vmem>>, vector<1x8x128xf32>
    %426 = vector.shape_cast %425 : vector<1x8x128xf32> to vector<8x128xf32>
    %427 = vector.broadcast %424 : f32 to vector<8x128xf32>
    %428 = arith.mulf %427, %426 : vector<8x128xf32>
    %429 = arith.addf %423, %428 : vector<8x128xf32>
    %c26_273 = arith.constant 26 : index
    %430 = memref.load %arg4[%c26_273] : memref<160xf32, #tpu.memory_space<smem>>
    %c1_274 = arith.constant 1 : index
    %c1_275 = arith.constant 1 : index
    %c0_276 = arith.constant 0 : index
    %431 = vector.load %arg8[%c1_274, %c1_275, %c0_276] : memref<4x12x128xf32, #tpu.memory_space<vmem>>, vector<1x8x128xf32>
    %432 = vector.shape_cast %431 : vector<1x8x128xf32> to vector<8x128xf32>
    %433 = vector.broadcast %430 : f32 to vector<8x128xf32>
    %434 = arith.mulf %433, %432 : vector<8x128xf32>
    %435 = arith.addf %429, %434 : vector<8x128xf32>
    %c27_277 = arith.constant 27 : index
    %436 = memref.load %arg4[%c27_277] : memref<160xf32, #tpu.memory_space<smem>>
    %c1_278 = arith.constant 1 : index
    %c2_279 = arith.constant 2 : index
    %c0_280 = arith.constant 0 : index
    %437 = vector.load %arg8[%c1_278, %c2_279, %c0_280] : memref<4x12x128xf32, #tpu.memory_space<vmem>>, vector<1x8x128xf32>
    %438 = vector.shape_cast %437 : vector<1x8x128xf32> to vector<8x128xf32>
    %439 = vector.broadcast %436 : f32 to vector<8x128xf32>
    %440 = arith.mulf %439, %438 : vector<8x128xf32>
    %441 = arith.addf %435, %440 : vector<8x128xf32>
    %c28_281 = arith.constant 28 : index
    %442 = memref.load %arg4[%c28_281] : memref<160xf32, #tpu.memory_space<smem>>
    %c1_282 = arith.constant 1 : index
    %c3_283 = arith.constant 3 : index
    %c0_284 = arith.constant 0 : index
    %443 = vector.load %arg8[%c1_282, %c3_283, %c0_284] : memref<4x12x128xf32, #tpu.memory_space<vmem>>, vector<1x8x128xf32>
    %444 = vector.shape_cast %443 : vector<1x8x128xf32> to vector<8x128xf32>
    %445 = vector.broadcast %442 : f32 to vector<8x128xf32>
    %446 = arith.mulf %445, %444 : vector<8x128xf32>
    %447 = arith.addf %441, %446 : vector<8x128xf32>
    %c29_285 = arith.constant 29 : index
    %448 = memref.load %arg4[%c29_285] : memref<160xf32, #tpu.memory_space<smem>>
    %c1_286 = arith.constant 1 : index
    %c4_287 = arith.constant 4 : index
    %c0_288 = arith.constant 0 : index
    %449 = vector.load %arg8[%c1_286, %c4_287, %c0_288] : memref<4x12x128xf32, #tpu.memory_space<vmem>>, vector<1x8x128xf32>
    %450 = vector.shape_cast %449 : vector<1x8x128xf32> to vector<8x128xf32>
    %451 = vector.broadcast %448 : f32 to vector<8x128xf32>
    %452 = arith.mulf %451, %450 : vector<8x128xf32>
    %453 = arith.addf %447, %452 : vector<8x128xf32>
    %c30_289 = arith.constant 30 : index
    %454 = memref.load %arg4[%c30_289] : memref<160xf32, #tpu.memory_space<smem>>
    %c2_290 = arith.constant 2 : index
    %c0_291 = arith.constant 0 : index
    %c0_292 = arith.constant 0 : index
    %455 = vector.load %arg8[%c2_290, %c0_291, %c0_292] : memref<4x12x128xf32, #tpu.memory_space<vmem>>, vector<1x8x128xf32>
    %456 = vector.shape_cast %455 : vector<1x8x128xf32> to vector<8x128xf32>
    %457 = vector.broadcast %454 : f32 to vector<8x128xf32>
    %458 = arith.mulf %457, %456 : vector<8x128xf32>
    %459 = arith.addf %453, %458 : vector<8x128xf32>
    %c31_293 = arith.constant 31 : index
    %460 = memref.load %arg4[%c31_293] : memref<160xf32, #tpu.memory_space<smem>>
    %c2_294 = arith.constant 2 : index
    %c1_295 = arith.constant 1 : index
    %c0_296 = arith.constant 0 : index
    %461 = vector.load %arg8[%c2_294, %c1_295, %c0_296] : memref<4x12x128xf32, #tpu.memory_space<vmem>>, vector<1x8x128xf32>
    %462 = vector.shape_cast %461 : vector<1x8x128xf32> to vector<8x128xf32>
    %463 = vector.broadcast %460 : f32 to vector<8x128xf32>
    %464 = arith.mulf %463, %462 : vector<8x128xf32>
    %465 = arith.addf %459, %464 : vector<8x128xf32>
    %c32_297 = arith.constant 32 : index
    %466 = memref.load %arg4[%c32_297] : memref<160xf32, #tpu.memory_space<smem>>
    %c2_298 = arith.constant 2 : index
    %c2_299 = arith.constant 2 : index
    %c0_300 = arith.constant 0 : index
    %467 = vector.load %arg8[%c2_298, %c2_299, %c0_300] : memref<4x12x128xf32, #tpu.memory_space<vmem>>, vector<1x8x128xf32>
    %468 = vector.shape_cast %467 : vector<1x8x128xf32> to vector<8x128xf32>
    %469 = vector.broadcast %466 : f32 to vector<8x128xf32>
    %470 = arith.mulf %469, %468 : vector<8x128xf32>
    %471 = arith.addf %465, %470 : vector<8x128xf32>
    %c33_301 = arith.constant 33 : index
    %472 = memref.load %arg4[%c33_301] : memref<160xf32, #tpu.memory_space<smem>>
    %c2_302 = arith.constant 2 : index
    %c3_303 = arith.constant 3 : index
    %c0_304 = arith.constant 0 : index
    %473 = vector.load %arg8[%c2_302, %c3_303, %c0_304] : memref<4x12x128xf32, #tpu.memory_space<vmem>>, vector<1x8x128xf32>
    %474 = vector.shape_cast %473 : vector<1x8x128xf32> to vector<8x128xf32>
    %475 = vector.broadcast %472 : f32 to vector<8x128xf32>
    %476 = arith.mulf %475, %474 : vector<8x128xf32>
    %477 = arith.addf %471, %476 : vector<8x128xf32>
    %c34_305 = arith.constant 34 : index
    %478 = memref.load %arg4[%c34_305] : memref<160xf32, #tpu.memory_space<smem>>
    %c2_306 = arith.constant 2 : index
    %c4_307 = arith.constant 4 : index
    %c0_308 = arith.constant 0 : index
    %479 = vector.load %arg8[%c2_306, %c4_307, %c0_308] : memref<4x12x128xf32, #tpu.memory_space<vmem>>, vector<1x8x128xf32>
    %480 = vector.shape_cast %479 : vector<1x8x128xf32> to vector<8x128xf32>
    %481 = vector.broadcast %478 : f32 to vector<8x128xf32>
    %482 = arith.mulf %481, %480 : vector<8x128xf32>
    %483 = arith.addf %477, %482 : vector<8x128xf32>
    %c35_309 = arith.constant 35 : index
    %484 = memref.load %arg4[%c35_309] : memref<160xf32, #tpu.memory_space<smem>>
    %c3_310 = arith.constant 3 : index
    %c0_311 = arith.constant 0 : index
    %c0_312 = arith.constant 0 : index
    %485 = vector.load %arg8[%c3_310, %c0_311, %c0_312] : memref<4x12x128xf32, #tpu.memory_space<vmem>>, vector<1x8x128xf32>
    %486 = vector.shape_cast %485 : vector<1x8x128xf32> to vector<8x128xf32>
    %487 = vector.broadcast %484 : f32 to vector<8x128xf32>
    %488 = arith.mulf %487, %486 : vector<8x128xf32>
    %489 = arith.addf %483, %488 : vector<8x128xf32>
    %c36_313 = arith.constant 36 : index
    %490 = memref.load %arg4[%c36_313] : memref<160xf32, #tpu.memory_space<smem>>
    %c3_314 = arith.constant 3 : index
    %c1_315 = arith.constant 1 : index
    %c0_316 = arith.constant 0 : index
    %491 = vector.load %arg8[%c3_314, %c1_315, %c0_316] : memref<4x12x128xf32, #tpu.memory_space<vmem>>, vector<1x8x128xf32>
    %492 = vector.shape_cast %491 : vector<1x8x128xf32> to vector<8x128xf32>
    %493 = vector.broadcast %490 : f32 to vector<8x128xf32>
    %494 = arith.mulf %493, %492 : vector<8x128xf32>
    %495 = arith.addf %489, %494 : vector<8x128xf32>
    %c37_317 = arith.constant 37 : index
    %496 = memref.load %arg4[%c37_317] : memref<160xf32, #tpu.memory_space<smem>>
    %c3_318 = arith.constant 3 : index
    %c2_319 = arith.constant 2 : index
    %c0_320 = arith.constant 0 : index
    %497 = vector.load %arg8[%c3_318, %c2_319, %c0_320] : memref<4x12x128xf32, #tpu.memory_space<vmem>>, vector<1x8x128xf32>
    %498 = vector.shape_cast %497 : vector<1x8x128xf32> to vector<8x128xf32>
    %499 = vector.broadcast %496 : f32 to vector<8x128xf32>
    %500 = arith.mulf %499, %498 : vector<8x128xf32>
    %501 = arith.addf %495, %500 : vector<8x128xf32>
    %c38_321 = arith.constant 38 : index
    %502 = memref.load %arg4[%c38_321] : memref<160xf32, #tpu.memory_space<smem>>
    %c3_322 = arith.constant 3 : index
    %c3_323 = arith.constant 3 : index
    %c0_324 = arith.constant 0 : index
    %503 = vector.load %arg8[%c3_322, %c3_323, %c0_324] : memref<4x12x128xf32, #tpu.memory_space<vmem>>, vector<1x8x128xf32>
    %504 = vector.shape_cast %503 : vector<1x8x128xf32> to vector<8x128xf32>
    %505 = vector.broadcast %502 : f32 to vector<8x128xf32>
    %506 = arith.mulf %505, %504 : vector<8x128xf32>
    %507 = arith.addf %501, %506 : vector<8x128xf32>
    %c39_325 = arith.constant 39 : index
    %508 = memref.load %arg4[%c39_325] : memref<160xf32, #tpu.memory_space<smem>>
    %c3_326 = arith.constant 3 : index
    %c4_327 = arith.constant 4 : index
    %c0_328 = arith.constant 0 : index
    %509 = vector.load %arg8[%c3_326, %c4_327, %c0_328] : memref<4x12x128xf32, #tpu.memory_space<vmem>>, vector<1x8x128xf32>
    %510 = vector.shape_cast %509 : vector<1x8x128xf32> to vector<8x128xf32>
    %511 = vector.broadcast %508 : f32 to vector<8x128xf32>
    %512 = arith.mulf %511, %510 : vector<8x128xf32>
    %513 = arith.addf %507, %512 : vector<8x128xf32>
    %cst_329 = arith.constant 0.00999999977 : f32
    %514 = vector.broadcast %cst_329 : f32 to vector<8x128xf32>
    %515 = arith.mulf %514, %513 : vector<8x128xf32>
    %516 = arith.maximumf %513, %515 : vector<8x128xf32>
    %c1_330 = arith.constant 1 : index
    %c0_331 = arith.constant 0 : index
    %c0_332 = arith.constant 0 : index
    %517 = vector.load %arg6[%c1_330, %c0_331, %c0_332] : memref<8x8x128xf32, #tpu.memory_space<vmem>>, vector<1x8x128xf32>
    %518 = vector.shape_cast %517 : vector<1x8x128xf32> to vector<8x128xf32>
    %519 = vector.shape_cast %516 : vector<8x128xf32> to vector<1x8x128xf32>
    tpu.vector_store %arg6[%c1_330, %c0_331, %c0_332], %519 {strides = array<i32>} : memref<8x8x128xf32, #tpu.memory_space<vmem>>, vector<1x8x128xf32>,
    %c2_333 = arith.constant 2 : index
    %520 = memref.load %arg5[%c2_333] : memref<8xf32, #tpu.memory_space<smem>>
    %521 = vector.broadcast %520 : f32 to vector<8x128xf32>
    %c40 = arith.constant 40 : index
    %522 = memref.load %arg4[%c40] : memref<160xf32, #tpu.memory_space<smem>>
    %c0_334 = arith.constant 0 : index
    %c0_335 = arith.constant 0 : index
    %c0_336 = arith.constant 0 : index
    %523 = vector.load %arg8[%c0_334, %c0_335, %c0_336] : memref<4x12x128xf32, #tpu.memory_space<vmem>>, vector<1x8x128xf32>
    %524 = vector.shape_cast %523 : vector<1x8x128xf32> to vector<8x128xf32>
    %525 = vector.broadcast %522 : f32 to vector<8x128xf32>
    %526 = arith.mulf %525, %524 : vector<8x128xf32>
    %527 = arith.addf %521, %526 : vector<8x128xf32>
    %c41 = arith.constant 41 : index
    %528 = memref.load %arg4[%c41] : memref<160xf32, #tpu.memory_space<smem>>
    %c0_337 = arith.constant 0 : index
    %c1_338 = arith.constant 1 : index
    %c0_339 = arith.constant 0 : index
    %529 = vector.load %arg8[%c0_337, %c1_338, %c0_339] : memref<4x12x128xf32, #tpu.memory_space<vmem>>, vector<1x8x128xf32>
    %530 = vector.shape_cast %529 : vector<1x8x128xf32> to vector<8x128xf32>
    %531 = vector.broadcast %528 : f32 to vector<8x128xf32>
    %532 = arith.mulf %531, %530 : vector<8x128xf32>
    %533 = arith.addf %527, %532 : vector<8x128xf32>
    %c42 = arith.constant 42 : index
    %534 = memref.load %arg4[%c42] : memref<160xf32, #tpu.memory_space<smem>>
    %c0_340 = arith.constant 0 : index
    %c2_341 = arith.constant 2 : index
    %c0_342 = arith.constant 0 : index
    %535 = vector.load %arg8[%c0_340, %c2_341, %c0_342] : memref<4x12x128xf32, #tpu.memory_space<vmem>>, vector<1x8x128xf32>
    %536 = vector.shape_cast %535 : vector<1x8x128xf32> to vector<8x128xf32>
    %537 = vector.broadcast %534 : f32 to vector<8x128xf32>
    %538 = arith.mulf %537, %536 : vector<8x128xf32>
    %539 = arith.addf %533, %538 : vector<8x128xf32>
    %c43 = arith.constant 43 : index
    %540 = memref.load %arg4[%c43] : memref<160xf32, #tpu.memory_space<smem>>
    %c0_343 = arith.constant 0 : index
    %c3_344 = arith.constant 3 : index
    %c0_345 = arith.constant 0 : index
    %541 = vector.load %arg8[%c0_343, %c3_344, %c0_345] : memref<4x12x128xf32, #tpu.memory_space<vmem>>, vector<1x8x128xf32>
    %542 = vector.shape_cast %541 : vector<1x8x128xf32> to vector<8x128xf32>
    %543 = vector.broadcast %540 : f32 to vector<8x128xf32>
    %544 = arith.mulf %543, %542 : vector<8x128xf32>
    %545 = arith.addf %539, %544 : vector<8x128xf32>
    %c44 = arith.constant 44 : index
    %546 = memref.load %arg4[%c44] : memref<160xf32, #tpu.memory_space<smem>>
    %c0_346 = arith.constant 0 : index
    %c4_347 = arith.constant 4 : index
    %c0_348 = arith.constant 0 : index
    %547 = vector.load %arg8[%c0_346, %c4_347, %c0_348] : memref<4x12x128xf32, #tpu.memory_space<vmem>>, vector<1x8x128xf32>
    %548 = vector.shape_cast %547 : vector<1x8x128xf32> to vector<8x128xf32>
    %549 = vector.broadcast %546 : f32 to vector<8x128xf32>
    %550 = arith.mulf %549, %548 : vector<8x128xf32>
    %551 = arith.addf %545, %550 : vector<8x128xf32>
    %c45 = arith.constant 45 : index
    %552 = memref.load %arg4[%c45] : memref<160xf32, #tpu.memory_space<smem>>
    %c1_349 = arith.constant 1 : index
    %c0_350 = arith.constant 0 : index
    %c0_351 = arith.constant 0 : index
    %553 = vector.load %arg8[%c1_349, %c0_350, %c0_351] : memref<4x12x128xf32, #tpu.memory_space<vmem>>, vector<1x8x128xf32>
    %554 = vector.shape_cast %553 : vector<1x8x128xf32> to vector<8x128xf32>
    %555 = vector.broadcast %552 : f32 to vector<8x128xf32>
    %556 = arith.mulf %555, %554 : vector<8x128xf32>
    %557 = arith.addf %551, %556 : vector<8x128xf32>
    %c46 = arith.constant 46 : index
    %558 = memref.load %arg4[%c46] : memref<160xf32, #tpu.memory_space<smem>>
    %c1_352 = arith.constant 1 : index
    %c1_353 = arith.constant 1 : index
    %c0_354 = arith.constant 0 : index
    %559 = vector.load %arg8[%c1_352, %c1_353, %c0_354] : memref<4x12x128xf32, #tpu.memory_space<vmem>>, vector<1x8x128xf32>
    %560 = vector.shape_cast %559 : vector<1x8x128xf32> to vector<8x128xf32>
    %561 = vector.broadcast %558 : f32 to vector<8x128xf32>
    %562 = arith.mulf %561, %560 : vector<8x128xf32>
    %563 = arith.addf %557, %562 : vector<8x128xf32>
    %c47 = arith.constant 47 : index
    %564 = memref.load %arg4[%c47] : memref<160xf32, #tpu.memory_space<smem>>
    %c1_355 = arith.constant 1 : index
    %c2_356 = arith.constant 2 : index
    %c0_357 = arith.constant 0 : index
    %565 = vector.load %arg8[%c1_355, %c2_356, %c0_357] : memref<4x12x128xf32, #tpu.memory_space<vmem>>, vector<1x8x128xf32>
    %566 = vector.shape_cast %565 : vector<1x8x128xf32> to vector<8x128xf32>
    %567 = vector.broadcast %564 : f32 to vector<8x128xf32>
    %568 = arith.mulf %567, %566 : vector<8x128xf32>
    %569 = arith.addf %563, %568 : vector<8x128xf32>
    %c48 = arith.constant 48 : index
    %570 = memref.load %arg4[%c48] : memref<160xf32, #tpu.memory_space<smem>>
    %c1_358 = arith.constant 1 : index
    %c3_359 = arith.constant 3 : index
    %c0_360 = arith.constant 0 : index
    %571 = vector.load %arg8[%c1_358, %c3_359, %c0_360] : memref<4x12x128xf32, #tpu.memory_space<vmem>>, vector<1x8x128xf32>
    %572 = vector.shape_cast %571 : vector<1x8x128xf32> to vector<8x128xf32>
    %573 = vector.broadcast %570 : f32 to vector<8x128xf32>
    %574 = arith.mulf %573, %572 : vector<8x128xf32>
    %575 = arith.addf %569, %574 : vector<8x128xf32>
    %c49 = arith.constant 49 : index
    %576 = memref.load %arg4[%c49] : memref<160xf32, #tpu.memory_space<smem>>
    %c1_361 = arith.constant 1 : index
    %c4_362 = arith.constant 4 : index
    %c0_363 = arith.constant 0 : index
    %577 = vector.load %arg8[%c1_361, %c4_362, %c0_363] : memref<4x12x128xf32, #tpu.memory_space<vmem>>, vector<1x8x128xf32>
    %578 = vector.shape_cast %577 : vector<1x8x128xf32> to vector<8x128xf32>
    %579 = vector.broadcast %576 : f32 to vector<8x128xf32>
    %580 = arith.mulf %579, %578 : vector<8x128xf32>
    %581 = arith.addf %575, %580 : vector<8x128xf32>
    %c50 = arith.constant 50 : index
    %582 = memref.load %arg4[%c50] : memref<160xf32, #tpu.memory_space<smem>>
    %c2_364 = arith.constant 2 : index
    %c0_365 = arith.constant 0 : index
    %c0_366 = arith.constant 0 : index
    %583 = vector.load %arg8[%c2_364, %c0_365, %c0_366] : memref<4x12x128xf32, #tpu.memory_space<vmem>>, vector<1x8x128xf32>
    %584 = vector.shape_cast %583 : vector<1x8x128xf32> to vector<8x128xf32>
    %585 = vector.broadcast %582 : f32 to vector<8x128xf32>
    %586 = arith.mulf %585, %584 : vector<8x128xf32>
    %587 = arith.addf %581, %586 : vector<8x128xf32>
    %c51 = arith.constant 51 : index
    %588 = memref.load %arg4[%c51] : memref<160xf32, #tpu.memory_space<smem>>
    %c2_367 = arith.constant 2 : index
    %c1_368 = arith.constant 1 : index
    %c0_369 = arith.constant 0 : index
    %589 = vector.load %arg8[%c2_367, %c1_368, %c0_369] : memref<4x12x128xf32, #tpu.memory_space<vmem>>, vector<1x8x128xf32>
    %590 = vector.shape_cast %589 : vector<1x8x128xf32> to vector<8x128xf32>
    %591 = vector.broadcast %588 : f32 to vector<8x128xf32>
    %592 = arith.mulf %591, %590 : vector<8x128xf32>
    %593 = arith.addf %587, %592 : vector<8x128xf32>
    %c52 = arith.constant 52 : index
    %594 = memref.load %arg4[%c52] : memref<160xf32, #tpu.memory_space<smem>>
    %c2_370 = arith.constant 2 : index
    %c2_371 = arith.constant 2 : index
    %c0_372 = arith.constant 0 : index
    %595 = vector.load %arg8[%c2_370, %c2_371, %c0_372] : memref<4x12x128xf32, #tpu.memory_space<vmem>>, vector<1x8x128xf32>
    %596 = vector.shape_cast %595 : vector<1x8x128xf32> to vector<8x128xf32>
    %597 = vector.broadcast %594 : f32 to vector<8x128xf32>
    %598 = arith.mulf %597, %596 : vector<8x128xf32>
    %599 = arith.addf %593, %598 : vector<8x128xf32>
    %c53 = arith.constant 53 : index
    %600 = memref.load %arg4[%c53] : memref<160xf32, #tpu.memory_space<smem>>
    %c2_373 = arith.constant 2 : index
    %c3_374 = arith.constant 3 : index
    %c0_375 = arith.constant 0 : index
    %601 = vector.load %arg8[%c2_373, %c3_374, %c0_375] : memref<4x12x128xf32, #tpu.memory_space<vmem>>, vector<1x8x128xf32>
    %602 = vector.shape_cast %601 : vector<1x8x128xf32> to vector<8x128xf32>
    %603 = vector.broadcast %600 : f32 to vector<8x128xf32>
    %604 = arith.mulf %603, %602 : vector<8x128xf32>
    %605 = arith.addf %599, %604 : vector<8x128xf32>
    %c54 = arith.constant 54 : index
    %606 = memref.load %arg4[%c54] : memref<160xf32, #tpu.memory_space<smem>>
    %c2_376 = arith.constant 2 : index
    %c4_377 = arith.constant 4 : index
    %c0_378 = arith.constant 0 : index
    %607 = vector.load %arg8[%c2_376, %c4_377, %c0_378] : memref<4x12x128xf32, #tpu.memory_space<vmem>>, vector<1x8x128xf32>
    %608 = vector.shape_cast %607 : vector<1x8x128xf32> to vector<8x128xf32>
    %609 = vector.broadcast %606 : f32 to vector<8x128xf32>
    %610 = arith.mulf %609, %608 : vector<8x128xf32>
    %611 = arith.addf %605, %610 : vector<8x128xf32>
    %c55 = arith.constant 55 : index
    %612 = memref.load %arg4[%c55] : memref<160xf32, #tpu.memory_space<smem>>
    %c3_379 = arith.constant 3 : index
    %c0_380 = arith.constant 0 : index
    %c0_381 = arith.constant 0 : index
    %613 = vector.load %arg8[%c3_379, %c0_380, %c0_381] : memref<4x12x128xf32, #tpu.memory_space<vmem>>, vector<1x8x128xf32>
    %614 = vector.shape_cast %613 : vector<1x8x128xf32> to vector<8x128xf32>
    %615 = vector.broadcast %612 : f32 to vector<8x128xf32>
    %616 = arith.mulf %615, %614 : vector<8x128xf32>
    %617 = arith.addf %611, %616 : vector<8x128xf32>
    %c56 = arith.constant 56 : index
    %618 = memref.load %arg4[%c56] : memref<160xf32, #tpu.memory_space<smem>>
    %c3_382 = arith.constant 3 : index
    %c1_383 = arith.constant 1 : index
    %c0_384 = arith.constant 0 : index
    %619 = vector.load %arg8[%c3_382, %c1_383, %c0_384] : memref<4x12x128xf32, #tpu.memory_space<vmem>>, vector<1x8x128xf32>
    %620 = vector.shape_cast %619 : vector<1x8x128xf32> to vector<8x128xf32>
    %621 = vector.broadcast %618 : f32 to vector<8x128xf32>
    %622 = arith.mulf %621, %620 : vector<8x128xf32>
    %623 = arith.addf %617, %622 : vector<8x128xf32>
    %c57 = arith.constant 57 : index
    %624 = memref.load %arg4[%c57] : memref<160xf32, #tpu.memory_space<smem>>
    %c3_385 = arith.constant 3 : index
    %c2_386 = arith.constant 2 : index
    %c0_387 = arith.constant 0 : index
    %625 = vector.load %arg8[%c3_385, %c2_386, %c0_387] : memref<4x12x128xf32, #tpu.memory_space<vmem>>, vector<1x8x128xf32>
    %626 = vector.shape_cast %625 : vector<1x8x128xf32> to vector<8x128xf32>
    %627 = vector.broadcast %624 : f32 to vector<8x128xf32>
    %628 = arith.mulf %627, %626 : vector<8x128xf32>
    %629 = arith.addf %623, %628 : vector<8x128xf32>
    %c58 = arith.constant 58 : index
    %630 = memref.load %arg4[%c58] : memref<160xf32, #tpu.memory_space<smem>>
    %c3_388 = arith.constant 3 : index
    %c3_389 = arith.constant 3 : index
    %c0_390 = arith.constant 0 : index
    %631 = vector.load %arg8[%c3_388, %c3_389, %c0_390] : memref<4x12x128xf32, #tpu.memory_space<vmem>>, vector<1x8x128xf32>
    %632 = vector.shape_cast %631 : vector<1x8x128xf32> to vector<8x128xf32>
    %633 = vector.broadcast %630 : f32 to vector<8x128xf32>
    %634 = arith.mulf %633, %632 : vector<8x128xf32>
    %635 = arith.addf %629, %634 : vector<8x128xf32>
    %c59 = arith.constant 59 : index
    %636 = memref.load %arg4[%c59] : memref<160xf32, #tpu.memory_space<smem>>
    %c3_391 = arith.constant 3 : index
    %c4_392 = arith.constant 4 : index
    %c0_393 = arith.constant 0 : index
    %637 = vector.load %arg8[%c3_391, %c4_392, %c0_393] : memref<4x12x128xf32, #tpu.memory_space<vmem>>, vector<1x8x128xf32>
    %638 = vector.shape_cast %637 : vector<1x8x128xf32> to vector<8x128xf32>
    %639 = vector.broadcast %636 : f32 to vector<8x128xf32>
    %640 = arith.mulf %639, %638 : vector<8x128xf32>
    %641 = arith.addf %635, %640 : vector<8x128xf32>
    %cst_394 = arith.constant 0.00999999977 : f32
    %642 = vector.broadcast %cst_394 : f32 to vector<8x128xf32>
    %643 = arith.mulf %642, %641 : vector<8x128xf32>
    %644 = arith.maximumf %641, %643 : vector<8x128xf32>
    %c2_395 = arith.constant 2 : index
    %c0_396 = arith.constant 0 : index
    %c0_397 = arith.constant 0 : index
    %645 = vector.load %arg6[%c2_395, %c0_396, %c0_397] : memref<8x8x128xf32, #tpu.memory_space<vmem>>, vector<1x8x128xf32>
    %646 = vector.shape_cast %645 : vector<1x8x128xf32> to vector<8x128xf32>
    %647 = vector.shape_cast %644 : vector<8x128xf32> to vector<1x8x128xf32>
    tpu.vector_store %arg6[%c2_395, %c0_396, %c0_397], %647 {strides = array<i32>} : memref<8x8x128xf32, #tpu.memory_space<vmem>>, vector<1x8x128xf32>,
    %c3_398 = arith.constant 3 : index
    %648 = memref.load %arg5[%c3_398] : memref<8xf32, #tpu.memory_space<smem>>
    %649 = vector.broadcast %648 : f32 to vector<8x128xf32>
    %c60 = arith.constant 60 : index
    %650 = memref.load %arg4[%c60] : memref<160xf32, #tpu.memory_space<smem>>
    %c0_399 = arith.constant 0 : index
    %c0_400 = arith.constant 0 : index
    %c0_401 = arith.constant 0 : index
    %651 = vector.load %arg8[%c0_399, %c0_400, %c0_401] : memref<4x12x128xf32, #tpu.memory_space<vmem>>, vector<1x8x128xf32>
    %652 = vector.shape_cast %651 : vector<1x8x128xf32> to vector<8x128xf32>
    %653 = vector.broadcast %650 : f32 to vector<8x128xf32>
    %654 = arith.mulf %653, %652 : vector<8x128xf32>
    %655 = arith.addf %649, %654 : vector<8x128xf32>
    %c61 = arith.constant 61 : index
    %656 = memref.load %arg4[%c61] : memref<160xf32, #tpu.memory_space<smem>>
    %c0_402 = arith.constant 0 : index
    %c1_403 = arith.constant 1 : index
    %c0_404 = arith.constant 0 : index
    %657 = vector.load %arg8[%c0_402, %c1_403, %c0_404] : memref<4x12x128xf32, #tpu.memory_space<vmem>>, vector<1x8x128xf32>
    %658 = vector.shape_cast %657 : vector<1x8x128xf32> to vector<8x128xf32>
    %659 = vector.broadcast %656 : f32 to vector<8x128xf32>
    %660 = arith.mulf %659, %658 : vector<8x128xf32>
    %661 = arith.addf %655, %660 : vector<8x128xf32>
    %c62 = arith.constant 62 : index
    %662 = memref.load %arg4[%c62] : memref<160xf32, #tpu.memory_space<smem>>
    %c0_405 = arith.constant 0 : index
    %c2_406 = arith.constant 2 : index
    %c0_407 = arith.constant 0 : index
    %663 = vector.load %arg8[%c0_405, %c2_406, %c0_407] : memref<4x12x128xf32, #tpu.memory_space<vmem>>, vector<1x8x128xf32>
    %664 = vector.shape_cast %663 : vector<1x8x128xf32> to vector<8x128xf32>
    %665 = vector.broadcast %662 : f32 to vector<8x128xf32>
    %666 = arith.mulf %665, %664 : vector<8x128xf32>
    %667 = arith.addf %661, %666 : vector<8x128xf32>
    %c63 = arith.constant 63 : index
    %668 = memref.load %arg4[%c63] : memref<160xf32, #tpu.memory_space<smem>>
    %c0_408 = arith.constant 0 : index
    %c3_409 = arith.constant 3 : index
    %c0_410 = arith.constant 0 : index
    %669 = vector.load %arg8[%c0_408, %c3_409, %c0_410] : memref<4x12x128xf32, #tpu.memory_space<vmem>>, vector<1x8x128xf32>
    %670 = vector.shape_cast %669 : vector<1x8x128xf32> to vector<8x128xf32>
    %671 = vector.broadcast %668 : f32 to vector<8x128xf32>
    %672 = arith.mulf %671, %670 : vector<8x128xf32>
    %673 = arith.addf %667, %672 : vector<8x128xf32>
    %c64 = arith.constant 64 : index
    %674 = memref.load %arg4[%c64] : memref<160xf32, #tpu.memory_space<smem>>
    %c0_411 = arith.constant 0 : index
    %c4_412 = arith.constant 4 : index
    %c0_413 = arith.constant 0 : index
    %675 = vector.load %arg8[%c0_411, %c4_412, %c0_413] : memref<4x12x128xf32, #tpu.memory_space<vmem>>, vector<1x8x128xf32>
    %676 = vector.shape_cast %675 : vector<1x8x128xf32> to vector<8x128xf32>
    %677 = vector.broadcast %674 : f32 to vector<8x128xf32>
    %678 = arith.mulf %677, %676 : vector<8x128xf32>
    %679 = arith.addf %673, %678 : vector<8x128xf32>
    %c65 = arith.constant 65 : index
    %680 = memref.load %arg4[%c65] : memref<160xf32, #tpu.memory_space<smem>>
    %c1_414 = arith.constant 1 : index
    %c0_415 = arith.constant 0 : index
    %c0_416 = arith.constant 0 : index
    %681 = vector.load %arg8[%c1_414, %c0_415, %c0_416] : memref<4x12x128xf32, #tpu.memory_space<vmem>>, vector<1x8x128xf32>
    %682 = vector.shape_cast %681 : vector<1x8x128xf32> to vector<8x128xf32>
    %683 = vector.broadcast %680 : f32 to vector<8x128xf32>
    %684 = arith.mulf %683, %682 : vector<8x128xf32>
    %685 = arith.addf %679, %684 : vector<8x128xf32>
    %c66 = arith.constant 66 : index
    %686 = memref.load %arg4[%c66] : memref<160xf32, #tpu.memory_space<smem>>
    %c1_417 = arith.constant 1 : index
    %c1_418 = arith.constant 1 : index
    %c0_419 = arith.constant 0 : index
    %687 = vector.load %arg8[%c1_417, %c1_418, %c0_419] : memref<4x12x128xf32, #tpu.memory_space<vmem>>, vector<1x8x128xf32>
    %688 = vector.shape_cast %687 : vector<1x8x128xf32> to vector<8x128xf32>
    %689 = vector.broadcast %686 : f32 to vector<8x128xf32>
    %690 = arith.mulf %689, %688 : vector<8x128xf32>
    %691 = arith.addf %685, %690 : vector<8x128xf32>
    %c67 = arith.constant 67 : index
    %692 = memref.load %arg4[%c67] : memref<160xf32, #tpu.memory_space<smem>>
    %c1_420 = arith.constant 1 : index
    %c2_421 = arith.constant 2 : index
    %c0_422 = arith.constant 0 : index
    %693 = vector.load %arg8[%c1_420, %c2_421, %c0_422] : memref<4x12x128xf32, #tpu.memory_space<vmem>>, vector<1x8x128xf32>
    %694 = vector.shape_cast %693 : vector<1x8x128xf32> to vector<8x128xf32>
    %695 = vector.broadcast %692 : f32 to vector<8x128xf32>
    %696 = arith.mulf %695, %694 : vector<8x128xf32>
    %697 = arith.addf %691, %696 : vector<8x128xf32>
    %c68 = arith.constant 68 : index
    %698 = memref.load %arg4[%c68] : memref<160xf32, #tpu.memory_space<smem>>
    %c1_423 = arith.constant 1 : index
    %c3_424 = arith.constant 3 : index
    %c0_425 = arith.constant 0 : index
    %699 = vector.load %arg8[%c1_423, %c3_424, %c0_425] : memref<4x12x128xf32, #tpu.memory_space<vmem>>, vector<1x8x128xf32>
    %700 = vector.shape_cast %699 : vector<1x8x128xf32> to vector<8x128xf32>
    %701 = vector.broadcast %698 : f32 to vector<8x128xf32>
    %702 = arith.mulf %701, %700 : vector<8x128xf32>
    %703 = arith.addf %697, %702 : vector<8x128xf32>
    %c69 = arith.constant 69 : index
    %704 = memref.load %arg4[%c69] : memref<160xf32, #tpu.memory_space<smem>>
    %c1_426 = arith.constant 1 : index
    %c4_427 = arith.constant 4 : index
    %c0_428 = arith.constant 0 : index
    %705 = vector.load %arg8[%c1_426, %c4_427, %c0_428] : memref<4x12x128xf32, #tpu.memory_space<vmem>>, vector<1x8x128xf32>
    %706 = vector.shape_cast %705 : vector<1x8x128xf32> to vector<8x128xf32>
    %707 = vector.broadcast %704 : f32 to vector<8x128xf32>
    %708 = arith.mulf %707, %706 : vector<8x128xf32>
    %709 = arith.addf %703, %708 : vector<8x128xf32>
    %c70 = arith.constant 70 : index
    %710 = memref.load %arg4[%c70] : memref<160xf32, #tpu.memory_space<smem>>
    %c2_429 = arith.constant 2 : index
    %c0_430 = arith.constant 0 : index
    %c0_431 = arith.constant 0 : index
    %711 = vector.load %arg8[%c2_429, %c0_430, %c0_431] : memref<4x12x128xf32, #tpu.memory_space<vmem>>, vector<1x8x128xf32>
    %712 = vector.shape_cast %711 : vector<1x8x128xf32> to vector<8x128xf32>
    %713 = vector.broadcast %710 : f32 to vector<8x128xf32>
    %714 = arith.mulf %713, %712 : vector<8x128xf32>
    %715 = arith.addf %709, %714 : vector<8x128xf32>
    %c71 = arith.constant 71 : index
    %716 = memref.load %arg4[%c71] : memref<160xf32, #tpu.memory_space<smem>>
    %c2_432 = arith.constant 2 : index
    %c1_433 = arith.constant 1 : index
    %c0_434 = arith.constant 0 : index
    %717 = vector.load %arg8[%c2_432, %c1_433, %c0_434] : memref<4x12x128xf32, #tpu.memory_space<vmem>>, vector<1x8x128xf32>
    %718 = vector.shape_cast %717 : vector<1x8x128xf32> to vector<8x128xf32>
    %719 = vector.broadcast %716 : f32 to vector<8x128xf32>
    %720 = arith.mulf %719, %718 : vector<8x128xf32>
    %721 = arith.addf %715, %720 : vector<8x128xf32>
    %c72 = arith.constant 72 : index
    %722 = memref.load %arg4[%c72] : memref<160xf32, #tpu.memory_space<smem>>
    %c2_435 = arith.constant 2 : index
    %c2_436 = arith.constant 2 : index
    %c0_437 = arith.constant 0 : index
    %723 = vector.load %arg8[%c2_435, %c2_436, %c0_437] : memref<4x12x128xf32, #tpu.memory_space<vmem>>, vector<1x8x128xf32>
    %724 = vector.shape_cast %723 : vector<1x8x128xf32> to vector<8x128xf32>
    %725 = vector.broadcast %722 : f32 to vector<8x128xf32>
    %726 = arith.mulf %725, %724 : vector<8x128xf32>
    %727 = arith.addf %721, %726 : vector<8x128xf32>
    %c73 = arith.constant 73 : index
    %728 = memref.load %arg4[%c73] : memref<160xf32, #tpu.memory_space<smem>>
    %c2_438 = arith.constant 2 : index
    %c3_439 = arith.constant 3 : index
    %c0_440 = arith.constant 0 : index
    %729 = vector.load %arg8[%c2_438, %c3_439, %c0_440] : memref<4x12x128xf32, #tpu.memory_space<vmem>>, vector<1x8x128xf32>
    %730 = vector.shape_cast %729 : vector<1x8x128xf32> to vector<8x128xf32>
    %731 = vector.broadcast %728 : f32 to vector<8x128xf32>
    %732 = arith.mulf %731, %730 : vector<8x128xf32>
    %733 = arith.addf %727, %732 : vector<8x128xf32>
    %c74 = arith.constant 74 : index
    %734 = memref.load %arg4[%c74] : memref<160xf32, #tpu.memory_space<smem>>
    %c2_441 = arith.constant 2 : index
    %c4_442 = arith.constant 4 : index
    %c0_443 = arith.constant 0 : index
    %735 = vector.load %arg8[%c2_441, %c4_442, %c0_443] : memref<4x12x128xf32, #tpu.memory_space<vmem>>, vector<1x8x128xf32>
    %736 = vector.shape_cast %735 : vector<1x8x128xf32> to vector<8x128xf32>
    %737 = vector.broadcast %734 : f32 to vector<8x128xf32>
    %738 = arith.mulf %737, %736 : vector<8x128xf32>
    %739 = arith.addf %733, %738 : vector<8x128xf32>
    %c75 = arith.constant 75 : index
    %740 = memref.load %arg4[%c75] : memref<160xf32, #tpu.memory_space<smem>>
    %c3_444 = arith.constant 3 : index
    %c0_445 = arith.constant 0 : index
    %c0_446 = arith.constant 0 : index
    %741 = vector.load %arg8[%c3_444, %c0_445, %c0_446] : memref<4x12x128xf32, #tpu.memory_space<vmem>>, vector<1x8x128xf32>
    %742 = vector.shape_cast %741 : vector<1x8x128xf32> to vector<8x128xf32>
    %743 = vector.broadcast %740 : f32 to vector<8x128xf32>
    %744 = arith.mulf %743, %742 : vector<8x128xf32>
    %745 = arith.addf %739, %744 : vector<8x128xf32>
    %c76 = arith.constant 76 : index
    %746 = memref.load %arg4[%c76] : memref<160xf32, #tpu.memory_space<smem>>
    %c3_447 = arith.constant 3 : index
    %c1_448 = arith.constant 1 : index
    %c0_449 = arith.constant 0 : index
    %747 = vector.load %arg8[%c3_447, %c1_448, %c0_449] : memref<4x12x128xf32, #tpu.memory_space<vmem>>, vector<1x8x128xf32>
    %748 = vector.shape_cast %747 : vector<1x8x128xf32> to vector<8x128xf32>
    %749 = vector.broadcast %746 : f32 to vector<8x128xf32>
    %750 = arith.mulf %749, %748 : vector<8x128xf32>
    %751 = arith.addf %745, %750 : vector<8x128xf32>
    %c77 = arith.constant 77 : index
    %752 = memref.load %arg4[%c77] : memref<160xf32, #tpu.memory_space<smem>>
    %c3_450 = arith.constant 3 : index
    %c2_451 = arith.constant 2 : index
    %c0_452 = arith.constant 0 : index
    %753 = vector.load %arg8[%c3_450, %c2_451, %c0_452] : memref<4x12x128xf32, #tpu.memory_space<vmem>>, vector<1x8x128xf32>
    %754 = vector.shape_cast %753 : vector<1x8x128xf32> to vector<8x128xf32>
    %755 = vector.broadcast %752 : f32 to vector<8x128xf32>
    %756 = arith.mulf %755, %754 : vector<8x128xf32>
    %757 = arith.addf %751, %756 : vector<8x128xf32>
    %c78 = arith.constant 78 : index
    %758 = memref.load %arg4[%c78] : memref<160xf32, #tpu.memory_space<smem>>
    %c3_453 = arith.constant 3 : index
    %c3_454 = arith.constant 3 : index
    %c0_455 = arith.constant 0 : index
    %759 = vector.load %arg8[%c3_453, %c3_454, %c0_455] : memref<4x12x128xf32, #tpu.memory_space<vmem>>, vector<1x8x128xf32>
    %760 = vector.shape_cast %759 : vector<1x8x128xf32> to vector<8x128xf32>
    %761 = vector.broadcast %758 : f32 to vector<8x128xf32>
    %762 = arith.mulf %761, %760 : vector<8x128xf32>
    %763 = arith.addf %757, %762 : vector<8x128xf32>
    %c79 = arith.constant 79 : index
    %764 = memref.load %arg4[%c79] : memref<160xf32, #tpu.memory_space<smem>>
    %c3_456 = arith.constant 3 : index
    %c4_457 = arith.constant 4 : index
    %c0_458 = arith.constant 0 : index
    %765 = vector.load %arg8[%c3_456, %c4_457, %c0_458] : memref<4x12x128xf32, #tpu.memory_space<vmem>>, vector<1x8x128xf32>
    %766 = vector.shape_cast %765 : vector<1x8x128xf32> to vector<8x128xf32>
    %767 = vector.broadcast %764 : f32 to vector<8x128xf32>
    %768 = arith.mulf %767, %766 : vector<8x128xf32>
    %769 = arith.addf %763, %768 : vector<8x128xf32>
    %cst_459 = arith.constant 0.00999999977 : f32
    %770 = vector.broadcast %cst_459 : f32 to vector<8x128xf32>
    %771 = arith.mulf %770, %769 : vector<8x128xf32>
    %772 = arith.maximumf %769, %771 : vector<8x128xf32>
    %c3_460 = arith.constant 3 : index
    %c0_461 = arith.constant 0 : index
    %c0_462 = arith.constant 0 : index
    %773 = vector.load %arg6[%c3_460, %c0_461, %c0_462] : memref<8x8x128xf32, #tpu.memory_space<vmem>>, vector<1x8x128xf32>
    %774 = vector.shape_cast %773 : vector<1x8x128xf32> to vector<8x128xf32>
    %775 = vector.shape_cast %772 : vector<8x128xf32> to vector<1x8x128xf32>
    tpu.vector_store %arg6[%c3_460, %c0_461, %c0_462], %775 {strides = array<i32>} : memref<8x8x128xf32, #tpu.memory_space<vmem>>, vector<1x8x128xf32>,
    %c4_463 = arith.constant 4 : index
    %776 = memref.load %arg5[%c4_463] : memref<8xf32, #tpu.memory_space<smem>>
    %777 = vector.broadcast %776 : f32 to vector<8x128xf32>
    %c80 = arith.constant 80 : index
    %778 = memref.load %arg4[%c80] : memref<160xf32, #tpu.memory_space<smem>>
    %c0_464 = arith.constant 0 : index
    %c0_465 = arith.constant 0 : index
    %c0_466 = arith.constant 0 : index
    %779 = vector.load %arg8[%c0_464, %c0_465, %c0_466] : memref<4x12x128xf32, #tpu.memory_space<vmem>>, vector<1x8x128xf32>
    %780 = vector.shape_cast %779 : vector<1x8x128xf32> to vector<8x128xf32>
    %781 = vector.broadcast %778 : f32 to vector<8x128xf32>
    %782 = arith.mulf %781, %780 : vector<8x128xf32>
    %783 = arith.addf %777, %782 : vector<8x128xf32>
    %c81 = arith.constant 81 : index
    %784 = memref.load %arg4[%c81] : memref<160xf32, #tpu.memory_space<smem>>
    %c0_467 = arith.constant 0 : index
    %c1_468 = arith.constant 1 : index
    %c0_469 = arith.constant 0 : index
    %785 = vector.load %arg8[%c0_467, %c1_468, %c0_469] : memref<4x12x128xf32, #tpu.memory_space<vmem>>, vector<1x8x128xf32>
    %786 = vector.shape_cast %785 : vector<1x8x128xf32> to vector<8x128xf32>
    %787 = vector.broadcast %784 : f32 to vector<8x128xf32>
    %788 = arith.mulf %787, %786 : vector<8x128xf32>
    %789 = arith.addf %783, %788 : vector<8x128xf32>
    %c82 = arith.constant 82 : index
    %790 = memref.load %arg4[%c82] : memref<160xf32, #tpu.memory_space<smem>>
    %c0_470 = arith.constant 0 : index
    %c2_471 = arith.constant 2 : index
    %c0_472 = arith.constant 0 : index
    %791 = vector.load %arg8[%c0_470, %c2_471, %c0_472] : memref<4x12x128xf32, #tpu.memory_space<vmem>>, vector<1x8x128xf32>
    %792 = vector.shape_cast %791 : vector<1x8x128xf32> to vector<8x128xf32>
    %793 = vector.broadcast %790 : f32 to vector<8x128xf32>
    %794 = arith.mulf %793, %792 : vector<8x128xf32>
    %795 = arith.addf %789, %794 : vector<8x128xf32>
    %c83 = arith.constant 83 : index
    %796 = memref.load %arg4[%c83] : memref<160xf32, #tpu.memory_space<smem>>
    %c0_473 = arith.constant 0 : index
    %c3_474 = arith.constant 3 : index
    %c0_475 = arith.constant 0 : index
    %797 = vector.load %arg8[%c0_473, %c3_474, %c0_475] : memref<4x12x128xf32, #tpu.memory_space<vmem>>, vector<1x8x128xf32>
    %798 = vector.shape_cast %797 : vector<1x8x128xf32> to vector<8x128xf32>
    %799 = vector.broadcast %796 : f32 to vector<8x128xf32>
    %800 = arith.mulf %799, %798 : vector<8x128xf32>
    %801 = arith.addf %795, %800 : vector<8x128xf32>
    %c84 = arith.constant 84 : index
    %802 = memref.load %arg4[%c84] : memref<160xf32, #tpu.memory_space<smem>>
    %c0_476 = arith.constant 0 : index
    %c4_477 = arith.constant 4 : index
    %c0_478 = arith.constant 0 : index
    %803 = vector.load %arg8[%c0_476, %c4_477, %c0_478] : memref<4x12x128xf32, #tpu.memory_space<vmem>>, vector<1x8x128xf32>
    %804 = vector.shape_cast %803 : vector<1x8x128xf32> to vector<8x128xf32>
    %805 = vector.broadcast %802 : f32 to vector<8x128xf32>
    %806 = arith.mulf %805, %804 : vector<8x128xf32>
    %807 = arith.addf %801, %806 : vector<8x128xf32>
    %c85 = arith.constant 85 : index
    %808 = memref.load %arg4[%c85] : memref<160xf32, #tpu.memory_space<smem>>
    %c1_479 = arith.constant 1 : index
    %c0_480 = arith.constant 0 : index
    %c0_481 = arith.constant 0 : index
    %809 = vector.load %arg8[%c1_479, %c0_480, %c0_481] : memref<4x12x128xf32, #tpu.memory_space<vmem>>, vector<1x8x128xf32>
    %810 = vector.shape_cast %809 : vector<1x8x128xf32> to vector<8x128xf32>
    %811 = vector.broadcast %808 : f32 to vector<8x128xf32>
    %812 = arith.mulf %811, %810 : vector<8x128xf32>
    %813 = arith.addf %807, %812 : vector<8x128xf32>
    %c86 = arith.constant 86 : index
    %814 = memref.load %arg4[%c86] : memref<160xf32, #tpu.memory_space<smem>>
    %c1_482 = arith.constant 1 : index
    %c1_483 = arith.constant 1 : index
    %c0_484 = arith.constant 0 : index
    %815 = vector.load %arg8[%c1_482, %c1_483, %c0_484] : memref<4x12x128xf32, #tpu.memory_space<vmem>>, vector<1x8x128xf32>
    %816 = vector.shape_cast %815 : vector<1x8x128xf32> to vector<8x128xf32>
    %817 = vector.broadcast %814 : f32 to vector<8x128xf32>
    %818 = arith.mulf %817, %816 : vector<8x128xf32>
    %819 = arith.addf %813, %818 : vector<8x128xf32>
    %c87 = arith.constant 87 : index
    %820 = memref.load %arg4[%c87] : memref<160xf32, #tpu.memory_space<smem>>
    %c1_485 = arith.constant 1 : index
    %c2_486 = arith.constant 2 : index
    %c0_487 = arith.constant 0 : index
    %821 = vector.load %arg8[%c1_485, %c2_486, %c0_487] : memref<4x12x128xf32, #tpu.memory_space<vmem>>, vector<1x8x128xf32>
    %822 = vector.shape_cast %821 : vector<1x8x128xf32> to vector<8x128xf32>
    %823 = vector.broadcast %820 : f32 to vector<8x128xf32>
    %824 = arith.mulf %823, %822 : vector<8x128xf32>
    %825 = arith.addf %819, %824 : vector<8x128xf32>
    %c88 = arith.constant 88 : index
    %826 = memref.load %arg4[%c88] : memref<160xf32, #tpu.memory_space<smem>>
    %c1_488 = arith.constant 1 : index
    %c3_489 = arith.constant 3 : index
    %c0_490 = arith.constant 0 : index
    %827 = vector.load %arg8[%c1_488, %c3_489, %c0_490] : memref<4x12x128xf32, #tpu.memory_space<vmem>>, vector<1x8x128xf32>
    %828 = vector.shape_cast %827 : vector<1x8x128xf32> to vector<8x128xf32>
    %829 = vector.broadcast %826 : f32 to vector<8x128xf32>
    %830 = arith.mulf %829, %828 : vector<8x128xf32>
    %831 = arith.addf %825, %830 : vector<8x128xf32>
    %c89 = arith.constant 89 : index
    %832 = memref.load %arg4[%c89] : memref<160xf32, #tpu.memory_space<smem>>
    %c1_491 = arith.constant 1 : index
    %c4_492 = arith.constant 4 : index
    %c0_493 = arith.constant 0 : index
    %833 = vector.load %arg8[%c1_491, %c4_492, %c0_493] : memref<4x12x128xf32, #tpu.memory_space<vmem>>, vector<1x8x128xf32>
    %834 = vector.shape_cast %833 : vector<1x8x128xf32> to vector<8x128xf32>
    %835 = vector.broadcast %832 : f32 to vector<8x128xf32>
    %836 = arith.mulf %835, %834 : vector<8x128xf32>
    %837 = arith.addf %831, %836 : vector<8x128xf32>
    %c90 = arith.constant 90 : index
    %838 = memref.load %arg4[%c90] : memref<160xf32, #tpu.memory_space<smem>>
    %c2_494 = arith.constant 2 : index
    %c0_495 = arith.constant 0 : index
    %c0_496 = arith.constant 0 : index
    %839 = vector.load %arg8[%c2_494, %c0_495, %c0_496] : memref<4x12x128xf32, #tpu.memory_space<vmem>>, vector<1x8x128xf32>
    %840 = vector.shape_cast %839 : vector<1x8x128xf32> to vector<8x128xf32>
    %841 = vector.broadcast %838 : f32 to vector<8x128xf32>
    %842 = arith.mulf %841, %840 : vector<8x128xf32>
    %843 = arith.addf %837, %842 : vector<8x128xf32>
    %c91 = arith.constant 91 : index
    %844 = memref.load %arg4[%c91] : memref<160xf32, #tpu.memory_space<smem>>
    %c2_497 = arith.constant 2 : index
    %c1_498 = arith.constant 1 : index
    %c0_499 = arith.constant 0 : index
    %845 = vector.load %arg8[%c2_497, %c1_498, %c0_499] : memref<4x12x128xf32, #tpu.memory_space<vmem>>, vector<1x8x128xf32>
    %846 = vector.shape_cast %845 : vector<1x8x128xf32> to vector<8x128xf32>
    %847 = vector.broadcast %844 : f32 to vector<8x128xf32>
    %848 = arith.mulf %847, %846 : vector<8x128xf32>
    %849 = arith.addf %843, %848 : vector<8x128xf32>
    %c92 = arith.constant 92 : index
    %850 = memref.load %arg4[%c92] : memref<160xf32, #tpu.memory_space<smem>>
    %c2_500 = arith.constant 2 : index
    %c2_501 = arith.constant 2 : index
    %c0_502 = arith.constant 0 : index
    %851 = vector.load %arg8[%c2_500, %c2_501, %c0_502] : memref<4x12x128xf32, #tpu.memory_space<vmem>>, vector<1x8x128xf32>
    %852 = vector.shape_cast %851 : vector<1x8x128xf32> to vector<8x128xf32>
    %853 = vector.broadcast %850 : f32 to vector<8x128xf32>
    %854 = arith.mulf %853, %852 : vector<8x128xf32>
    %855 = arith.addf %849, %854 : vector<8x128xf32>
    %c93 = arith.constant 93 : index
    %856 = memref.load %arg4[%c93] : memref<160xf32, #tpu.memory_space<smem>>
    %c2_503 = arith.constant 2 : index
    %c3_504 = arith.constant 3 : index
    %c0_505 = arith.constant 0 : index
    %857 = vector.load %arg8[%c2_503, %c3_504, %c0_505] : memref<4x12x128xf32, #tpu.memory_space<vmem>>, vector<1x8x128xf32>
    %858 = vector.shape_cast %857 : vector<1x8x128xf32> to vector<8x128xf32>
    %859 = vector.broadcast %856 : f32 to vector<8x128xf32>
    %860 = arith.mulf %859, %858 : vector<8x128xf32>
    %861 = arith.addf %855, %860 : vector<8x128xf32>
    %c94 = arith.constant 94 : index
    %862 = memref.load %arg4[%c94] : memref<160xf32, #tpu.memory_space<smem>>
    %c2_506 = arith.constant 2 : index
    %c4_507 = arith.constant 4 : index
    %c0_508 = arith.constant 0 : index
    %863 = vector.load %arg8[%c2_506, %c4_507, %c0_508] : memref<4x12x128xf32, #tpu.memory_space<vmem>>, vector<1x8x128xf32>
    %864 = vector.shape_cast %863 : vector<1x8x128xf32> to vector<8x128xf32>
    %865 = vector.broadcast %862 : f32 to vector<8x128xf32>
    %866 = arith.mulf %865, %864 : vector<8x128xf32>
    %867 = arith.addf %861, %866 : vector<8x128xf32>
    %c95 = arith.constant 95 : index
    %868 = memref.load %arg4[%c95] : memref<160xf32, #tpu.memory_space<smem>>
    %c3_509 = arith.constant 3 : index
    %c0_510 = arith.constant 0 : index
    %c0_511 = arith.constant 0 : index
    %869 = vector.load %arg8[%c3_509, %c0_510, %c0_511] : memref<4x12x128xf32, #tpu.memory_space<vmem>>, vector<1x8x128xf32>
    %870 = vector.shape_cast %869 : vector<1x8x128xf32> to vector<8x128xf32>
    %871 = vector.broadcast %868 : f32 to vector<8x128xf32>
    %872 = arith.mulf %871, %870 : vector<8x128xf32>
    %873 = arith.addf %867, %872 : vector<8x128xf32>
    %c96 = arith.constant 96 : index
    %874 = memref.load %arg4[%c96] : memref<160xf32, #tpu.memory_space<smem>>
    %c3_512 = arith.constant 3 : index
    %c1_513 = arith.constant 1 : index
    %c0_514 = arith.constant 0 : index
    %875 = vector.load %arg8[%c3_512, %c1_513, %c0_514] : memref<4x12x128xf32, #tpu.memory_space<vmem>>, vector<1x8x128xf32>
    %876 = vector.shape_cast %875 : vector<1x8x128xf32> to vector<8x128xf32>
    %877 = vector.broadcast %874 : f32 to vector<8x128xf32>
    %878 = arith.mulf %877, %876 : vector<8x128xf32>
    %879 = arith.addf %873, %878 : vector<8x128xf32>
    %c97 = arith.constant 97 : index
    %880 = memref.load %arg4[%c97] : memref<160xf32, #tpu.memory_space<smem>>
    %c3_515 = arith.constant 3 : index
    %c2_516 = arith.constant 2 : index
    %c0_517 = arith.constant 0 : index
    %881 = vector.load %arg8[%c3_515, %c2_516, %c0_517] : memref<4x12x128xf32, #tpu.memory_space<vmem>>, vector<1x8x128xf32>
    %882 = vector.shape_cast %881 : vector<1x8x128xf32> to vector<8x128xf32>
    %883 = vector.broadcast %880 : f32 to vector<8x128xf32>
    %884 = arith.mulf %883, %882 : vector<8x128xf32>
    %885 = arith.addf %879, %884 : vector<8x128xf32>
    %c98 = arith.constant 98 : index
    %886 = memref.load %arg4[%c98] : memref<160xf32, #tpu.memory_space<smem>>
    %c3_518 = arith.constant 3 : index
    %c3_519 = arith.constant 3 : index
    %c0_520 = arith.constant 0 : index
    %887 = vector.load %arg8[%c3_518, %c3_519, %c0_520] : memref<4x12x128xf32, #tpu.memory_space<vmem>>, vector<1x8x128xf32>
    %888 = vector.shape_cast %887 : vector<1x8x128xf32> to vector<8x128xf32>
    %889 = vector.broadcast %886 : f32 to vector<8x128xf32>
    %890 = arith.mulf %889, %888 : vector<8x128xf32>
    %891 = arith.addf %885, %890 : vector<8x128xf32>
    %c99 = arith.constant 99 : index
    %892 = memref.load %arg4[%c99] : memref<160xf32, #tpu.memory_space<smem>>
    %c3_521 = arith.constant 3 : index
    %c4_522 = arith.constant 4 : index
    %c0_523 = arith.constant 0 : index
    %893 = vector.load %arg8[%c3_521, %c4_522, %c0_523] : memref<4x12x128xf32, #tpu.memory_space<vmem>>, vector<1x8x128xf32>
    %894 = vector.shape_cast %893 : vector<1x8x128xf32> to vector<8x128xf32>
    %895 = vector.broadcast %892 : f32 to vector<8x128xf32>
    %896 = arith.mulf %895, %894 : vector<8x128xf32>
    %897 = arith.addf %891, %896 : vector<8x128xf32>
    %cst_524 = arith.constant 0.00999999977 : f32
    %898 = vector.broadcast %cst_524 : f32 to vector<8x128xf32>
    %899 = arith.mulf %898, %897 : vector<8x128xf32>
    %900 = arith.maximumf %897, %899 : vector<8x128xf32>
    %c4_525 = arith.constant 4 : index
    %c0_526 = arith.constant 0 : index
    %c0_527 = arith.constant 0 : index
    %901 = vector.load %arg6[%c4_525, %c0_526, %c0_527] : memref<8x8x128xf32, #tpu.memory_space<vmem>>, vector<1x8x128xf32>
    %902 = vector.shape_cast %901 : vector<1x8x128xf32> to vector<8x128xf32>
    %903 = vector.shape_cast %900 : vector<8x128xf32> to vector<1x8x128xf32>
    tpu.vector_store %arg6[%c4_525, %c0_526, %c0_527], %903 {strides = array<i32>} : memref<8x8x128xf32, #tpu.memory_space<vmem>>, vector<1x8x128xf32>,
    %c5_528 = arith.constant 5 : index
    %904 = memref.load %arg5[%c5_528] : memref<8xf32, #tpu.memory_space<smem>>
    %905 = vector.broadcast %904 : f32 to vector<8x128xf32>
    %c100 = arith.constant 100 : index
    %906 = memref.load %arg4[%c100] : memref<160xf32, #tpu.memory_space<smem>>
    %c0_529 = arith.constant 0 : index
    %c0_530 = arith.constant 0 : index
    %c0_531 = arith.constant 0 : index
    %907 = vector.load %arg8[%c0_529, %c0_530, %c0_531] : memref<4x12x128xf32, #tpu.memory_space<vmem>>, vector<1x8x128xf32>
    %908 = vector.shape_cast %907 : vector<1x8x128xf32> to vector<8x128xf32>
    %909 = vector.broadcast %906 : f32 to vector<8x128xf32>
    %910 = arith.mulf %909, %908 : vector<8x128xf32>
    %911 = arith.addf %905, %910 : vector<8x128xf32>
    %c101 = arith.constant 101 : index
    %912 = memref.load %arg4[%c101] : memref<160xf32, #tpu.memory_space<smem>>
    %c0_532 = arith.constant 0 : index
    %c1_533 = arith.constant 1 : index
    %c0_534 = arith.constant 0 : index
    %913 = vector.load %arg8[%c0_532, %c1_533, %c0_534] : memref<4x12x128xf32, #tpu.memory_space<vmem>>, vector<1x8x128xf32>
    %914 = vector.shape_cast %913 : vector<1x8x128xf32> to vector<8x128xf32>
    %915 = vector.broadcast %912 : f32 to vector<8x128xf32>
    %916 = arith.mulf %915, %914 : vector<8x128xf32>
    %917 = arith.addf %911, %916 : vector<8x128xf32>
    %c102 = arith.constant 102 : index
    %918 = memref.load %arg4[%c102] : memref<160xf32, #tpu.memory_space<smem>>
    %c0_535 = arith.constant 0 : index
    %c2_536 = arith.constant 2 : index
    %c0_537 = arith.constant 0 : index
    %919 = vector.load %arg8[%c0_535, %c2_536, %c0_537] : memref<4x12x128xf32, #tpu.memory_space<vmem>>, vector<1x8x128xf32>
    %920 = vector.shape_cast %919 : vector<1x8x128xf32> to vector<8x128xf32>
    %921 = vector.broadcast %918 : f32 to vector<8x128xf32>
    %922 = arith.mulf %921, %920 : vector<8x128xf32>
    %923 = arith.addf %917, %922 : vector<8x128xf32>
    %c103 = arith.constant 103 : index
    %924 = memref.load %arg4[%c103] : memref<160xf32, #tpu.memory_space<smem>>
    %c0_538 = arith.constant 0 : index
    %c3_539 = arith.constant 3 : index
    %c0_540 = arith.constant 0 : index
    %925 = vector.load %arg8[%c0_538, %c3_539, %c0_540] : memref<4x12x128xf32, #tpu.memory_space<vmem>>, vector<1x8x128xf32>
    %926 = vector.shape_cast %925 : vector<1x8x128xf32> to vector<8x128xf32>
    %927 = vector.broadcast %924 : f32 to vector<8x128xf32>
    %928 = arith.mulf %927, %926 : vector<8x128xf32>
    %929 = arith.addf %923, %928 : vector<8x128xf32>
    %c104 = arith.constant 104 : index
    %930 = memref.load %arg4[%c104] : memref<160xf32, #tpu.memory_space<smem>>
    %c0_541 = arith.constant 0 : index
    %c4_542 = arith.constant 4 : index
    %c0_543 = arith.constant 0 : index
    %931 = vector.load %arg8[%c0_541, %c4_542, %c0_543] : memref<4x12x128xf32, #tpu.memory_space<vmem>>, vector<1x8x128xf32>
    %932 = vector.shape_cast %931 : vector<1x8x128xf32> to vector<8x128xf32>
    %933 = vector.broadcast %930 : f32 to vector<8x128xf32>
    %934 = arith.mulf %933, %932 : vector<8x128xf32>
    %935 = arith.addf %929, %934 : vector<8x128xf32>
    %c105 = arith.constant 105 : index
    %936 = memref.load %arg4[%c105] : memref<160xf32, #tpu.memory_space<smem>>
    %c1_544 = arith.constant 1 : index
    %c0_545 = arith.constant 0 : index
    %c0_546 = arith.constant 0 : index
    %937 = vector.load %arg8[%c1_544, %c0_545, %c0_546] : memref<4x12x128xf32, #tpu.memory_space<vmem>>, vector<1x8x128xf32>
    %938 = vector.shape_cast %937 : vector<1x8x128xf32> to vector<8x128xf32>
    %939 = vector.broadcast %936 : f32 to vector<8x128xf32>
    %940 = arith.mulf %939, %938 : vector<8x128xf32>
    %941 = arith.addf %935, %940 : vector<8x128xf32>
    %c106 = arith.constant 106 : index
    %942 = memref.load %arg4[%c106] : memref<160xf32, #tpu.memory_space<smem>>
    %c1_547 = arith.constant 1 : index
    %c1_548 = arith.constant 1 : index
    %c0_549 = arith.constant 0 : index
    %943 = vector.load %arg8[%c1_547, %c1_548, %c0_549] : memref<4x12x128xf32, #tpu.memory_space<vmem>>, vector<1x8x128xf32>
    %944 = vector.shape_cast %943 : vector<1x8x128xf32> to vector<8x128xf32>
    %945 = vector.broadcast %942 : f32 to vector<8x128xf32>
    %946 = arith.mulf %945, %944 : vector<8x128xf32>
    %947 = arith.addf %941, %946 : vector<8x128xf32>
    %c107 = arith.constant 107 : index
    %948 = memref.load %arg4[%c107] : memref<160xf32, #tpu.memory_space<smem>>
    %c1_550 = arith.constant 1 : index
    %c2_551 = arith.constant 2 : index
    %c0_552 = arith.constant 0 : index
    %949 = vector.load %arg8[%c1_550, %c2_551, %c0_552] : memref<4x12x128xf32, #tpu.memory_space<vmem>>, vector<1x8x128xf32>
    %950 = vector.shape_cast %949 : vector<1x8x128xf32> to vector<8x128xf32>
    %951 = vector.broadcast %948 : f32 to vector<8x128xf32>
    %952 = arith.mulf %951, %950 : vector<8x128xf32>
    %953 = arith.addf %947, %952 : vector<8x128xf32>
    %c108 = arith.constant 108 : index
    %954 = memref.load %arg4[%c108] : memref<160xf32, #tpu.memory_space<smem>>
    %c1_553 = arith.constant 1 : index
    %c3_554 = arith.constant 3 : index
    %c0_555 = arith.constant 0 : index
    %955 = vector.load %arg8[%c1_553, %c3_554, %c0_555] : memref<4x12x128xf32, #tpu.memory_space<vmem>>, vector<1x8x128xf32>
    %956 = vector.shape_cast %955 : vector<1x8x128xf32> to vector<8x128xf32>
    %957 = vector.broadcast %954 : f32 to vector<8x128xf32>
    %958 = arith.mulf %957, %956 : vector<8x128xf32>
    %959 = arith.addf %953, %958 : vector<8x128xf32>
    %c109 = arith.constant 109 : index
    %960 = memref.load %arg4[%c109] : memref<160xf32, #tpu.memory_space<smem>>
    %c1_556 = arith.constant 1 : index
    %c4_557 = arith.constant 4 : index
    %c0_558 = arith.constant 0 : index
    %961 = vector.load %arg8[%c1_556, %c4_557, %c0_558] : memref<4x12x128xf32, #tpu.memory_space<vmem>>, vector<1x8x128xf32>
    %962 = vector.shape_cast %961 : vector<1x8x128xf32> to vector<8x128xf32>
    %963 = vector.broadcast %960 : f32 to vector<8x128xf32>
    %964 = arith.mulf %963, %962 : vector<8x128xf32>
    %965 = arith.addf %959, %964 : vector<8x128xf32>
    %c110 = arith.constant 110 : index
    %966 = memref.load %arg4[%c110] : memref<160xf32, #tpu.memory_space<smem>>
    %c2_559 = arith.constant 2 : index
    %c0_560 = arith.constant 0 : index
    %c0_561 = arith.constant 0 : index
    %967 = vector.load %arg8[%c2_559, %c0_560, %c0_561] : memref<4x12x128xf32, #tpu.memory_space<vmem>>, vector<1x8x128xf32>
    %968 = vector.shape_cast %967 : vector<1x8x128xf32> to vector<8x128xf32>
    %969 = vector.broadcast %966 : f32 to vector<8x128xf32>
    %970 = arith.mulf %969, %968 : vector<8x128xf32>
    %971 = arith.addf %965, %970 : vector<8x128xf32>
    %c111 = arith.constant 111 : index
    %972 = memref.load %arg4[%c111] : memref<160xf32, #tpu.memory_space<smem>>
    %c2_562 = arith.constant 2 : index
    %c1_563 = arith.constant 1 : index
    %c0_564 = arith.constant 0 : index
    %973 = vector.load %arg8[%c2_562, %c1_563, %c0_564] : memref<4x12x128xf32, #tpu.memory_space<vmem>>, vector<1x8x128xf32>
    %974 = vector.shape_cast %973 : vector<1x8x128xf32> to vector<8x128xf32>
    %975 = vector.broadcast %972 : f32 to vector<8x128xf32>
    %976 = arith.mulf %975, %974 : vector<8x128xf32>
    %977 = arith.addf %971, %976 : vector<8x128xf32>
    %c112 = arith.constant 112 : index
    %978 = memref.load %arg4[%c112] : memref<160xf32, #tpu.memory_space<smem>>
    %c2_565 = arith.constant 2 : index
    %c2_566 = arith.constant 2 : index
    %c0_567 = arith.constant 0 : index
    %979 = vector.load %arg8[%c2_565, %c2_566, %c0_567] : memref<4x12x128xf32, #tpu.memory_space<vmem>>, vector<1x8x128xf32>
    %980 = vector.shape_cast %979 : vector<1x8x128xf32> to vector<8x128xf32>
    %981 = vector.broadcast %978 : f32 to vector<8x128xf32>
    %982 = arith.mulf %981, %980 : vector<8x128xf32>
    %983 = arith.addf %977, %982 : vector<8x128xf32>
    %c113 = arith.constant 113 : index
    %984 = memref.load %arg4[%c113] : memref<160xf32, #tpu.memory_space<smem>>
    %c2_568 = arith.constant 2 : index
    %c3_569 = arith.constant 3 : index
    %c0_570 = arith.constant 0 : index
    %985 = vector.load %arg8[%c2_568, %c3_569, %c0_570] : memref<4x12x128xf32, #tpu.memory_space<vmem>>, vector<1x8x128xf32>
    %986 = vector.shape_cast %985 : vector<1x8x128xf32> to vector<8x128xf32>
    %987 = vector.broadcast %984 : f32 to vector<8x128xf32>
    %988 = arith.mulf %987, %986 : vector<8x128xf32>
    %989 = arith.addf %983, %988 : vector<8x128xf32>
    %c114 = arith.constant 114 : index
    %990 = memref.load %arg4[%c114] : memref<160xf32, #tpu.memory_space<smem>>
    %c2_571 = arith.constant 2 : index
    %c4_572 = arith.constant 4 : index
    %c0_573 = arith.constant 0 : index
    %991 = vector.load %arg8[%c2_571, %c4_572, %c0_573] : memref<4x12x128xf32, #tpu.memory_space<vmem>>, vector<1x8x128xf32>
    %992 = vector.shape_cast %991 : vector<1x8x128xf32> to vector<8x128xf32>
    %993 = vector.broadcast %990 : f32 to vector<8x128xf32>
    %994 = arith.mulf %993, %992 : vector<8x128xf32>
    %995 = arith.addf %989, %994 : vector<8x128xf32>
    %c115 = arith.constant 115 : index
    %996 = memref.load %arg4[%c115] : memref<160xf32, #tpu.memory_space<smem>>
    %c3_574 = arith.constant 3 : index
    %c0_575 = arith.constant 0 : index
    %c0_576 = arith.constant 0 : index
    %997 = vector.load %arg8[%c3_574, %c0_575, %c0_576] : memref<4x12x128xf32, #tpu.memory_space<vmem>>, vector<1x8x128xf32>
    %998 = vector.shape_cast %997 : vector<1x8x128xf32> to vector<8x128xf32>
    %999 = vector.broadcast %996 : f32 to vector<8x128xf32>
    %1000 = arith.mulf %999, %998 : vector<8x128xf32>
    %1001 = arith.addf %995, %1000 : vector<8x128xf32>
    %c116 = arith.constant 116 : index
    %1002 = memref.load %arg4[%c116] : memref<160xf32, #tpu.memory_space<smem>>
    %c3_577 = arith.constant 3 : index
    %c1_578 = arith.constant 1 : index
    %c0_579 = arith.constant 0 : index
    %1003 = vector.load %arg8[%c3_577, %c1_578, %c0_579] : memref<4x12x128xf32, #tpu.memory_space<vmem>>, vector<1x8x128xf32>
    %1004 = vector.shape_cast %1003 : vector<1x8x128xf32> to vector<8x128xf32>
    %1005 = vector.broadcast %1002 : f32 to vector<8x128xf32>
    %1006 = arith.mulf %1005, %1004 : vector<8x128xf32>
    %1007 = arith.addf %1001, %1006 : vector<8x128xf32>
    %c117 = arith.constant 117 : index
    %1008 = memref.load %arg4[%c117] : memref<160xf32, #tpu.memory_space<smem>>
    %c3_580 = arith.constant 3 : index
    %c2_581 = arith.constant 2 : index
    %c0_582 = arith.constant 0 : index
    %1009 = vector.load %arg8[%c3_580, %c2_581, %c0_582] : memref<4x12x128xf32, #tpu.memory_space<vmem>>, vector<1x8x128xf32>
    %1010 = vector.shape_cast %1009 : vector<1x8x128xf32> to vector<8x128xf32>
    %1011 = vector.broadcast %1008 : f32 to vector<8x128xf32>
    %1012 = arith.mulf %1011, %1010 : vector<8x128xf32>
    %1013 = arith.addf %1007, %1012 : vector<8x128xf32>
    %c118 = arith.constant 118 : index
    %1014 = memref.load %arg4[%c118] : memref<160xf32, #tpu.memory_space<smem>>
    %c3_583 = arith.constant 3 : index
    %c3_584 = arith.constant 3 : index
    %c0_585 = arith.constant 0 : index
    %1015 = vector.load %arg8[%c3_583, %c3_584, %c0_585] : memref<4x12x128xf32, #tpu.memory_space<vmem>>, vector<1x8x128xf32>
    %1016 = vector.shape_cast %1015 : vector<1x8x128xf32> to vector<8x128xf32>
    %1017 = vector.broadcast %1014 : f32 to vector<8x128xf32>
    %1018 = arith.mulf %1017, %1016 : vector<8x128xf32>
    %1019 = arith.addf %1013, %1018 : vector<8x128xf32>
    %c119 = arith.constant 119 : index
    %1020 = memref.load %arg4[%c119] : memref<160xf32, #tpu.memory_space<smem>>
    %c3_586 = arith.constant 3 : index
    %c4_587 = arith.constant 4 : index
    %c0_588 = arith.constant 0 : index
    %1021 = vector.load %arg8[%c3_586, %c4_587, %c0_588] : memref<4x12x128xf32, #tpu.memory_space<vmem>>, vector<1x8x128xf32>
    %1022 = vector.shape_cast %1021 : vector<1x8x128xf32> to vector<8x128xf32>
    %1023 = vector.broadcast %1020 : f32 to vector<8x128xf32>
    %1024 = arith.mulf %1023, %1022 : vector<8x128xf32>
    %1025 = arith.addf %1019, %1024 : vector<8x128xf32>
    %cst_589 = arith.constant 0.00999999977 : f32
    %1026 = vector.broadcast %cst_589 : f32 to vector<8x128xf32>
    %1027 = arith.mulf %1026, %1025 : vector<8x128xf32>
    %1028 = arith.maximumf %1025, %1027 : vector<8x128xf32>
    %c5_590 = arith.constant 5 : index
    %c0_591 = arith.constant 0 : index
    %c0_592 = arith.constant 0 : index
    %1029 = vector.load %arg6[%c5_590, %c0_591, %c0_592] : memref<8x8x128xf32, #tpu.memory_space<vmem>>, vector<1x8x128xf32>
    %1030 = vector.shape_cast %1029 : vector<1x8x128xf32> to vector<8x128xf32>
    %1031 = vector.shape_cast %1028 : vector<8x128xf32> to vector<1x8x128xf32>
    tpu.vector_store %arg6[%c5_590, %c0_591, %c0_592], %1031 {strides = array<i32>} : memref<8x8x128xf32, #tpu.memory_space<vmem>>, vector<1x8x128xf32>,
    %c6_593 = arith.constant 6 : index
    %1032 = memref.load %arg5[%c6_593] : memref<8xf32, #tpu.memory_space<smem>>
    %1033 = vector.broadcast %1032 : f32 to vector<8x128xf32>
    %c120 = arith.constant 120 : index
    %1034 = memref.load %arg4[%c120] : memref<160xf32, #tpu.memory_space<smem>>
    %c0_594 = arith.constant 0 : index
    %c0_595 = arith.constant 0 : index
    %c0_596 = arith.constant 0 : index
    %1035 = vector.load %arg8[%c0_594, %c0_595, %c0_596] : memref<4x12x128xf32, #tpu.memory_space<vmem>>, vector<1x8x128xf32>
    %1036 = vector.shape_cast %1035 : vector<1x8x128xf32> to vector<8x128xf32>
    %1037 = vector.broadcast %1034 : f32 to vector<8x128xf32>
    %1038 = arith.mulf %1037, %1036 : vector<8x128xf32>
    %1039 = arith.addf %1033, %1038 : vector<8x128xf32>
    %c121 = arith.constant 121 : index
    %1040 = memref.load %arg4[%c121] : memref<160xf32, #tpu.memory_space<smem>>
    %c0_597 = arith.constant 0 : index
    %c1_598 = arith.constant 1 : index
    %c0_599 = arith.constant 0 : index
    %1041 = vector.load %arg8[%c0_597, %c1_598, %c0_599] : memref<4x12x128xf32, #tpu.memory_space<vmem>>, vector<1x8x128xf32>
    %1042 = vector.shape_cast %1041 : vector<1x8x128xf32> to vector<8x128xf32>
    %1043 = vector.broadcast %1040 : f32 to vector<8x128xf32>
    %1044 = arith.mulf %1043, %1042 : vector<8x128xf32>
    %1045 = arith.addf %1039, %1044 : vector<8x128xf32>
    %c122 = arith.constant 122 : index
    %1046 = memref.load %arg4[%c122] : memref<160xf32, #tpu.memory_space<smem>>
    %c0_600 = arith.constant 0 : index
    %c2_601 = arith.constant 2 : index
    %c0_602 = arith.constant 0 : index
    %1047 = vector.load %arg8[%c0_600, %c2_601, %c0_602] : memref<4x12x128xf32, #tpu.memory_space<vmem>>, vector<1x8x128xf32>
    %1048 = vector.shape_cast %1047 : vector<1x8x128xf32> to vector<8x128xf32>
    %1049 = vector.broadcast %1046 : f32 to vector<8x128xf32>
    %1050 = arith.mulf %1049, %1048 : vector<8x128xf32>
    %1051 = arith.addf %1045, %1050 : vector<8x128xf32>
    %c123 = arith.constant 123 : index
    %1052 = memref.load %arg4[%c123] : memref<160xf32, #tpu.memory_space<smem>>
    %c0_603 = arith.constant 0 : index
    %c3_604 = arith.constant 3 : index
    %c0_605 = arith.constant 0 : index
    %1053 = vector.load %arg8[%c0_603, %c3_604, %c0_605] : memref<4x12x128xf32, #tpu.memory_space<vmem>>, vector<1x8x128xf32>
    %1054 = vector.shape_cast %1053 : vector<1x8x128xf32> to vector<8x128xf32>
    %1055 = vector.broadcast %1052 : f32 to vector<8x128xf32>
    %1056 = arith.mulf %1055, %1054 : vector<8x128xf32>
    %1057 = arith.addf %1051, %1056 : vector<8x128xf32>
    %c124 = arith.constant 124 : index
    %1058 = memref.load %arg4[%c124] : memref<160xf32, #tpu.memory_space<smem>>
    %c0_606 = arith.constant 0 : index
    %c4_607 = arith.constant 4 : index
    %c0_608 = arith.constant 0 : index
    %1059 = vector.load %arg8[%c0_606, %c4_607, %c0_608] : memref<4x12x128xf32, #tpu.memory_space<vmem>>, vector<1x8x128xf32>
    %1060 = vector.shape_cast %1059 : vector<1x8x128xf32> to vector<8x128xf32>
    %1061 = vector.broadcast %1058 : f32 to vector<8x128xf32>
    %1062 = arith.mulf %1061, %1060 : vector<8x128xf32>
    %1063 = arith.addf %1057, %1062 : vector<8x128xf32>
    %c125 = arith.constant 125 : index
    %1064 = memref.load %arg4[%c125] : memref<160xf32, #tpu.memory_space<smem>>
    %c1_609 = arith.constant 1 : index
    %c0_610 = arith.constant 0 : index
    %c0_611 = arith.constant 0 : index
    %1065 = vector.load %arg8[%c1_609, %c0_610, %c0_611] : memref<4x12x128xf32, #tpu.memory_space<vmem>>, vector<1x8x128xf32>
    %1066 = vector.shape_cast %1065 : vector<1x8x128xf32> to vector<8x128xf32>
    %1067 = vector.broadcast %1064 : f32 to vector<8x128xf32>
    %1068 = arith.mulf %1067, %1066 : vector<8x128xf32>
    %1069 = arith.addf %1063, %1068 : vector<8x128xf32>
    %c126 = arith.constant 126 : index
    %1070 = memref.load %arg4[%c126] : memref<160xf32, #tpu.memory_space<smem>>
    %c1_612 = arith.constant 1 : index
    %c1_613 = arith.constant 1 : index
    %c0_614 = arith.constant 0 : index
    %1071 = vector.load %arg8[%c1_612, %c1_613, %c0_614] : memref<4x12x128xf32, #tpu.memory_space<vmem>>, vector<1x8x128xf32>
    %1072 = vector.shape_cast %1071 : vector<1x8x128xf32> to vector<8x128xf32>
    %1073 = vector.broadcast %1070 : f32 to vector<8x128xf32>
    %1074 = arith.mulf %1073, %1072 : vector<8x128xf32>
    %1075 = arith.addf %1069, %1074 : vector<8x128xf32>
    %c127 = arith.constant 127 : index
    %1076 = memref.load %arg4[%c127] : memref<160xf32, #tpu.memory_space<smem>>
    %c1_615 = arith.constant 1 : index
    %c2_616 = arith.constant 2 : index
    %c0_617 = arith.constant 0 : index
    %1077 = vector.load %arg8[%c1_615, %c2_616, %c0_617] : memref<4x12x128xf32, #tpu.memory_space<vmem>>, vector<1x8x128xf32>
    %1078 = vector.shape_cast %1077 : vector<1x8x128xf32> to vector<8x128xf32>
    %1079 = vector.broadcast %1076 : f32 to vector<8x128xf32>
    %1080 = arith.mulf %1079, %1078 : vector<8x128xf32>
    %1081 = arith.addf %1075, %1080 : vector<8x128xf32>
    %c128 = arith.constant 128 : index
    %1082 = memref.load %arg4[%c128] : memref<160xf32, #tpu.memory_space<smem>>
    %c1_618 = arith.constant 1 : index
    %c3_619 = arith.constant 3 : index
    %c0_620 = arith.constant 0 : index
    %1083 = vector.load %arg8[%c1_618, %c3_619, %c0_620] : memref<4x12x128xf32, #tpu.memory_space<vmem>>, vector<1x8x128xf32>
    %1084 = vector.shape_cast %1083 : vector<1x8x128xf32> to vector<8x128xf32>
    %1085 = vector.broadcast %1082 : f32 to vector<8x128xf32>
    %1086 = arith.mulf %1085, %1084 : vector<8x128xf32>
    %1087 = arith.addf %1081, %1086 : vector<8x128xf32>
    %c129 = arith.constant 129 : index
    %1088 = memref.load %arg4[%c129] : memref<160xf32, #tpu.memory_space<smem>>
    %c1_621 = arith.constant 1 : index
    %c4_622 = arith.constant 4 : index
    %c0_623 = arith.constant 0 : index
    %1089 = vector.load %arg8[%c1_621, %c4_622, %c0_623] : memref<4x12x128xf32, #tpu.memory_space<vmem>>, vector<1x8x128xf32>
    %1090 = vector.shape_cast %1089 : vector<1x8x128xf32> to vector<8x128xf32>
    %1091 = vector.broadcast %1088 : f32 to vector<8x128xf32>
    %1092 = arith.mulf %1091, %1090 : vector<8x128xf32>
    %1093 = arith.addf %1087, %1092 : vector<8x128xf32>
    %c130 = arith.constant 130 : index
    %1094 = memref.load %arg4[%c130] : memref<160xf32, #tpu.memory_space<smem>>
    %c2_624 = arith.constant 2 : index
    %c0_625 = arith.constant 0 : index
    %c0_626 = arith.constant 0 : index
    %1095 = vector.load %arg8[%c2_624, %c0_625, %c0_626] : memref<4x12x128xf32, #tpu.memory_space<vmem>>, vector<1x8x128xf32>
    %1096 = vector.shape_cast %1095 : vector<1x8x128xf32> to vector<8x128xf32>
    %1097 = vector.broadcast %1094 : f32 to vector<8x128xf32>
    %1098 = arith.mulf %1097, %1096 : vector<8x128xf32>
    %1099 = arith.addf %1093, %1098 : vector<8x128xf32>
    %c131 = arith.constant 131 : index
    %1100 = memref.load %arg4[%c131] : memref<160xf32, #tpu.memory_space<smem>>
    %c2_627 = arith.constant 2 : index
    %c1_628 = arith.constant 1 : index
    %c0_629 = arith.constant 0 : index
    %1101 = vector.load %arg8[%c2_627, %c1_628, %c0_629] : memref<4x12x128xf32, #tpu.memory_space<vmem>>, vector<1x8x128xf32>
    %1102 = vector.shape_cast %1101 : vector<1x8x128xf32> to vector<8x128xf32>
    %1103 = vector.broadcast %1100 : f32 to vector<8x128xf32>
    %1104 = arith.mulf %1103, %1102 : vector<8x128xf32>
    %1105 = arith.addf %1099, %1104 : vector<8x128xf32>
    %c132 = arith.constant 132 : index
    %1106 = memref.load %arg4[%c132] : memref<160xf32, #tpu.memory_space<smem>>
    %c2_630 = arith.constant 2 : index
    %c2_631 = arith.constant 2 : index
    %c0_632 = arith.constant 0 : index
    %1107 = vector.load %arg8[%c2_630, %c2_631, %c0_632] : memref<4x12x128xf32, #tpu.memory_space<vmem>>, vector<1x8x128xf32>
    %1108 = vector.shape_cast %1107 : vector<1x8x128xf32> to vector<8x128xf32>
    %1109 = vector.broadcast %1106 : f32 to vector<8x128xf32>
    %1110 = arith.mulf %1109, %1108 : vector<8x128xf32>
    %1111 = arith.addf %1105, %1110 : vector<8x128xf32>
    %c133 = arith.constant 133 : index
    %1112 = memref.load %arg4[%c133] : memref<160xf32, #tpu.memory_space<smem>>
    %c2_633 = arith.constant 2 : index
    %c3_634 = arith.constant 3 : index
    %c0_635 = arith.constant 0 : index
    %1113 = vector.load %arg8[%c2_633, %c3_634, %c0_635] : memref<4x12x128xf32, #tpu.memory_space<vmem>>, vector<1x8x128xf32>
    %1114 = vector.shape_cast %1113 : vector<1x8x128xf32> to vector<8x128xf32>
    %1115 = vector.broadcast %1112 : f32 to vector<8x128xf32>
    %1116 = arith.mulf %1115, %1114 : vector<8x128xf32>
    %1117 = arith.addf %1111, %1116 : vector<8x128xf32>
    %c134 = arith.constant 134 : index
    %1118 = memref.load %arg4[%c134] : memref<160xf32, #tpu.memory_space<smem>>
    %c2_636 = arith.constant 2 : index
    %c4_637 = arith.constant 4 : index
    %c0_638 = arith.constant 0 : index
    %1119 = vector.load %arg8[%c2_636, %c4_637, %c0_638] : memref<4x12x128xf32, #tpu.memory_space<vmem>>, vector<1x8x128xf32>
    %1120 = vector.shape_cast %1119 : vector<1x8x128xf32> to vector<8x128xf32>
    %1121 = vector.broadcast %1118 : f32 to vector<8x128xf32>
    %1122 = arith.mulf %1121, %1120 : vector<8x128xf32>
    %1123 = arith.addf %1117, %1122 : vector<8x128xf32>
    %c135 = arith.constant 135 : index
    %1124 = memref.load %arg4[%c135] : memref<160xf32, #tpu.memory_space<smem>>
    %c3_639 = arith.constant 3 : index
    %c0_640 = arith.constant 0 : index
    %c0_641 = arith.constant 0 : index
    %1125 = vector.load %arg8[%c3_639, %c0_640, %c0_641] : memref<4x12x128xf32, #tpu.memory_space<vmem>>, vector<1x8x128xf32>
    %1126 = vector.shape_cast %1125 : vector<1x8x128xf32> to vector<8x128xf32>
    %1127 = vector.broadcast %1124 : f32 to vector<8x128xf32>
    %1128 = arith.mulf %1127, %1126 : vector<8x128xf32>
    %1129 = arith.addf %1123, %1128 : vector<8x128xf32>
    %c136 = arith.constant 136 : index
    %1130 = memref.load %arg4[%c136] : memref<160xf32, #tpu.memory_space<smem>>
    %c3_642 = arith.constant 3 : index
    %c1_643 = arith.constant 1 : index
    %c0_644 = arith.constant 0 : index
    %1131 = vector.load %arg8[%c3_642, %c1_643, %c0_644] : memref<4x12x128xf32, #tpu.memory_space<vmem>>, vector<1x8x128xf32>
    %1132 = vector.shape_cast %1131 : vector<1x8x128xf32> to vector<8x128xf32>
    %1133 = vector.broadcast %1130 : f32 to vector<8x128xf32>
    %1134 = arith.mulf %1133, %1132 : vector<8x128xf32>
    %1135 = arith.addf %1129, %1134 : vector<8x128xf32>
    %c137 = arith.constant 137 : index
    %1136 = memref.load %arg4[%c137] : memref<160xf32, #tpu.memory_space<smem>>
    %c3_645 = arith.constant 3 : index
    %c2_646 = arith.constant 2 : index
    %c0_647 = arith.constant 0 : index
    %1137 = vector.load %arg8[%c3_645, %c2_646, %c0_647] : memref<4x12x128xf32, #tpu.memory_space<vmem>>, vector<1x8x128xf32>
    %1138 = vector.shape_cast %1137 : vector<1x8x128xf32> to vector<8x128xf32>
    %1139 = vector.broadcast %1136 : f32 to vector<8x128xf32>
    %1140 = arith.mulf %1139, %1138 : vector<8x128xf32>
    %1141 = arith.addf %1135, %1140 : vector<8x128xf32>
    %c138 = arith.constant 138 : index
    %1142 = memref.load %arg4[%c138] : memref<160xf32, #tpu.memory_space<smem>>
    %c3_648 = arith.constant 3 : index
    %c3_649 = arith.constant 3 : index
    %c0_650 = arith.constant 0 : index
    %1143 = vector.load %arg8[%c3_648, %c3_649, %c0_650] : memref<4x12x128xf32, #tpu.memory_space<vmem>>, vector<1x8x128xf32>
    %1144 = vector.shape_cast %1143 : vector<1x8x128xf32> to vector<8x128xf32>
    %1145 = vector.broadcast %1142 : f32 to vector<8x128xf32>
    %1146 = arith.mulf %1145, %1144 : vector<8x128xf32>
    %1147 = arith.addf %1141, %1146 : vector<8x128xf32>
    %c139 = arith.constant 139 : index
    %1148 = memref.load %arg4[%c139] : memref<160xf32, #tpu.memory_space<smem>>
    %c3_651 = arith.constant 3 : index
    %c4_652 = arith.constant 4 : index
    %c0_653 = arith.constant 0 : index
    %1149 = vector.load %arg8[%c3_651, %c4_652, %c0_653] : memref<4x12x128xf32, #tpu.memory_space<vmem>>, vector<1x8x128xf32>
    %1150 = vector.shape_cast %1149 : vector<1x8x128xf32> to vector<8x128xf32>
    %1151 = vector.broadcast %1148 : f32 to vector<8x128xf32>
    %1152 = arith.mulf %1151, %1150 : vector<8x128xf32>
    %1153 = arith.addf %1147, %1152 : vector<8x128xf32>
    %cst_654 = arith.constant 0.00999999977 : f32
    %1154 = vector.broadcast %cst_654 : f32 to vector<8x128xf32>
    %1155 = arith.mulf %1154, %1153 : vector<8x128xf32>
    %1156 = arith.maximumf %1153, %1155 : vector<8x128xf32>
    %c6_655 = arith.constant 6 : index
    %c0_656 = arith.constant 0 : index
    %c0_657 = arith.constant 0 : index
    %1157 = vector.load %arg6[%c6_655, %c0_656, %c0_657] : memref<8x8x128xf32, #tpu.memory_space<vmem>>, vector<1x8x128xf32>
    %1158 = vector.shape_cast %1157 : vector<1x8x128xf32> to vector<8x128xf32>
    %1159 = vector.shape_cast %1156 : vector<8x128xf32> to vector<1x8x128xf32>
    tpu.vector_store %arg6[%c6_655, %c0_656, %c0_657], %1159 {strides = array<i32>} : memref<8x8x128xf32, #tpu.memory_space<vmem>>, vector<1x8x128xf32>,
    %c7_658 = arith.constant 7 : index
    %1160 = memref.load %arg5[%c7_658] : memref<8xf32, #tpu.memory_space<smem>>
    %1161 = vector.broadcast %1160 : f32 to vector<8x128xf32>
    %c140 = arith.constant 140 : index
    %1162 = memref.load %arg4[%c140] : memref<160xf32, #tpu.memory_space<smem>>
    %c0_659 = arith.constant 0 : index
    %c0_660 = arith.constant 0 : index
    %c0_661 = arith.constant 0 : index
    %1163 = vector.load %arg8[%c0_659, %c0_660, %c0_661] : memref<4x12x128xf32, #tpu.memory_space<vmem>>, vector<1x8x128xf32>
    %1164 = vector.shape_cast %1163 : vector<1x8x128xf32> to vector<8x128xf32>
    %1165 = vector.broadcast %1162 : f32 to vector<8x128xf32>
    %1166 = arith.mulf %1165, %1164 : vector<8x128xf32>
    %1167 = arith.addf %1161, %1166 : vector<8x128xf32>
    %c141 = arith.constant 141 : index
    %1168 = memref.load %arg4[%c141] : memref<160xf32, #tpu.memory_space<smem>>
    %c0_662 = arith.constant 0 : index
    %c1_663 = arith.constant 1 : index
    %c0_664 = arith.constant 0 : index
    %1169 = vector.load %arg8[%c0_662, %c1_663, %c0_664] : memref<4x12x128xf32, #tpu.memory_space<vmem>>, vector<1x8x128xf32>
    %1170 = vector.shape_cast %1169 : vector<1x8x128xf32> to vector<8x128xf32>
    %1171 = vector.broadcast %1168 : f32 to vector<8x128xf32>
    %1172 = arith.mulf %1171, %1170 : vector<8x128xf32>
    %1173 = arith.addf %1167, %1172 : vector<8x128xf32>
    %c142 = arith.constant 142 : index
    %1174 = memref.load %arg4[%c142] : memref<160xf32, #tpu.memory_space<smem>>
    %c0_665 = arith.constant 0 : index
    %c2_666 = arith.constant 2 : index
    %c0_667 = arith.constant 0 : index
    %1175 = vector.load %arg8[%c0_665, %c2_666, %c0_667] : memref<4x12x128xf32, #tpu.memory_space<vmem>>, vector<1x8x128xf32>
    %1176 = vector.shape_cast %1175 : vector<1x8x128xf32> to vector<8x128xf32>
    %1177 = vector.broadcast %1174 : f32 to vector<8x128xf32>
    %1178 = arith.mulf %1177, %1176 : vector<8x128xf32>
    %1179 = arith.addf %1173, %1178 : vector<8x128xf32>
    %c143 = arith.constant 143 : index
    %1180 = memref.load %arg4[%c143] : memref<160xf32, #tpu.memory_space<smem>>
    %c0_668 = arith.constant 0 : index
    %c3_669 = arith.constant 3 : index
    %c0_670 = arith.constant 0 : index
    %1181 = vector.load %arg8[%c0_668, %c3_669, %c0_670] : memref<4x12x128xf32, #tpu.memory_space<vmem>>, vector<1x8x128xf32>
    %1182 = vector.shape_cast %1181 : vector<1x8x128xf32> to vector<8x128xf32>
    %1183 = vector.broadcast %1180 : f32 to vector<8x128xf32>
    %1184 = arith.mulf %1183, %1182 : vector<8x128xf32>
    %1185 = arith.addf %1179, %1184 : vector<8x128xf32>
    %c144 = arith.constant 144 : index
    %1186 = memref.load %arg4[%c144] : memref<160xf32, #tpu.memory_space<smem>>
    %c0_671 = arith.constant 0 : index
    %c4_672 = arith.constant 4 : index
    %c0_673 = arith.constant 0 : index
    %1187 = vector.load %arg8[%c0_671, %c4_672, %c0_673] : memref<4x12x128xf32, #tpu.memory_space<vmem>>, vector<1x8x128xf32>
    %1188 = vector.shape_cast %1187 : vector<1x8x128xf32> to vector<8x128xf32>
    %1189 = vector.broadcast %1186 : f32 to vector<8x128xf32>
    %1190 = arith.mulf %1189, %1188 : vector<8x128xf32>
    %1191 = arith.addf %1185, %1190 : vector<8x128xf32>
    %c145 = arith.constant 145 : index
    %1192 = memref.load %arg4[%c145] : memref<160xf32, #tpu.memory_space<smem>>
    %c1_674 = arith.constant 1 : index
    %c0_675 = arith.constant 0 : index
    %c0_676 = arith.constant 0 : index
    %1193 = vector.load %arg8[%c1_674, %c0_675, %c0_676] : memref<4x12x128xf32, #tpu.memory_space<vmem>>, vector<1x8x128xf32>
    %1194 = vector.shape_cast %1193 : vector<1x8x128xf32> to vector<8x128xf32>
    %1195 = vector.broadcast %1192 : f32 to vector<8x128xf32>
    %1196 = arith.mulf %1195, %1194 : vector<8x128xf32>
    %1197 = arith.addf %1191, %1196 : vector<8x128xf32>
    %c146 = arith.constant 146 : index
    %1198 = memref.load %arg4[%c146] : memref<160xf32, #tpu.memory_space<smem>>
    %c1_677 = arith.constant 1 : index
    %c1_678 = arith.constant 1 : index
    %c0_679 = arith.constant 0 : index
    %1199 = vector.load %arg8[%c1_677, %c1_678, %c0_679] : memref<4x12x128xf32, #tpu.memory_space<vmem>>, vector<1x8x128xf32>
    %1200 = vector.shape_cast %1199 : vector<1x8x128xf32> to vector<8x128xf32>
    %1201 = vector.broadcast %1198 : f32 to vector<8x128xf32>
    %1202 = arith.mulf %1201, %1200 : vector<8x128xf32>
    %1203 = arith.addf %1197, %1202 : vector<8x128xf32>
    %c147 = arith.constant 147 : index
    %1204 = memref.load %arg4[%c147] : memref<160xf32, #tpu.memory_space<smem>>
    %c1_680 = arith.constant 1 : index
    %c2_681 = arith.constant 2 : index
    %c0_682 = arith.constant 0 : index
    %1205 = vector.load %arg8[%c1_680, %c2_681, %c0_682] : memref<4x12x128xf32, #tpu.memory_space<vmem>>, vector<1x8x128xf32>
    %1206 = vector.shape_cast %1205 : vector<1x8x128xf32> to vector<8x128xf32>
    %1207 = vector.broadcast %1204 : f32 to vector<8x128xf32>
    %1208 = arith.mulf %1207, %1206 : vector<8x128xf32>
    %1209 = arith.addf %1203, %1208 : vector<8x128xf32>
    %c148 = arith.constant 148 : index
    %1210 = memref.load %arg4[%c148] : memref<160xf32, #tpu.memory_space<smem>>
    %c1_683 = arith.constant 1 : index
    %c3_684 = arith.constant 3 : index
    %c0_685 = arith.constant 0 : index
    %1211 = vector.load %arg8[%c1_683, %c3_684, %c0_685] : memref<4x12x128xf32, #tpu.memory_space<vmem>>, vector<1x8x128xf32>
    %1212 = vector.shape_cast %1211 : vector<1x8x128xf32> to vector<8x128xf32>
    %1213 = vector.broadcast %1210 : f32 to vector<8x128xf32>
    %1214 = arith.mulf %1213, %1212 : vector<8x128xf32>
    %1215 = arith.addf %1209, %1214 : vector<8x128xf32>
    %c149 = arith.constant 149 : index
    %1216 = memref.load %arg4[%c149] : memref<160xf32, #tpu.memory_space<smem>>
    %c1_686 = arith.constant 1 : index
    %c4_687 = arith.constant 4 : index
    %c0_688 = arith.constant 0 : index
    %1217 = vector.load %arg8[%c1_686, %c4_687, %c0_688] : memref<4x12x128xf32, #tpu.memory_space<vmem>>, vector<1x8x128xf32>
    %1218 = vector.shape_cast %1217 : vector<1x8x128xf32> to vector<8x128xf32>
    %1219 = vector.broadcast %1216 : f32 to vector<8x128xf32>
    %1220 = arith.mulf %1219, %1218 : vector<8x128xf32>
    %1221 = arith.addf %1215, %1220 : vector<8x128xf32>
    %c150 = arith.constant 150 : index
    %1222 = memref.load %arg4[%c150] : memref<160xf32, #tpu.memory_space<smem>>
    %c2_689 = arith.constant 2 : index
    %c0_690 = arith.constant 0 : index
    %c0_691 = arith.constant 0 : index
    %1223 = vector.load %arg8[%c2_689, %c0_690, %c0_691] : memref<4x12x128xf32, #tpu.memory_space<vmem>>, vector<1x8x128xf32>
    %1224 = vector.shape_cast %1223 : vector<1x8x128xf32> to vector<8x128xf32>
    %1225 = vector.broadcast %1222 : f32 to vector<8x128xf32>
    %1226 = arith.mulf %1225, %1224 : vector<8x128xf32>
    %1227 = arith.addf %1221, %1226 : vector<8x128xf32>
    %c151 = arith.constant 151 : index
    %1228 = memref.load %arg4[%c151] : memref<160xf32, #tpu.memory_space<smem>>
    %c2_692 = arith.constant 2 : index
    %c1_693 = arith.constant 1 : index
    %c0_694 = arith.constant 0 : index
    %1229 = vector.load %arg8[%c2_692, %c1_693, %c0_694] : memref<4x12x128xf32, #tpu.memory_space<vmem>>, vector<1x8x128xf32>
    %1230 = vector.shape_cast %1229 : vector<1x8x128xf32> to vector<8x128xf32>
    %1231 = vector.broadcast %1228 : f32 to vector<8x128xf32>
    %1232 = arith.mulf %1231, %1230 : vector<8x128xf32>
    %1233 = arith.addf %1227, %1232 : vector<8x128xf32>
    %c152 = arith.constant 152 : index
    %1234 = memref.load %arg4[%c152] : memref<160xf32, #tpu.memory_space<smem>>
    %c2_695 = arith.constant 2 : index
    %c2_696 = arith.constant 2 : index
    %c0_697 = arith.constant 0 : index
    %1235 = vector.load %arg8[%c2_695, %c2_696, %c0_697] : memref<4x12x128xf32, #tpu.memory_space<vmem>>, vector<1x8x128xf32>
    %1236 = vector.shape_cast %1235 : vector<1x8x128xf32> to vector<8x128xf32>
    %1237 = vector.broadcast %1234 : f32 to vector<8x128xf32>
    %1238 = arith.mulf %1237, %1236 : vector<8x128xf32>
    %1239 = arith.addf %1233, %1238 : vector<8x128xf32>
    %c153 = arith.constant 153 : index
    %1240 = memref.load %arg4[%c153] : memref<160xf32, #tpu.memory_space<smem>>
    %c2_698 = arith.constant 2 : index
    %c3_699 = arith.constant 3 : index
    %c0_700 = arith.constant 0 : index
    %1241 = vector.load %arg8[%c2_698, %c3_699, %c0_700] : memref<4x12x128xf32, #tpu.memory_space<vmem>>, vector<1x8x128xf32>
    %1242 = vector.shape_cast %1241 : vector<1x8x128xf32> to vector<8x128xf32>
    %1243 = vector.broadcast %1240 : f32 to vector<8x128xf32>
    %1244 = arith.mulf %1243, %1242 : vector<8x128xf32>
    %1245 = arith.addf %1239, %1244 : vector<8x128xf32>
    %c154 = arith.constant 154 : index
    %1246 = memref.load %arg4[%c154] : memref<160xf32, #tpu.memory_space<smem>>
    %c2_701 = arith.constant 2 : index
    %c4_702 = arith.constant 4 : index
    %c0_703 = arith.constant 0 : index
    %1247 = vector.load %arg8[%c2_701, %c4_702, %c0_703] : memref<4x12x128xf32, #tpu.memory_space<vmem>>, vector<1x8x128xf32>
    %1248 = vector.shape_cast %1247 : vector<1x8x128xf32> to vector<8x128xf32>
    %1249 = vector.broadcast %1246 : f32 to vector<8x128xf32>
    %1250 = arith.mulf %1249, %1248 : vector<8x128xf32>
    %1251 = arith.addf %1245, %1250 : vector<8x128xf32>
    %c155 = arith.constant 155 : index
    %1252 = memref.load %arg4[%c155] : memref<160xf32, #tpu.memory_space<smem>>
    %c3_704 = arith.constant 3 : index
    %c0_705 = arith.constant 0 : index
    %c0_706 = arith.constant 0 : index
    %1253 = vector.load %arg8[%c3_704, %c0_705, %c0_706] : memref<4x12x128xf32, #tpu.memory_space<vmem>>, vector<1x8x128xf32>
    %1254 = vector.shape_cast %1253 : vector<1x8x128xf32> to vector<8x128xf32>
    %1255 = vector.broadcast %1252 : f32 to vector<8x128xf32>
    %1256 = arith.mulf %1255, %1254 : vector<8x128xf32>
    %1257 = arith.addf %1251, %1256 : vector<8x128xf32>
    %c156 = arith.constant 156 : index
    %1258 = memref.load %arg4[%c156] : memref<160xf32, #tpu.memory_space<smem>>
    %c3_707 = arith.constant 3 : index
    %c1_708 = arith.constant 1 : index
    %c0_709 = arith.constant 0 : index
    %1259 = vector.load %arg8[%c3_707, %c1_708, %c0_709] : memref<4x12x128xf32, #tpu.memory_space<vmem>>, vector<1x8x128xf32>
    %1260 = vector.shape_cast %1259 : vector<1x8x128xf32> to vector<8x128xf32>
    %1261 = vector.broadcast %1258 : f32 to vector<8x128xf32>
    %1262 = arith.mulf %1261, %1260 : vector<8x128xf32>
    %1263 = arith.addf %1257, %1262 : vector<8x128xf32>
    %c157 = arith.constant 157 : index
    %1264 = memref.load %arg4[%c157] : memref<160xf32, #tpu.memory_space<smem>>
    %c3_710 = arith.constant 3 : index
    %c2_711 = arith.constant 2 : index
    %c0_712 = arith.constant 0 : index
    %1265 = vector.load %arg8[%c3_710, %c2_711, %c0_712] : memref<4x12x128xf32, #tpu.memory_space<vmem>>, vector<1x8x128xf32>
    %1266 = vector.shape_cast %1265 : vector<1x8x128xf32> to vector<8x128xf32>
    %1267 = vector.broadcast %1264 : f32 to vector<8x128xf32>
    %1268 = arith.mulf %1267, %1266 : vector<8x128xf32>
    %1269 = arith.addf %1263, %1268 : vector<8x128xf32>
    %c158 = arith.constant 158 : index
    %1270 = memref.load %arg4[%c158] : memref<160xf32, #tpu.memory_space<smem>>
    %c3_713 = arith.constant 3 : index
    %c3_714 = arith.constant 3 : index
    %c0_715 = arith.constant 0 : index
    %1271 = vector.load %arg8[%c3_713, %c3_714, %c0_715] : memref<4x12x128xf32, #tpu.memory_space<vmem>>, vector<1x8x128xf32>
    %1272 = vector.shape_cast %1271 : vector<1x8x128xf32> to vector<8x128xf32>
    %1273 = vector.broadcast %1270 : f32 to vector<8x128xf32>
    %1274 = arith.mulf %1273, %1272 : vector<8x128xf32>
    %1275 = arith.addf %1269, %1274 : vector<8x128xf32>
    %c159 = arith.constant 159 : index
    %1276 = memref.load %arg4[%c159] : memref<160xf32, #tpu.memory_space<smem>>
    %c3_716 = arith.constant 3 : index
    %c4_717 = arith.constant 4 : index
    %c0_718 = arith.constant 0 : index
    %1277 = vector.load %arg8[%c3_716, %c4_717, %c0_718] : memref<4x12x128xf32, #tpu.memory_space<vmem>>, vector<1x8x128xf32>
    %1278 = vector.shape_cast %1277 : vector<1x8x128xf32> to vector<8x128xf32>
    %1279 = vector.broadcast %1276 : f32 to vector<8x128xf32>
    %1280 = arith.mulf %1279, %1278 : vector<8x128xf32>
    %1281 = arith.addf %1275, %1280 : vector<8x128xf32>
    %cst_719 = arith.constant 0.00999999977 : f32
    %1282 = vector.broadcast %cst_719 : f32 to vector<8x128xf32>
    %1283 = arith.mulf %1282, %1281 : vector<8x128xf32>
    %1284 = arith.maximumf %1281, %1283 : vector<8x128xf32>
    %c7_720 = arith.constant 7 : index
    %c0_721 = arith.constant 0 : index
    %c0_722 = arith.constant 0 : index
    %1285 = vector.load %arg6[%c7_720, %c0_721, %c0_722] : memref<8x8x128xf32, #tpu.memory_space<vmem>>, vector<1x8x128xf32>
    %1286 = vector.shape_cast %1285 : vector<1x8x128xf32> to vector<8x128xf32>
    %1287 = vector.shape_cast %1284 : vector<8x128xf32> to vector<1x8x128xf32>
    tpu.vector_store %arg6[%c7_720, %c0_721, %c0_722], %1287 {strides = array<i32>} : memref<8x8x128xf32, #tpu.memory_space<vmem>>, vector<1x8x128xf32>,
    return
  }
  func.func @transform_0(%arg0: i32) -> (i32, i32) {
    %c0_i32 = arith.constant 0 : i32
    %c0_i32_0 = arith.constant 0 : i32
    return %c0_i32, %arg0 : i32, i32
  }
  func.func @transform_1(%arg0: i32) -> i32 {
    %c0_i32 = arith.constant 0 : i32
    %c0_i32_0 = arith.constant 0 : i32
    return %c0_i32 : i32
  }
  func.func @transform_2(%arg0: i32) -> i32 {
    %c0_i32 = arith.constant 0 : i32
    %c0_i32_0 = arith.constant 0 : i32
    return %c0_i32 : i32
  }
  func.func @transform_3(%arg0: i32) -> i32 {
    %c0_i32 = arith.constant 0 : i32
    %c0_i32_0 = arith.constant 0 : i32
    return %c0_i32 : i32
  }
  func.func @transform_4(%arg0: i32) -> i32 {
    %c0_i32 = arith.constant 0 : i32
    %c0_i32_0 = arith.constant 0 : i32
    return %c0_i32 : i32
  }
  func.func @transform_5(%arg0: i32) -> (i32, i32, i32) {
    %c0_i32 = arith.constant 0 : i32
    %c0_i32_0 = arith.constant 0 : i32
    %c0_i32_1 = arith.constant 0 : i32
    return %c0_i32, %c0_i32_0, %arg0 : i32, i32, i32
  }
}

</mosaic_0001>

<llo_original>
// kernel: tpu_custom_call.1
$region0: #{tpu_custom_call.1}
  #allocation0 [shape = 'u32[]', space=smem, size = 0x4, offset = 0x4, fixed_abs, tag = 'smem constant byte address 0x4 - core index']
  #allocation1 [shape = 'u32[144,128]{1,0:T(1,128)}', space=vmem, size = 0x12000, scoped, tag = 'internal scratch']
  #allocation2 [shape = 'f32[16,128]{1,0:T(8,128)}', space=vmem, size = 0x2000, scoped, tag = 'scratch operand']
  #allocation3 [shape = 'f32[4,12,128]{2,1,0:T(8,128)}', space=vmem, size = 0x8000, scoped, tag = 'scratch operand']
  %s0 = inlined_call_operand.hbm [shape: f32[16,128], index: 0, kind: input, shape index: {}]
  %s1 = inlined_call_operand.vmem [shape: f32[40], index: 1, kind: input, shape index: {}]
  %s2 = inlined_call_operand.vmem [shape: f32[4], index: 2, kind: input, shape index: {}]
  %s3 = inlined_call_operand.vmem [shape: f32[160], index: 3, kind: input, shape index: {}]
  %s4 = inlined_call_operand.vmem [shape: f32[8], index: 4, kind: input, shape index: {}]
  %s5 = inlined_call_operand.hbm [shape: f32[8,8,128], index: 5, kind: output, shape index: {}]
  %s6 = sld [smem:[#allocation0]]
  $region50: #{tpu_custom_call.1} parent=0
    _
  %s8 = ssub.s32 1, %s6
  %s9 = scalar_select 0, %s8, %s6
  $region1: #{tpu_custom_call.1} parent=0
    #allocation4 [shape = 'u8[8192]{0}', space=vmem, size = 0x2000, scoped, tag = 'input window, operand 0, single buffered']
    #allocation5 [shape = 's32[1]{0}', space=sflag, size = 0x4, scoped, tag = 'scoped memory for tpu_custom_call.1']
    #allocation6 [shape = 's32[1]{0}', space=sflag, size = 0x4, scoped, tag = 'scoped memory for tpu_custom_call.1']
    #allocation7 [shape = 's32[1]{0}', space=sflag, size = 0x4, scoped, tag = 'scoped memory for tpu_custom_call.1']
    #allocation8 [shape = 'u8[512]{0}', space=smem, size = 0x200, scoped, tag = 'input window, operand 1, single buffered']
    #allocation9 [shape = 'u8[512]{0}', space=smem, size = 0x200, scoped, tag = 'input window, operand 2, single buffered']
    #allocation10 [shape = 's32[1]{0}', space=sflag, size = 0x4, scoped, tag = 'scoped memory for tpu_custom_call.1']
    #allocation11 [shape = 'u8[1024]{0}', space=smem, size = 0x400, scoped, tag = 'input window, operand 3, single buffered']
    #allocation12 [shape = 'u8[512]{0}', space=smem, size = 0x200, scoped, tag = 'input window, operand 4, single buffered']
    #allocation13 [shape = 's32[1]{0}', space=sflag, size = 0x4, scoped, tag = 'scoped memory for tpu_custom_call.1']
    #allocation14 [shape = 'u8[32768]{0}', space=vmem, size = 0x8000, scoped, tag = 'output window, operand 0, single buffered']
    %10 = vsyncpa [#allocation5], 0
    %11 = vsyncpa [#allocation7], 0
    %12 = vsyncpa [#allocation10], 0
    %13 = vsyncpa [#allocation13], 0
    %14 = vsyncpa [#allocation6], 0
    // Predicated region
    $region2: #{tpu_custom_call.1} parent=1 // pred_check
      _
    $region3: #{tpu_custom_call.1} parent=1 // pred_check_branch
      %16 = sbr.rel (0) target = $region5
    $region4: #{tpu_custom_call.1} parent=1 // pred_region
      %s18 = ssub.s32 256, 256
      %19 = vsyncadd [#allocation5], %s18
      %s20 = sshll.u32 [#allocation4], 4
      %s21 = int_to_ptr.vmem [resolvable:$true] %s20
      %26 = dma.hbm_to_vmem [thread:$0]  %s0, 256, %s21, [#allocation5], 128, 128, 8
    $region5: #{tpu_custom_call.1} parent=1 // pred_fallthru
      _
    // Predicated region
    $region6: #{tpu_custom_call.1} parent=1 // pred_check
      _
    $region7: #{tpu_custom_call.1} parent=1 // pred_check_branch
      %28 = sbr.rel (0) target = $region9
    $region8: #{tpu_custom_call.1} parent=1 // pred_region
      %s30 = ssub.s32 16, 16
      %31 = vsyncadd [#allocation7], %s30
      %s33 = sshll.u32 %s1, 4
      %s34 = int_to_ptr.vmem [resolvable:$true] %s33
      %36 = dma.vmem_to_smem %s34, 16, [#allocation8], [#allocation7]
    $region9: #{tpu_custom_call.1} parent=1 // pred_fallthru
      _
    // Predicated region
    $region10: #{tpu_custom_call.1} parent=1 // pred_check
      _
    $region11: #{tpu_custom_call.1} parent=1 // pred_check_branch
      %38 = sbr.rel (0) target = $region13
    $region12: #{tpu_custom_call.1} parent=1 // pred_region
      %s40 = ssub.s32 16, 16
      %41 = vsyncadd [#allocation10], %s40
      %s43 = sshll.u32 %s2, 4
      %s44 = int_to_ptr.vmem [resolvable:$true] %s43
      %46 = dma.vmem_to_smem %s44, 16, [#allocation9], [#allocation10]
    $region13: #{tpu_custom_call.1} parent=1 // pred_fallthru
      _
    // Predicated region
    $region14: #{tpu_custom_call.1} parent=1 // pred_check
      _
    $region15: #{tpu_custom_call.1} parent=1 // pred_check_branch
      %48 = sbr.rel (0) target = $region17
    $region16: #{tpu_custom_call.1} parent=1 // pred_region
      %s50 = ssub.s32 32, 32
      %51 = vsyncadd [#allocation10], %s50
      %s53 = sshll.u32 %s3, 4
      %s54 = int_to_ptr.vmem [resolvable:$true] %s53
      %56 = dma.vmem_to_smem %s54, 32, [#allocation11], [#allocation10]
    $region17: #{tpu_custom_call.1} parent=1 // pred_fallthru
      _
    // Predicated region
    $region18: #{tpu_custom_call.1} parent=1 // pred_check
      _
    $region19: #{tpu_custom_call.1} parent=1 // pred_check_branch
      %58 = sbr.rel (0) target = $region21
    $region20: #{tpu_custom_call.1} parent=1 // pred_region
      %s60 = ssub.s32 16, 16
      %61 = vsyncadd [#allocation13], %s60
      %s63 = sshll.u32 %s4, 4
      %s64 = int_to_ptr.vmem [resolvable:$true] %s63
      %66 = dma.vmem_to_smem %s64, 16, [#allocation12], [#allocation13]
    $region21: #{tpu_custom_call.1} parent=1 // pred_fallthru
      _
    // Predicated region
    $region22: #{tpu_custom_call.1} parent=1 // pred_check
      _
    $region23: #{tpu_custom_call.1} parent=1 // pred_check_branch
      %68 = sbr.rel (0) target = $region25
    $region24: #{tpu_custom_call.1} parent=1 // pred_region
      %69 = dma.done [#allocation5], 256
    $region25: #{tpu_custom_call.1} parent=1 // pred_fallthru
      _
    // Predicated region
    $region26: #{tpu_custom_call.1} parent=1 // pred_check
      _
    $region27: #{tpu_custom_call.1} parent=1 // pred_check_branch
      %71 = sbr.rel (0) target = $region29
    $region28: #{tpu_custom_call.1} parent=1 // pred_region
      %72 = dma.done [#allocation7], 16
    $region29: #{tpu_custom_call.1} parent=1 // pred_fallthru
      _
    // Predicated region
    $region30: #{tpu_custom_call.1} parent=1 // pred_check
      _
    $region31: #{tpu_custom_call.1} parent=1 // pred_check_branch
      %74 = sbr.rel (0) target = $region33
    $region32: #{tpu_custom_call.1} parent=1 // pred_region
      %75 = dma.done [#allocation10], 16
    $region33: #{tpu_custom_call.1} parent=1 // pred_fallthru
      _
    // Predicated region
    $region34: #{tpu_custom_call.1} parent=1 // pred_check
      _
    $region35: #{tpu_custom_call.1} parent=1 // pred_check_branch
      %77 = sbr.rel (0) target = $region37
    $region36: #{tpu_custom_call.1} parent=1 // pred_region
      %78 = dma.done [#allocation10], 32
    $region37: #{tpu_custom_call.1} parent=1 // pred_fallthru
      _
    // Predicated region
    $region38: #{tpu_custom_call.1} parent=1 // pred_check
      _
    $region39: #{tpu_custom_call.1} parent=1 // pred_check_branch
      %80 = sbr.rel (0) target = $region41
    $region40: #{tpu_custom_call.1} parent=1 // pred_region
      %81 = dma.done [#allocation13], 16
    $region41: #{tpu_custom_call.1} parent=1 // pred_fallthru
      _
    %82 = sfence
    %v83 = vld [vmem:[#allocation4] sm:$0x1]
    %84 = vst [vmem:[#allocation2] sm:$0x1] %v83
    %v85 = vld [vmem:[#allocation4 + $0x4] sm:$0x1]
    %86 = vst [vmem:[#allocation2 + $0x1] sm:$0x1] %v85
    %v87 = vld [vmem:[#allocation4 + $0x8] sm:$0x1]
    %88 = vst [vmem:[#allocation2 + $0x2] sm:$0x1] %v87
    %v89 = vld [vmem:[#allocation4 + $0xc] sm:$0x1]
    %90 = vst [vmem:[#allocation2 + $0x3] sm:$0x1] %v89
    %v91 = vld [vmem:[#allocation4 + $0x1] sm:$0x1]
    %92 = vst [vmem:[#allocation2 + $0x4] sm:$0x1] %v91
    %v93 = vld [vmem:[#allocation4 + $0x5] sm:$0x1]
    %94 = vst [vmem:[#allocation2 + $0x5] sm:$0x1] %v93
    %v95 = vld [vmem:[#allocation4 + $0x9] sm:$0x1]
    %96 = vst [vmem:[#allocation2 + $0x6] sm:$0x1] %v95
    %v97 = vld [vmem:[#allocation4 + $0xd] sm:$0x1]
    %98 = vst [vmem:[#allocation2 + $0x7] sm:$0x1] %v97
    %v99 = vld [vmem:[#allocation4 + $0x2] sm:$0x1]
    %100 = vst [vmem:[#allocation2 + $0x8] sm:$0x1] %v99
    %v101 = vld [vmem:[#allocation4 + $0x6] sm:$0x1]
    %102 = vst [vmem:[#allocation2 + $0x9] sm:$0x1] %v101
    %v103 = vld [vmem:[#allocation4 + $0xa] sm:$0x1]
    %104 = vst [vmem:[#allocation2 + $0xa] sm:$0x1] %v103
    %v105 = vld [vmem:[#allocation4 + $0xe] sm:$0x1]
    %106 = vst [vmem:[#allocation2 + $0xb] sm:$0x1] %v105
    %v107 = vld [vmem:[#allocation4 + $0x3] sm:$0x1]
    %108 = vst [vmem:[#allocation2 + $0xc] sm:$0x1] %v107
    %v109 = vld [vmem:[#allocation4 + $0x7] sm:$0x1]
    %110 = vst [vmem:[#allocation2 + $0xd] sm:$0x1] %v109
    %v111 = vld [vmem:[#allocation4 + $0xb] sm:$0x1]
    %112 = vst [vmem:[#allocation2 + $0xe] sm:$0x1] %v111
    %v113 = vld [vmem:[#allocation4 + $0xf] sm:$0x1]
    %114 = vst [vmem:[#allocation2 + $0xf] sm:$0x1] %v113
    %s115 = sld [smem:[#allocation9]]
    %v116 = vstv %s115
    %s117 = sld [smem:[#allocation8]]
    %v118 = vld [vmem:[#allocation4] sm:$0xff]
    %v119 = vld [vmem:[#allocation4 + $0x8] sm:$0xf]
    %v120 = vstv %s117
    %v121 = vmul.f32 %v120, %v118
    %v122 = vmul.f32 %v120, %v119
    %v123 = vadd.f32 %v116, %v121
    %v124 = vadd.f32 %v116, %v122
    %s125 = sld [smem:[#allocation8 + $0x5]]
    %v126 = vld [vmem:[#allocation2] sm:$0xff]
    %v127 = vld [vmem:[#allocation2 + $0x8] sm:$0xf]
    %v128 = vstv %s125
    %v129 = vmul.f32 %v128, %v126
    %v130 = vmul.f32 %v128, %v127
    %v131 = vadd.f32 %v123, %v129
    %v132 = vadd.f32 %v124, %v130
    %s133 = sld [smem:[#allocation8 + $0x1]]
    %v134 = vld [vmem:[#allocation4 + $0x1] sm:$0xff]
    %v135 = vld [vmem:[#allocation4 + $0x9] sm:$0xf]
    %v136 = vstv %s133
    %v137 = vmul.f32 %v136, %v134
    %v138 = vmul.f32 %v136, %v135
    %v139 = vadd.f32 %v131, %v137
    %v140 = vadd.f32 %v132, %v138
    %s141 = sld [smem:[#allocation8 + $0x6]]
    %v142 = vld [vmem:[#allocation2 + $0x1] sm:$0xff]
    %v143 = vld [vmem:[#allocation2 + $0x9] sm:$0xf]
    %v144 = vstv %s141
    %v145 = vmul.f32 %v144, %v142
    %v146 = vmul.f32 %v144, %v143
    %v147 = vadd.f32 %v139, %v145
    %v148 = vadd.f32 %v140, %v146
    %s149 = sld [smem:[#allocation8 + $0x2]]
    %v150 = vld [vmem:[#allocation4 + $0x2] sm:$0xff]
    %v151 = vld [vmem:[#allocation4 + $0xa] sm:$0xf]
    %v152 = vstv %s149
    %v153 = vmul.f32 %v152, %v150
    %v154 = vmul.f32 %v152, %v151
    %v155 = vadd.f32 %v147, %v153
    %v156 = vadd.f32 %v148, %v154
    %s157 = sld [smem:[#allocation8 + $0x7]]
    %v158 = vld [vmem:[#allocation2 + $0x2] sm:$0xff]
    %v159 = vld [vmem:[#allocation2 + $0xa] sm:$0xf]
    %v160 = vstv %s157
    %v161 = vmul.f32 %v160, %v158
    %v162 = vmul.f32 %v160, %v159
    %v163 = vadd.f32 %v155, %v161
    %v164 = vadd.f32 %v156, %v162
    %s165 = sld [smem:[#allocation8 + $0x3]]
    %v166 = vld [vmem:[#allocation4 + $0x3] sm:$0xff]
    %v167 = vld [vmem:[#allocation4 + $0xb] sm:$0xf]
    %v168 = vstv %s165
    %v169 = vmul.f32 %v168, %v166
    %v170 = vmul.f32 %v168, %v167
    %v171 = vadd.f32 %v163, %v169
    %v172 = vadd.f32 %v164, %v170
    %s173 = sld [smem:[#allocation8 + $0x8]]
    %v174 = vld [vmem:[#allocation2 + $0x3] sm:$0xff]
    %v175 = vld [vmem:[#allocation2 + $0xb] sm:$0xf]
    %v176 = vstv %s173
    %v177 = vmul.f32 %v176, %v174
    %v178 = vmul.f32 %v176, %v175
    %v179 = vadd.f32 %v171, %v177
    %v180 = vadd.f32 %v172, %v178
    %s181 = sld [smem:[#allocation8 + $0x4]]
    %v182 = vld [vmem:[#allocation4 + $0x4] sm:$0xff]
    %v183 = vld [vmem:[#allocation4 + $0xc] sm:$0xf]
    %v184 = vstv %s181
    %v185 = vmul.f32 %v184, %v182
    %v186 = vmul.f32 %v184, %v183
    %v187 = vadd.f32 %v179, %v185
    %v188 = vadd.f32 %v180, %v186
    %s189 = sld [smem:[#allocation8 + $0x9]]
    %v190 = vld [vmem:[#allocation2 + $0x4] sm:$0xff]
    %v191 = vld [vmem:[#allocation2 + $0xc] sm:$0xf]
    %v192 = vstv %s189
    %v193 = vmul.f32 %v192, %v190
    %v194 = vmul.f32 %v192, %v191
    %v195 = vadd.f32 %v187, %v193
    %v196 = vadd.f32 %v188, %v194
    %v197 = vmul.f32 %v195, 0.01
    %v198 = vmul.f32 %v196, 0.01
    %v199 = vmax.f32 %v195, %v197
    %v200 = vmax.f32 %v196, %v198
    %201 = vst [vmem:[#allocation3] sm:$0xff] %v199
    %202 = vst [vmem:[#allocation3 + $0x8] sm:$0xf] %v200
    %s203 = sld [smem:[#allocation9 + $0x1]]
    %v204 = vstv %s203
    %s205 = sld [smem:[#allocation8 + $0xa]]
    %v206 = vld [vmem:[#allocation4] sm:$0xff]
    %v207 = vld [vmem:[#allocation4 + $0x8] sm:$0xf]
    %v208 = vstv %s205
    %v209 = vmul.f32 %v208, %v206
    %v210 = vmul.f32 %v208, %v207
    %v211 = vadd.f32 %v204, %v209
    %v212 = vadd.f32 %v204, %v210
    %s213 = sld [smem:[#allocation8 + $0xf]]
    %v214 = vld [vmem:[#allocation2] sm:$0xff]
    %v215 = vld [vmem:[#allocation2 + $0x8] sm:$0xf]
    %v216 = vstv %s213
    %v217 = vmul.f32 %v216, %v214
    %v218 = vmul.f32 %v216, %v215
    %v219 = vadd.f32 %v211, %v217
    %v220 = vadd.f32 %v212, %v218
    %s221 = sld [smem:[#allocation8 + $0xb]]
    %v222 = vld [vmem:[#allocation4 + $0x1] sm:$0xff]
    %v223 = vld [vmem:[#allocation4 + $0x9] sm:$0xf]
    %v224 = vstv %s221
    %v225 = vmul.f32 %v224, %v222
    %v226 = vmul.f32 %v224, %v223
    %v227 = vadd.f32 %v219, %v225
    %v228 = vadd.f32 %v220, %v226
    %s229 = sld [smem:[#allocation8 + $0x10]]
    %v230 = vld [vmem:[#allocation2 + $0x1] sm:$0xff]
    %v231 = vld [vmem:[#allocation2 + $0x9] sm:$0xf]
    %v232 = vstv %s229
    %v233 = vmul.f32 %v232, %v230
    %v234 = vmul.f32 %v232, %v231
    %v235 = vadd.f32 %v227, %v233
    %v236 = vadd.f32 %v228, %v234
    %s237 = sld [smem:[#allocation8 + $0xc]]
    %v238 = vld [vmem:[#allocation4 + $0x2] sm:$0xff]
    %v239 = vld [vmem:[#allocation4 + $0xa] sm:$0xf]
    %v240 = vstv %s237
    %v241 = vmul.f32 %v240, %v238
    %v242 = vmul.f32 %v240, %v239
    %v243 = vadd.f32 %v235, %v241
    %v244 = vadd.f32 %v236, %v242
    %s245 = sld [smem:[#allocation8 + $0x11]]
    %v246 = vld [vmem:[#allocation2 + $0x2] sm:$0xff]
    %v247 = vld [vmem:[#allocation2 + $0xa] sm:$0xf]
    %v248 = vstv %s245
    %v249 = vmul.f32 %v248, %v246
    %v250 = vmul.f32 %v248, %v247
    %v251 = vadd.f32 %v243, %v249
    %v252 = vadd.f32 %v244, %v250
    %s253 = sld [smem:[#allocation8 + $0xd]]
    %v254 = vld [vmem:[#allocation4 + $0x3] sm:$0xff]
    %v255 = vld [vmem:[#allocation4 + $0xb] sm:$0xf]
    %v256 = vstv %s253
    %v257 = vmul.f32 %v256, %v254
    %v258 = vmul.f32 %v256, %v255
    %v259 = vadd.f32 %v251, %v257
    %v260 = vadd.f32 %v252, %v258
    %s261 = sld [smem:[#allocation8 + $0x12]]
    %v262 = vld [vmem:[#allocation2 + $0x3] sm:$0xff]
    %v263 = vld [vmem:[#allocation2 + $0xb] sm:$0xf]
    %v264 = vstv %s261
    %v265 = vmul.f32 %v264, %v262
    %v266 = vmul.f32 %v264, %v263
    %v267 = vadd.f32 %v259, %v265
    %v268 = vadd.f32 %v260, %v266
    %s269 = sld [smem:[#allocation8 + $0xe]]
    %v270 = vld [vmem:[#allocation4 + $0x4] sm:$0xff]
    %v271 = vld [vmem:[#allocation4 + $0xc] sm:$0xf]
    %v272 = vstv %s269
    %v273 = vmul.f32 %v272, %v270
    %v274 = vmul.f32 %v272, %v271
    %v275 = vadd.f32 %v267, %v273
    %v276 = vadd.f32 %v268, %v274
    %s277 = sld [smem:[#allocation8 + $0x13]]
    %v278 = vld [vmem:[#allocation2 + $0x4] sm:$0xff]
    %v279 = vld [vmem:[#allocation2 + $0xc] sm:$0xf]
    %v280 = vstv %s277
    %v281 = vmul.f32 %v280, %v278
    %v282 = vmul.f32 %v280, %v279
    %v283 = vadd.f32 %v275, %v281
    %v284 = vadd.f32 %v276, %v282
    %v285 = vmul.f32 %v283, 0.01
    %v286 = vmul.f32 %v284, 0.01
    %v287 = vmax.f32 %v283, %v285
    %v288 = vmax.f32 %v284, %v286
    %s289 = scalar_lea.vmem [#allocation3], 16
    %290 = vst [vmem:[%s289] sm:$0xff] %v287
    %291 = vst [vmem:[%s289 + $0x8] sm:$0xf] %v288
    %s292 = sld [smem:[#allocation9 + $0x2]]
    %v293 = vstv %s292
    %s294 = sld [smem:[#allocation8 + $0x14]]
    %v295 = vld [vmem:[#allocation4] sm:$0xff]
    %v296 = vld [vmem:[#allocation4 + $0x8] sm:$0xf]
    %v297 = vstv %s294
    %v298 = vmul.f32 %v297, %v295
    %v299 = vmul.f32 %v297, %v296
    %v300 = vadd.f32 %v293, %v298
    %v301 = vadd.f32 %v293, %v299
    %s302 = sld [smem:[#allocation8 + $0x19]]
    %v303 = vld [vmem:[#allocation2] sm:$0xff]
    %v304 = vld [vmem:[#allocation2 + $0x8] sm:$0xf]
    %v305 = vstv %s302
    %v306 = vmul.f32 %v305, %v303
    %v307 = vmul.f32 %v305, %v304
    %v308 = vadd.f32 %v300, %v306
    %v309 = vadd.f32 %v301, %v307
    %s310 = sld [smem:[#allocation8 + $0x15]]
    %v311 = vld [vmem:[#allocation4 + $0x1] sm:$0xff]
    %v312 = vld [vmem:[#allocation4 + $0x9] sm:$0xf]
    %v313 = vstv %s310
    %v314 = vmul.f32 %v313, %v311
    %v315 = vmul.f32 %v313, %v312
    %v316 = vadd.f32 %v308, %v314
    %v317 = vadd.f32 %v309, %v315
    %s318 = sld [smem:[#allocation8 + $0x1a]]
    %v319 = vld [vmem:[#allocation2 + $0x1] sm:$0xff]
    %v320 = vld [vmem:[#allocation2 + $0x9] sm:$0xf]
    %v321 = vstv %s318
    %v322 = vmul.f32 %v321, %v319
    %v323 = vmul.f32 %v321, %v320
    %v324 = vadd.f32 %v316, %v322
    %v325 = vadd.f32 %v317, %v323
    %s326 = sld [smem:[#allocation8 + $0x16]]
    %v327 = vld [vmem:[#allocation4 + $0x2] sm:$0xff]
    %v328 = vld [vmem:[#allocation4 + $0xa] sm:$0xf]
    %v329 = vstv %s326
    %v330 = vmul.f32 %v329, %v327
    %v331 = vmul.f32 %v329, %v328
    %v332 = vadd.f32 %v324, %v330
    %v333 = vadd.f32 %v325, %v331
    %s334 = sld [smem:[#allocation8 + $0x1b]]
    %v335 = vld [vmem:[#allocation2 + $0x2] sm:$0xff]
    %v336 = vld [vmem:[#allocation2 + $0xa] sm:$0xf]
    %v337 = vstv %s334
    %v338 = vmul.f32 %v337, %v335
    %v339 = vmul.f32 %v337, %v336
    %v340 = vadd.f32 %v332, %v338
    %v341 = vadd.f32 %v333, %v339
    %s342 = sld [smem:[#allocation8 + $0x17]]
    %v343 = vld [vmem:[#allocation4 + $0x3] sm:$0xff]
    %v344 = vld [vmem:[#allocation4 + $0xb] sm:$0xf]
    %v345 = vstv %s342
    %v346 = vmul.f32 %v345, %v343
    %v347 = vmul.f32 %v345, %v344
    %v348 = vadd.f32 %v340, %v346
    %v349 = vadd.f32 %v341, %v347
    %s350 = sld [smem:[#allocation8 + $0x1c]]
    %v351 = vld [vmem:[#allocation2 + $0x3] sm:$0xff]
    %v352 = vld [vmem:[#allocation2 + $0xb] sm:$0xf]
    %v353 = vstv %s350
    %v354 = vmul.f32 %v353, %v351
    %v355 = vmul.f32 %v353, %v352
    %v356 = vadd.f32 %v348, %v354
    %v357 = vadd.f32 %v349, %v355
    %s358 = sld [smem:[#allocation8 + $0x18]]
    %v359 = vld [vmem:[#allocation4 + $0x4] sm:$0xff]
    %v360 = vld [vmem:[#allocation4 + $0xc] sm:$0xf]
    %v361 = vstv %s358
    %v362 = vmul.f32 %v361, %v359
    %v363 = vmul.f32 %v361, %v360
    %v364 = vadd.f32 %v356, %v362
    %v365 = vadd.f32 %v357, %v363
    %s366 = sld [smem:[#allocation8 + $0x1d]]
    %v367 = vld [vmem:[#allocation2 + $0x4] sm:$0xff]
    %v368 = vld [vmem:[#allocation2 + $0xc] sm:$0xf]
    %v369 = vstv %s366
    %v370 = vmul.f32 %v369, %v367
    %v371 = vmul.f32 %v369, %v368
    %v372 = vadd.f32 %v364, %v370
    %v373 = vadd.f32 %v365, %v371
    %v374 = vmul.f32 %v372, 0.01
    %v375 = vmul.f32 %v373, 0.01
    %v376 = vmax.f32 %v372, %v374
    %v377 = vmax.f32 %v373, %v375
    %s378 = scalar_lea.vmem [#allocation3], 32
    %379 = vst [vmem:[%s378] sm:$0xff] %v376
    %380 = vst [vmem:[%s378 + $0x8] sm:$0xf] %v377
    %s381 = sld [smem:[#allocation9 + $0x3]]
    %v382 = vstv %s381
    %s383 = sld [smem:[#allocation8 + $0x1e]]
    %v384 = vld [vmem:[#allocation4] sm:$0xff]
    %v385 = vld [vmem:[#allocation4 + $0x8] sm:$0xf]
    %v386 = vstv %s383
    %v387 = vmul.f32 %v386, %v384
    %v388 = vmul.f32 %v386, %v385
    %v389 = vadd.f32 %v382, %v387
    %v390 = vadd.f32 %v382, %v388
    %s391 = sld [smem:[#allocation8 + $0x23]]
    %v392 = vld [vmem:[#allocation2] sm:$0xff]
    %v393 = vld [vmem:[#allocation2 + $0x8] sm:$0xf]
    %v394 = vstv %s391
    %v395 = vmul.f32 %v394, %v392
    %v396 = vmul.f32 %v394, %v393
    %v397 = vadd.f32 %v389, %v395
    %v398 = vadd.f32 %v390, %v396
    %s399 = sld [smem:[#allocation8 + $0x1f]]
    %v400 = vld [vmem:[#allocation4 + $0x1] sm:$0xff]
    %v401 = vld [vmem:[#allocation4 + $0x9] sm:$0xf]
    %v402 = vstv %s399
    %v403 = vmul.f32 %v402, %v400
    %v404 = vmul.f32 %v402, %v401
    %v405 = vadd.f32 %v397, %v403
    %v406 = vadd.f32 %v398, %v404
    %s407 = sld [smem:[#allocation8 + $0x24]]
    %v408 = vld [vmem:[#allocation2 + $0x1] sm:$0xff]
    %v409 = vld [vmem:[#allocation2 + $0x9] sm:$0xf]
    %v410 = vstv %s407
    %v411 = vmul.f32 %v410, %v408
    %v412 = vmul.f32 %v410, %v409
    %v413 = vadd.f32 %v405, %v411
    %v414 = vadd.f32 %v406, %v412
    %s415 = sld [smem:[#allocation8 + $0x20]]
    %v416 = vld [vmem:[#allocation4 + $0x2] sm:$0xff]
    %v417 = vld [vmem:[#allocation4 + $0xa] sm:$0xf]
    %v418 = vstv %s415
    %v419 = vmul.f32 %v418, %v416
    %v420 = vmul.f32 %v418, %v417
    %v421 = vadd.f32 %v413, %v419
    %v422 = vadd.f32 %v414, %v420
    %s423 = sld [smem:[#allocation8 + $0x25]]
    %v424 = vld [vmem:[#allocation2 + $0x2] sm:$0xff]
    %v425 = vld [vmem:[#allocation2 + $0xa] sm:$0xf]
    %v426 = vstv %s423
    %v427 = vmul.f32 %v426, %v424
    %v428 = vmul.f32 %v426, %v425
    %v429 = vadd.f32 %v421, %v427
    %v430 = vadd.f32 %v422, %v428
    %s431 = sld [smem:[#allocation8 + $0x21]]
    %v432 = vld [vmem:[#allocation4 + $0x3] sm:$0xff]
    %v433 = vld [vmem:[#allocation4 + $0xb] sm:$0xf]
    %v434 = vstv %s431
    %v435 = vmul.f32 %v434, %v432
    %v436 = vmul.f32 %v434, %v433
    %v437 = vadd.f32 %v429, %v435
    %v438 = vadd.f32 %v430, %v436
    %s439 = sld [smem:[#allocation8 + $0x26]]
    %v440 = vld [vmem:[#allocation2 + $0x3] sm:$0xff]
    %v441 = vld [vmem:[#allocation2 + $0xb] sm:$0xf]
    %v442 = vstv %s439
    %v443 = vmul.f32 %v442, %v440
    %v444 = vmul.f32 %v442, %v441
    %v445 = vadd.f32 %v437, %v443
    %v446 = vadd.f32 %v438, %v444
    %s447 = sld [smem:[#allocation8 + $0x22]]
    %v448 = vld [vmem:[#allocation4 + $0x4] sm:$0xff]
    %v449 = vld [vmem:[#allocation4 + $0xc] sm:$0xf]
    %v450 = vstv %s447
    %v451 = vmul.f32 %v450, %v448
    %v452 = vmul.f32 %v450, %v449
    %v453 = vadd.f32 %v445, %v451
    %v454 = vadd.f32 %v446, %v452
    %s455 = sld [smem:[#allocation8 + $0x27]]
    %v456 = vld [vmem:[#allocation2 + $0x4] sm:$0xff]
    %v457 = vld [vmem:[#allocation2 + $0xc] sm:$0xf]
    %v458 = vstv %s455
    %v459 = vmul.f32 %v458, %v456
    %v460 = vmul.f32 %v458, %v457
    %v461 = vadd.f32 %v453, %v459
    %v462 = vadd.f32 %v454, %v460
    %v463 = vmul.f32 %v461, 0.01
    %v464 = vmul.f32 %v462, 0.01
    %v465 = vmax.f32 %v461, %v463
    %v466 = vmax.f32 %v462, %v464
    %s467 = scalar_lea.vmem [#allocation3], 48
    %468 = vst [vmem:[%s467] sm:$0xff] %v465
    %469 = vst [vmem:[%s467 + $0x8] sm:$0xf] %v466
    %s470 = sld [smem:[#allocation12]]
    %v471 = vstv %s470
    %s472 = sld [smem:[#allocation11]]
    %v473 = vld [vmem:[#allocation3] sm:$0xff]
    %v474 = vstv %s472
    %v475 = vmul.f32 %v474, %v473
    %v476 = vadd.f32 %v471, %v475
    %s477 = sld [smem:[#allocation11 + $0x1]]
    %v478 = vld [vmem:[#allocation3 + $0x1] sm:$0xff]
    %v479 = vstv %s477
    %v480 = vmul.f32 %v479, %v478
    %v481 = vadd.f32 %v476, %v480
    %s482 = sld [smem:[#allocation11 + $0x2]]
    %v483 = vld [vmem:[#allocation3 + $0x2] sm:$0xff]
    %v484 = vstv %s482
    %v485 = vmul.f32 %v484, %v483
    %v486 = vadd.f32 %v481, %v485
    %s487 = sld [smem:[#allocation11 + $0x3]]
    %v488 = vld [vmem:[#allocation3 + $0x3] sm:$0xff]
    %v489 = vstv %s487
    %v490 = vmul.f32 %v489, %v488
    %v491 = vadd.f32 %v486, %v490
    %s492 = sld [smem:[#allocation11 + $0x4]]
    %v493 = vld [vmem:[#allocation3 + $0x4] sm:$0xff]
    %v494 = vstv %s492
    %v495 = vmul.f32 %v494, %v493
    %v496 = vadd.f32 %v491, %v495
    %s497 = sld [smem:[#allocation11 + $0x5]]
    %v498 = vld [vmem:[%s289] sm:$0xff]
    %v499 = vstv %s497
    %v500 = vmul.f32 %v499, %v498
    %v501 = vadd.f32 %v496, %v500
    %s502 = sld [smem:[#allocation11 + $0x6]]
    %v503 = vld [vmem:[%s289 + $0x1] sm:$0xff]
    %v504 = vstv %s502
    %v505 = vmul.f32 %v504, %v503
    %v506 = vadd.f32 %v501, %v505
    %s507 = sld [smem:[#allocation11 + $0x7]]
    %v508 = vld [vmem:[%s289 + $0x2] sm:$0xff]
    %v509 = vstv %s507
    %v510 = vmul.f32 %v509, %v508
    %v511 = vadd.f32 %v506, %v510
    %s512 = sld [smem:[#allocation11 + $0x8]]
    %v513 = vld [vmem:[%s289 + $0x3] sm:$0xff]
    %v514 = vstv %s512
    %v515 = vmul.f32 %v514, %v513
    %v516 = vadd.f32 %v511, %v515
    %s517 = sld [smem:[#allocation11 + $0x9]]
    %v518 = vld [vmem:[%s289 + $0x4] sm:$0xff]
    %v519 = vstv %s517
    %v520 = vmul.f32 %v519, %v518
    %v521 = vadd.f32 %v516, %v520
    %s522 = sld [smem:[#allocation11 + $0xa]]
    %v523 = vld [vmem:[%s378] sm:$0xff]
    %v524 = vstv %s522
    %v525 = vmul.f32 %v524, %v523
    %v526 = vadd.f32 %v521, %v525
    %s527 = sld [smem:[#allocation11 + $0xb]]
    %v528 = vld [vmem:[%s378 + $0x1] sm:$0xff]
    %v529 = vstv %s527
    %v530 = vmul.f32 %v529, %v528
    %v531 = vadd.f32 %v526, %v530
    %s532 = sld [smem:[#allocation11 + $0xc]]
    %v533 = vld [vmem:[%s378 + $0x2] sm:$0xff]
    %v534 = vstv %s532
    %v535 = vmul.f32 %v534, %v533
    %v536 = vadd.f32 %v531, %v535
    %s537 = sld [smem:[#allocation11 + $0xd]]
    %v538 = vld [vmem:[%s378 + $0x3] sm:$0xff]
    %v539 = vstv %s537
    %v540 = vmul.f32 %v539, %v538
    %v541 = vadd.f32 %v536, %v540
    %s542 = sld [smem:[#allocation11 + $0xe]]
    %v543 = vld [vmem:[%s378 + $0x4] sm:$0xff]
    %v544 = vstv %s542
    %v545 = vmul.f32 %v544, %v543
    %v546 = vadd.f32 %v541, %v545
    %s547 = sld [smem:[#allocation11 + $0xf]]
    %v548 = vld [vmem:[%s467] sm:$0xff]
    %v549 = vstv %s547
    %v550 = vmul.f32 %v549, %v548
    %v551 = vadd.f32 %v546, %v550
    %s552 = sld [smem:[#allocation11 + $0x10]]
    %v553 = vld [vmem:[%s467 + $0x1] sm:$0xff]
    %v554 = vstv %s552
    %v555 = vmul.f32 %v554, %v553
    %v556 = vadd.f32 %v551, %v555
    %s557 = sld [smem:[#allocation11 + $0x11]]
    %v558 = vld [vmem:[%s467 + $0x2] sm:$0xff]
    %v559 = vstv %s557
    %v560 = vmul.f32 %v559, %v558
    %v561 = vadd.f32 %v556, %v560
    %s562 = sld [smem:[#allocation11 + $0x12]]
    %v563 = vld [vmem:[%s467 + $0x3] sm:$0xff]
    %v564 = vstv %s562
    %v565 = vmul.f32 %v564, %v563
    %v566 = vadd.f32 %v561, %v565
    %s567 = sld [smem:[#allocation11 + $0x13]]
    %v568 = vld [vmem:[%s467 + $0x4] sm:$0xff]
    %v569 = vstv %s567
    %v570 = vmul.f32 %v569, %v568
    %v571 = vadd.f32 %v566, %v570
    %v572 = vmul.f32 %v571, 0.01
    %v573 = vmax.f32 %v571, %v572
    %574 = vst [vmem:[#allocation14] sm:$0xff] %v573
    %s575 = sld [smem:[#allocation12 + $0x1]]
    %v576 = vstv %s575
    %s577 = sld [smem:[#allocation11 + $0x14]]
    %v578 = vld [vmem:[#allocation3] sm:$0xff]
    %v579 = vstv %s577
    %v580 = vmul.f32 %v579, %v578
    %v581 = vadd.f32 %v576, %v580
    %s582 = sld [smem:[#allocation11 + $0x15]]
    %v583 = vld [vmem:[#allocation3 + $0x1] sm:$0xff]
    %v584 = vstv %s582
    %v585 = vmul.f32 %v584, %v583
    %v586 = vadd.f32 %v581, %v585
    %s587 = sld [smem:[#allocation11 + $0x16]]
    %v588 = vld [vmem:[#allocation3 + $0x2] sm:$0xff]
    %v589 = vstv %s587
    %v590 = vmul.f32 %v589, %v588
    %v591 = vadd.f32 %v586, %v590
    %s592 = sld [smem:[#allocation11 + $0x17]]
    %v593 = vld [vmem:[#allocation3 + $0x3] sm:$0xff]
    %v594 = vstv %s592
    %v595 = vmul.f32 %v594, %v593
    %v596 = vadd.f32 %v591, %v595
    %s597 = sld [smem:[#allocation11 + $0x18]]
    %v598 = vld [vmem:[#allocation3 + $0x4] sm:$0xff]
    %v599 = vstv %s597
    %v600 = vmul.f32 %v599, %v598
    %v601 = vadd.f32 %v596, %v600
    %s602 = sld [smem:[#allocation11 + $0x19]]
    %v603 = vld [vmem:[%s289] sm:$0xff]
    %v604 = vstv %s602
    %v605 = vmul.f32 %v604, %v603
    %v606 = vadd.f32 %v601, %v605
    %s607 = sld [smem:[#allocation11 + $0x1a]]
    %v608 = vld [vmem:[%s289 + $0x1] sm:$0xff]
    %v609 = vstv %s607
    %v610 = vmul.f32 %v609, %v608
    %v611 = vadd.f32 %v606, %v610
    %s612 = sld [smem:[#allocation11 + $0x1b]]
    %v613 = vld [vmem:[%s289 + $0x2] sm:$0xff]
    %v614 = vstv %s612
    %v615 = vmul.f32 %v614, %v613
    %v616 = vadd.f32 %v611, %v615
    %s617 = sld [smem:[#allocation11 + $0x1c]]
    %v618 = vld [vmem:[%s289 + $0x3] sm:$0xff]
    %v619 = vstv %s617
    %v620 = vmul.f32 %v619, %v618
    %v621 = vadd.f32 %v616, %v620
    %s622 = sld [smem:[#allocation11 + $0x1d]]
    %v623 = vld [vmem:[%s289 + $0x4] sm:$0xff]
    %v624 = vstv %s622
    %v625 = vmul.f32 %v624, %v623
    %v626 = vadd.f32 %v621, %v625
    %s627 = sld [smem:[#allocation11 + $0x1e]]
    %v628 = vld [vmem:[%s378] sm:$0xff]
    %v629 = vstv %s627
    %v630 = vmul.f32 %v629, %v628
    %v631 = vadd.f32 %v626, %v630
    %s632 = sld [smem:[#allocation11 + $0x1f]]
    %v633 = vld [vmem:[%s378 + $0x1] sm:$0xff]
    %v634 = vstv %s632
    %v635 = vmul.f32 %v634, %v633
    %v636 = vadd.f32 %v631, %v635
    %s637 = sld [smem:[#allocation11 + $0x20]]
    %v638 = vld [vmem:[%s378 + $0x2] sm:$0xff]
    %v639 = vstv %s637
    %v640 = vmul.f32 %v639, %v638
    %v641 = vadd.f32 %v636, %v640
    %s642 = sld [smem:[#allocation11 + $0x21]]
    %v643 = vld [vmem:[%s378 + $0x3] sm:$0xff]
    %v644 = vstv %s642
    %v645 = vmul.f32 %v644, %v643
    %v646 = vadd.f32 %v641, %v645
    %s647 = sld [smem:[#allocation11 + $0x22]]
    %v648 = vld [vmem:[%s378 + $0x4] sm:$0xff]
    %v649 = vstv %s647
    %v650 = vmul.f32 %v649, %v648
    %v651 = vadd.f32 %v646, %v650
    %s652 = sld [smem:[#allocation11 + $0x23]]
    %v653 = vld [vmem:[%s467] sm:$0xff]
    %v654 = vstv %s652
    %v655 = vmul.f32 %v654, %v653
    %v656 = vadd.f32 %v651, %v655
    %s657 = sld [smem:[#allocation11 + $0x24]]
    %v658 = vld [vmem:[%s467 + $0x1] sm:$0xff]
    %v659 = vstv %s657
    %v660 = vmul.f32 %v659, %v658
    %v661 = vadd.f32 %v656, %v660
    %s662 = sld [smem:[#allocation11 + $0x25]]
    %v663 = vld [vmem:[%s467 + $0x2] sm:$0xff]
    %v664 = vstv %s662
    %v665 = vmul.f32 %v664, %v663
    %v666 = vadd.f32 %v661, %v665
    %s667 = sld [smem:[#allocation11 + $0x26]]
    %v668 = vld [vmem:[%s467 + $0x3] sm:$0xff]
    %v669 = vstv %s667
    %v670 = vmul.f32 %v669, %v668
    %v671 = vadd.f32 %v666, %v670
    %s672 = sld [smem:[#allocation11 + $0x27]]
    %v673 = vld [vmem:[%s467 + $0x4] sm:$0xff]
    %v674 = vstv %s672
    %v675 = vmul.f32 %v674, %v673
    %v676 = vadd.f32 %v671, %v675
    %v677 = vmul.f32 %v676, 0.01
    %v678 = vmax.f32 %v676, %v677
    %s679 = scalar_lea.vmem [#allocation14], 8
    %680 = vst [vmem:[%s679] sm:$0xff] %v678
    %s681 = sld [smem:[#allocation12 + $0x2]]
    %v682 = vstv %s681
    %s683 = sld [smem:[#allocation11 + $0x28]]
    %v684 = vld [vmem:[#allocation3] sm:$0xff]
    %v685 = vstv %s683
    %v686 = vmul.f32 %v685, %v684
    %v687 = vadd.f32 %v682, %v686
    %s688 = sld [smem:[#allocation11 + $0x29]]
    %v689 = vld [vmem:[#allocation3 + $0x1] sm:$0xff]
    %v690 = vstv %s688
    %v691 = vmul.f32 %v690, %v689
    %v692 = vadd.f32 %v687, %v691
    %s693 = sld [smem:[#allocation11 + $0x2a]]
    %v694 = vld [vmem:[#allocation3 + $0x2] sm:$0xff]
    %v695 = vstv %s693
    %v696 = vmul.f32 %v695, %v694
    %v697 = vadd.f32 %v692, %v696
    %s698 = sld [smem:[#allocation11 + $0x2b]]
    %v699 = vld [vmem:[#allocation3 + $0x3] sm:$0xff]
    %v700 = vstv %s698
    %v701 = vmul.f32 %v700, %v699
    %v702 = vadd.f32 %v697, %v701
    %s703 = sld [smem:[#allocation11 + $0x2c]]
    %v704 = vld [vmem:[#allocation3 + $0x4] sm:$0xff]
    %v705 = vstv %s703
    %v706 = vmul.f32 %v705, %v704
    %v707 = vadd.f32 %v702, %v706
    %s708 = sld [smem:[#allocation11 + $0x2d]]
    %v709 = vld [vmem:[%s289] sm:$0xff]
    %v710 = vstv %s708
    %v711 = vmul.f32 %v710, %v709
    %v712 = vadd.f32 %v707, %v711
    %s713 = sld [smem:[#allocation11 + $0x2e]]
    %v714 = vld [vmem:[%s289 + $0x1] sm:$0xff]
    %v715 = vstv %s713
    %v716 = vmul.f32 %v715, %v714
    %v717 = vadd.f32 %v712, %v716
    %s718 = sld [smem:[#allocation11 + $0x2f]]
    %v719 = vld [vmem:[%s289 + $0x2] sm:$0xff]
    %v720 = vstv %s718
    %v721 = vmul.f32 %v720, %v719
    %v722 = vadd.f32 %v717, %v721
    %s723 = sld [smem:[#allocation11 + $0x30]]
    %v724 = vld [vmem:[%s289 + $0x3] sm:$0xff]
    %v725 = vstv %s723
    %v726 = vmul.f32 %v725, %v724
    %v727 = vadd.f32 %v722, %v726
    %s728 = sld [smem:[#allocation11 + $0x31]]
    %v729 = vld [vmem:[%s289 + $0x4] sm:$0xff]
    %v730 = vstv %s728
    %v731 = vmul.f32 %v730, %v729
    %v732 = vadd.f32 %v727, %v731
    %s733 = sld [smem:[#allocation11 + $0x32]]
    %v734 = vld [vmem:[%s378] sm:$0xff]
    %v735 = vstv %s733
    %v736 = vmul.f32 %v735, %v734
    %v737 = vadd.f32 %v732, %v736
    %s738 = sld [smem:[#allocation11 + $0x33]]
    %v739 = vld [vmem:[%s378 + $0x1] sm:$0xff]
    %v740 = vstv %s738
    %v741 = vmul.f32 %v740, %v739
    %v742 = vadd.f32 %v737, %v741
    %s743 = sld [smem:[#allocation11 + $0x34]]
    %v744 = vld [vmem:[%s378 + $0x2] sm:$0xff]
    %v745 = vstv %s743
    %v746 = vmul.f32 %v745, %v744
    %v747 = vadd.f32 %v742, %v746
    %s748 = sld [smem:[#allocation11 + $0x35]]
    %v749 = vld [vmem:[%s378 + $0x3] sm:$0xff]
    %v750 = vstv %s748
    %v751 = vmul.f32 %v750, %v749
    %v752 = vadd.f32 %v747, %v751
    %s753 = sld [smem:[#allocation11 + $0x36]]
    %v754 = vld [vmem:[%s378 + $0x4] sm:$0xff]
    %v755 = vstv %s753
    %v756 = vmul.f32 %v755, %v754
    %v757 = vadd.f32 %v752, %v756
    %s758 = sld [smem:[#allocation11 + $0x37]]
    %v759 = vld [vmem:[%s467] sm:$0xff]
    %v760 = vstv %s758
    %v761 = vmul.f32 %v760, %v759
    %v762 = vadd.f32 %v757, %v761
    %s763 = sld [smem:[#allocation11 + $0x38]]
    %v764 = vld [vmem:[%s467 + $0x1] sm:$0xff]
    %v765 = vstv %s763
    %v766 = vmul.f32 %v765, %v764
    %v767 = vadd.f32 %v762, %v766
    %s768 = sld [smem:[#allocation11 + $0x39]]
    %v769 = vld [vmem:[%s467 + $0x2] sm:$0xff]
    %v770 = vstv %s768
    %v771 = vmul.f32 %v770, %v769
    %v772 = vadd.f32 %v767, %v771
    %s773 = sld [smem:[#allocation11 + $0x3a]]
    %v774 = vld [vmem:[%s467 + $0x3] sm:$0xff]
    %v775 = vstv %s773
    %v776 = vmul.f32 %v775, %v774
    %v777 = vadd.f32 %v772, %v776
    %s778 = sld [smem:[#allocation11 + $0x3b]]
    %v779 = vld [vmem:[%s467 + $0x4] sm:$0xff]
    %v780 = vstv %s778
    %v781 = vmul.f32 %v780, %v779
    %v782 = vadd.f32 %v777, %v781
    %v783 = vmul.f32 %v782, 0.01
    %v784 = vmax.f32 %v782, %v783
    %s785 = scalar_lea.vmem [#allocation14], 16
    %786 = vst [vmem:[%s785] sm:$0xff] %v784
    %s787 = sld [smem:[#allocation12 + $0x3]]
    %v788 = vstv %s787
    %s789 = sld [smem:[#allocation11 + $0x3c]]
    %v790 = vld [vmem:[#allocation3] sm:$0xff]
    %v791 = vstv %s789
    %v792 = vmul.f32 %v791, %v790
    %v793 = vadd.f32 %v788, %v792
    %s794 = sld [smem:[#allocation11 + $0x3d]]
    %v795 = vld [vmem:[#allocation3 + $0x1] sm:$0xff]
    %v796 = vstv %s794
    %v797 = vmul.f32 %v796, %v795
    %v798 = vadd.f32 %v793, %v797
    %s799 = sld [smem:[#allocation11 + $0x3e]]
    %v800 = vld [vmem:[#allocation3 + $0x2] sm:$0xff]
    %v801 = vstv %s799
    %v802 = vmul.f32 %v801, %v800
    %v803 = vadd.f32 %v798, %v802
    %s804 = sld [smem:[#allocation11 + $0x3f]]
    %v805 = vld [vmem:[#allocation3 + $0x3] sm:$0xff]
    %v806 = vstv %s804
    %v807 = vmul.f32 %v806, %v805
    %v808 = vadd.f32 %v803, %v807
    %s809 = sld [smem:[#allocation11 + $0x40]]
    %v810 = vld [vmem:[#allocation3 + $0x4] sm:$0xff]
    %v811 = vstv %s809
    %v812 = vmul.f32 %v811, %v810
    %v813 = vadd.f32 %v808, %v812
    %s814 = sld [smem:[#allocation11 + $0x41]]
    %v815 = vld [vmem:[%s289] sm:$0xff]
    %v816 = vstv %s814
    %v817 = vmul.f32 %v816, %v815
    %v818 = vadd.f32 %v813, %v817
    %s819 = sld [smem:[#allocation11 + $0x42]]
    %v820 = vld [vmem:[%s289 + $0x1] sm:$0xff]
    %v821 = vstv %s819
    %v822 = vmul.f32 %v821, %v820
    %v823 = vadd.f32 %v818, %v822
    %s824 = sld [smem:[#allocation11 + $0x43]]
    %v825 = vld [vmem:[%s289 + $0x2] sm:$0xff]
    %v826 = vstv %s824
    %v827 = vmul.f32 %v826, %v825
    %v828 = vadd.f32 %v823, %v827
    %s829 = sld [smem:[#allocation11 + $0x44]]
    %v830 = vld [vmem:[%s289 + $0x3] sm:$0xff]
    %v831 = vstv %s829
    %v832 = vmul.f32 %v831, %v830
    %v833 = vadd.f32 %v828, %v832
    %s834 = sld [smem:[#allocation11 + $0x45]]
    %v835 = vld [vmem:[%s289 + $0x4] sm:$0xff]
    %v836 = vstv %s834
    %v837 = vmul.f32 %v836, %v835
    %v838 = vadd.f32 %v833, %v837
    %s839 = sld [smem:[#allocation11 + $0x46]]
    %v840 = vld [vmem:[%s378] sm:$0xff]
    %v841 = vstv %s839
    %v842 = vmul.f32 %v841, %v840
    %v843 = vadd.f32 %v838, %v842
    %s844 = sld [smem:[#allocation11 + $0x47]]
    %v845 = vld [vmem:[%s378 + $0x1] sm:$0xff]
    %v846 = vstv %s844
    %v847 = vmul.f32 %v846, %v845
    %v848 = vadd.f32 %v843, %v847
    %s849 = sld [smem:[#allocation11 + $0x48]]
    %v850 = vld [vmem:[%s378 + $0x2] sm:$0xff]
    %v851 = vstv %s849
    %v852 = vmul.f32 %v851, %v850
    %v853 = vadd.f32 %v848, %v852
    %s854 = sld [smem:[#allocation11 + $0x49]]
    %v855 = vld [vmem:[%s378 + $0x3] sm:$0xff]
    %v856 = vstv %s854
    %v857 = vmul.f32 %v856, %v855
    %v858 = vadd.f32 %v853, %v857
    %s859 = sld [smem:[#allocation11 + $0x4a]]
    %v860 = vld [vmem:[%s378 + $0x4] sm:$0xff]
    %v861 = vstv %s859
    %v862 = vmul.f32 %v861, %v860
    %v863 = vadd.f32 %v858, %v862
    %s864 = sld [smem:[#allocation11 + $0x4b]]
    %v865 = vld [vmem:[%s467] sm:$0xff]
    %v866 = vstv %s864
    %v867 = vmul.f32 %v866, %v865
    %v868 = vadd.f32 %v863, %v867
    %s869 = sld [smem:[#allocation11 + $0x4c]]
    %v870 = vld [vmem:[%s467 + $0x1] sm:$0xff]
    %v871 = vstv %s869
    %v872 = vmul.f32 %v871, %v870
    %v873 = vadd.f32 %v868, %v872
    %s874 = sld [smem:[#allocation11 + $0x4d]]
    %v875 = vld [vmem:[%s467 + $0x2] sm:$0xff]
    %v876 = vstv %s874
    %v877 = vmul.f32 %v876, %v875
    %v878 = vadd.f32 %v873, %v877
    %s879 = sld [smem:[#allocation11 + $0x4e]]
    %v880 = vld [vmem:[%s467 + $0x3] sm:$0xff]
    %v881 = vstv %s879
    %v882 = vmul.f32 %v881, %v880
    %v883 = vadd.f32 %v878, %v882
    %s884 = sld [smem:[#allocation11 + $0x4f]]
    %v885 = vld [vmem:[%s467 + $0x4] sm:$0xff]
    %v886 = vstv %s884
    %v887 = vmul.f32 %v886, %v885
    %v888 = vadd.f32 %v883, %v887
    %v889 = vmul.f32 %v888, 0.01
    %v890 = vmax.f32 %v888, %v889
    %s891 = scalar_lea.vmem [#allocation14], 24
    %892 = vst [vmem:[%s891] sm:$0xff] %v890
    %s893 = sld [smem:[#allocation12 + $0x4]]
    %v894 = vstv %s893
    %s895 = sld [smem:[#allocation11 + $0x50]]
    %v896 = vld [vmem:[#allocation3] sm:$0xff]
    %v897 = vstv %s895
    %v898 = vmul.f32 %v897, %v896
    %v899 = vadd.f32 %v894, %v898
    %s900 = sld [smem:[#allocation11 + $0x51]]
    %v901 = vld [vmem:[#allocation3 + $0x1] sm:$0xff]
    %v902 = vstv %s900
    %v903 = vmul.f32 %v902, %v901
    %v904 = vadd.f32 %v899, %v903
    %s905 = sld [smem:[#allocation11 + $0x52]]
    %v906 = vld [vmem:[#allocation3 + $0x2] sm:$0xff]
    %v907 = vstv %s905
    %v908 = vmul.f32 %v907, %v906
    %v909 = vadd.f32 %v904, %v908
    %s910 = sld [smem:[#allocation11 + $0x53]]
    %v911 = vld [vmem:[#allocation3 + $0x3] sm:$0xff]
    %v912 = vstv %s910
    %v913 = vmul.f32 %v912, %v911
    %v914 = vadd.f32 %v909, %v913
    %s915 = sld [smem:[#allocation11 + $0x54]]
    %v916 = vld [vmem:[#allocation3 + $0x4] sm:$0xff]
    %v917 = vstv %s915
    %v918 = vmul.f32 %v917, %v916
    %v919 = vadd.f32 %v914, %v918
    %s920 = sld [smem:[#allocation11 + $0x55]]
    %v921 = vld [vmem:[%s289] sm:$0xff]
    %v922 = vstv %s920
    %v923 = vmul.f32 %v922, %v921
    %v924 = vadd.f32 %v919, %v923
    %s925 = sld [smem:[#allocation11 + $0x56]]
    %v926 = vld [vmem:[%s289 + $0x1] sm:$0xff]
    %v927 = vstv %s925
    %v928 = vmul.f32 %v927, %v926
    %v929 = vadd.f32 %v924, %v928
    %s930 = sld [smem:[#allocation11 + $0x57]]
    %v931 = vld [vmem:[%s289 + $0x2] sm:$0xff]
    %v932 = vstv %s930
    %v933 = vmul.f32 %v932, %v931
    %v934 = vadd.f32 %v929, %v933
    %s935 = sld [smem:[#allocation11 + $0x58]]
    %v936 = vld [vmem:[%s289 + $0x3] sm:$0xff]
    %v937 = vstv %s935
    %v938 = vmul.f32 %v937, %v936
    %v939 = vadd.f32 %v934, %v938
    %s940 = sld [smem:[#allocation11 + $0x59]]
    %v941 = vld [vmem:[%s289 + $0x4] sm:$0xff]
    %v942 = vstv %s940
    %v943 = vmul.f32 %v942, %v941
    %v944 = vadd.f32 %v939, %v943
    %s945 = sld [smem:[#allocation11 + $0x5a]]
    %v946 = vld [vmem:[%s378] sm:$0xff]
    %v947 = vstv %s945
    %v948 = vmul.f32 %v947, %v946
    %v949 = vadd.f32 %v944, %v948
    %s950 = sld [smem:[#allocation11 + $0x5b]]
    %v951 = vld [vmem:[%s378 + $0x1] sm:$0xff]
    %v952 = vstv %s950
    %v953 = vmul.f32 %v952, %v951
    %v954 = vadd.f32 %v949, %v953
    %s955 = sld [smem:[#allocation11 + $0x5c]]
    %v956 = vld [vmem:[%s378 + $0x2] sm:$0xff]
    %v957 = vstv %s955
    %v958 = vmul.f32 %v957, %v956
    %v959 = vadd.f32 %v954, %v958
    %s960 = sld [smem:[#allocation11 + $0x5d]]
    %v961 = vld [vmem:[%s378 + $0x3] sm:$0xff]
    %v962 = vstv %s960
    %v963 = vmul.f32 %v962, %v961
    %v964 = vadd.f32 %v959, %v963
    %s965 = sld [smem:[#allocation11 + $0x5e]]
    %v966 = vld [vmem:[%s378 + $0x4] sm:$0xff]
    %v967 = vstv %s965
    %v968 = vmul.f32 %v967, %v966
    %v969 = vadd.f32 %v964, %v968
    %s970 = sld [smem:[#allocation11 + $0x5f]]
    %v971 = vld [vmem:[%s467] sm:$0xff]
    %v972 = vstv %s970
    %v973 = vmul.f32 %v972, %v971
    %v974 = vadd.f32 %v969, %v973
    %s975 = sld [smem:[#allocation11 + $0x60]]
    %v976 = vld [vmem:[%s467 + $0x1] sm:$0xff]
    %v977 = vstv %s975
    %v978 = vmul.f32 %v977, %v976
    %v979 = vadd.f32 %v974, %v978
    %s980 = sld [smem:[#allocation11 + $0x61]]
    %v981 = vld [vmem:[%s467 + $0x2] sm:$0xff]
    %v982 = vstv %s980
    %v983 = vmul.f32 %v982, %v981
    %v984 = vadd.f32 %v979, %v983
    %s985 = sld [smem:[#allocation11 + $0x62]]
    %v986 = vld [vmem:[%s467 + $0x3] sm:$0xff]
    %v987 = vstv %s985
    %v988 = vmul.f32 %v987, %v986
    %v989 = vadd.f32 %v984, %v988
    %s990 = sld [smem:[#allocation11 + $0x63]]
    %v991 = vld [vmem:[%s467 + $0x4] sm:$0xff]
    %v992 = vstv %s990
    %v993 = vmul.f32 %v992, %v991
    %v994 = vadd.f32 %v989, %v993
    %v995 = vmul.f32 %v994, 0.01
    %v996 = vmax.f32 %v994, %v995
    %s997 = scalar_lea.vmem [#allocation14], 32
    %998 = vst [vmem:[%s997] sm:$0xff] %v996
    %s999 = sld [smem:[#allocation12 + $0x5]]
    %v1000 = vstv %s999
    %s1001 = sld [smem:[#allocation11 + $0x64]]
    %v1002 = vld [vmem:[#allocation3] sm:$0xff]
    %v1003 = vstv %s1001
    %v1004 = vmul.f32 %v1003, %v1002
    %v1005 = vadd.f32 %v1000, %v1004
    %s1006 = sld [smem:[#allocation11 + $0x65]]
    %v1007 = vld [vmem:[#allocation3 + $0x1] sm:$0xff]
    %v1008 = vstv %s1006
    %v1009 = vmul.f32 %v1008, %v1007
    %v1010 = vadd.f32 %v1005, %v1009
    %s1011 = sld [smem:[#allocation11 + $0x66]]
    %v1012 = vld [vmem:[#allocation3 + $0x2] sm:$0xff]
    %v1013 = vstv %s1011
    %v1014 = vmul.f32 %v1013, %v1012
    %v1015 = vadd.f32 %v1010, %v1014
    %s1016 = sld [smem:[#allocation11 + $0x67]]
    %v1017 = vld [vmem:[#allocation3 + $0x3] sm:$0xff]
    %v1018 = vstv %s1016
    %v1019 = vmul.f32 %v1018, %v1017
    %v1020 = vadd.f32 %v1015, %v1019
    %s1021 = sld [smem:[#allocation11 + $0x68]]
    %v1022 = vld [vmem:[#allocation3 + $0x4] sm:$0xff]
    %v1023 = vstv %s1021
    %v1024 = vmul.f32 %v1023, %v1022
    %v1025 = vadd.f32 %v1020, %v1024
    %s1026 = sld [smem:[#allocation11 + $0x69]]
    %v1027 = vld [vmem:[%s289] sm:$0xff]
    %v1028 = vstv %s1026
    %v1029 = vmul.f32 %v1028, %v1027
    %v1030 = vadd.f32 %v1025, %v1029
    %s1031 = sld [smem:[#allocation11 + $0x6a]]
    %v1032 = vld [vmem:[%s289 + $0x1] sm:$0xff]
    %v1033 = vstv %s1031
    %v1034 = vmul.f32 %v1033, %v1032
    %v1035 = vadd.f32 %v1030, %v1034
    %s1036 = sld [smem:[#allocation11 + $0x6b]]
    %v1037 = vld [vmem:[%s289 + $0x2] sm:$0xff]
    %v1038 = vstv %s1036
    %v1039 = vmul.f32 %v1038, %v1037
    %v1040 = vadd.f32 %v1035, %v1039
    %s1041 = sld [smem:[#allocation11 + $0x6c]]
    %v1042 = vld [vmem:[%s289 + $0x3] sm:$0xff]
    %v1043 = vstv %s1041
    %v1044 = vmul.f32 %v1043, %v1042
    %v1045 = vadd.f32 %v1040, %v1044
    %s1046 = sld [smem:[#allocation11 + $0x6d]]
    %v1047 = vld [vmem:[%s289 + $0x4] sm:$0xff]
    %v1048 = vstv %s1046
    %v1049 = vmul.f32 %v1048, %v1047
    %v1050 = vadd.f32 %v1045, %v1049
    %s1051 = sld [smem:[#allocation11 + $0x6e]]
    %v1052 = vld [vmem:[%s378] sm:$0xff]
    %v1053 = vstv %s1051
    %v1054 = vmul.f32 %v1053, %v1052
    %v1055 = vadd.f32 %v1050, %v1054
    %s1056 = sld [smem:[#allocation11 + $0x6f]]
    %v1057 = vld [vmem:[%s378 + $0x1] sm:$0xff]
    %v1058 = vstv %s1056
    %v1059 = vmul.f32 %v1058, %v1057
    %v1060 = vadd.f32 %v1055, %v1059
    %s1061 = sld [smem:[#allocation11 + $0x70]]
    %v1062 = vld [vmem:[%s378 + $0x2] sm:$0xff]
    %v1063 = vstv %s1061
    %v1064 = vmul.f32 %v1063, %v1062
    %v1065 = vadd.f32 %v1060, %v1064
    %s1066 = sld [smem:[#allocation11 + $0x71]]
    %v1067 = vld [vmem:[%s378 + $0x3] sm:$0xff]
    %v1068 = vstv %s1066
    %v1069 = vmul.f32 %v1068, %v1067
    %v1070 = vadd.f32 %v1065, %v1069
    %s1071 = sld [smem:[#allocation11 + $0x72]]
    %v1072 = vld [vmem:[%s378 + $0x4] sm:$0xff]
    %v1073 = vstv %s1071
    %v1074 = vmul.f32 %v1073, %v1072
    %v1075 = vadd.f32 %v1070, %v1074
    %s1076 = sld [smem:[#allocation11 + $0x73]]
    %v1077 = vld [vmem:[%s467] sm:$0xff]
    %v1078 = vstv %s1076
    %v1079 = vmul.f32 %v1078, %v1077
    %v1080 = vadd.f32 %v1075, %v1079
    %s1081 = sld [smem:[#allocation11 + $0x74]]
    %v1082 = vld [vmem:[%s467 + $0x1] sm:$0xff]
    %v1083 = vstv %s1081
    %v1084 = vmul.f32 %v1083, %v1082
    %v1085 = vadd.f32 %v1080, %v1084
    %s1086 = sld [smem:[#allocation11 + $0x75]]
    %v1087 = vld [vmem:[%s467 + $0x2] sm:$0xff]
    %v1088 = vstv %s1086
    %v1089 = vmul.f32 %v1088, %v1087
    %v1090 = vadd.f32 %v1085, %v1089
    %s1091 = sld [smem:[#allocation11 + $0x76]]
    %v1092 = vld [vmem:[%s467 + $0x3] sm:$0xff]
    %v1093 = vstv %s1091
    %v1094 = vmul.f32 %v1093, %v1092
    %v1095 = vadd.f32 %v1090, %v1094
    %s1096 = sld [smem:[#allocation11 + $0x77]]
    %v1097 = vld [vmem:[%s467 + $0x4] sm:$0xff]
    %v1098 = vstv %s1096
    %v1099 = vmul.f32 %v1098, %v1097
    %v1100 = vadd.f32 %v1095, %v1099
    %v1101 = vmul.f32 %v1100, 0.01
    %v1102 = vmax.f32 %v1100, %v1101
    %s1103 = scalar_lea.vmem [#allocation14], 40
    %1104 = vst [vmem:[%s1103] sm:$0xff] %v1102
    %s1105 = sld [smem:[#allocation12 + $0x6]]
    %v1106 = vstv %s1105
    %s1107 = sld [smem:[#allocation11 + $0x78]]
    %v1108 = vld [vmem:[#allocation3] sm:$0xff]
    %v1109 = vstv %s1107
    %v1110 = vmul.f32 %v1109, %v1108
    %v1111 = vadd.f32 %v1106, %v1110
    %s1112 = sld [smem:[#allocation11 + $0x79]]
    %v1113 = vld [vmem:[#allocation3 + $0x1] sm:$0xff]
    %v1114 = vstv %s1112
    %v1115 = vmul.f32 %v1114, %v1113
    %v1116 = vadd.f32 %v1111, %v1115
    %s1117 = sld [smem:[#allocation11 + $0x7a]]
    %v1118 = vld [vmem:[#allocation3 + $0x2] sm:$0xff]
    %v1119 = vstv %s1117
    %v1120 = vmul.f32 %v1119, %v1118
    %v1121 = vadd.f32 %v1116, %v1120
    %s1122 = sld [smem:[#allocation11 + $0x7b]]
    %v1123 = vld [vmem:[#allocation3 + $0x3] sm:$0xff]
    %v1124 = vstv %s1122
    %v1125 = vmul.f32 %v1124, %v1123
    %v1126 = vadd.f32 %v1121, %v1125
    %s1127 = sld [smem:[#allocation11 + $0x7c]]
    %v1128 = vld [vmem:[#allocation3 + $0x4] sm:$0xff]
    %v1129 = vstv %s1127
    %v1130 = vmul.f32 %v1129, %v1128
    %v1131 = vadd.f32 %v1126, %v1130
    %s1132 = sld [smem:[#allocation11 + $0x7d]]
    %v1133 = vld [vmem:[%s289] sm:$0xff]
    %v1134 = vstv %s1132
    %v1135 = vmul.f32 %v1134, %v1133
    %v1136 = vadd.f32 %v1131, %v1135
    %s1137 = sld [smem:[#allocation11 + $0x7e]]
    %v1138 = vld [vmem:[%s289 + $0x1] sm:$0xff]
    %v1139 = vstv %s1137
    %v1140 = vmul.f32 %v1139, %v1138
    %v1141 = vadd.f32 %v1136, %v1140
    %s1142 = sld [smem:[#allocation11 + $0x7f]]
    %v1143 = vld [vmem:[%s289 + $0x2] sm:$0xff]
    %v1144 = vstv %s1142
    %v1145 = vmul.f32 %v1144, %v1143
    %v1146 = vadd.f32 %v1141, %v1145
    %s1147 = sld [smem:[#allocation11 + $0x80]]
    %v1148 = vld [vmem:[%s289 + $0x3] sm:$0xff]
    %v1149 = vstv %s1147
    %v1150 = vmul.f32 %v1149, %v1148
    %v1151 = vadd.f32 %v1146, %v1150
    %s1152 = sld [smem:[#allocation11 + $0x81]]
    %v1153 = vld [vmem:[%s289 + $0x4] sm:$0xff]
    %v1154 = vstv %s1152
    %v1155 = vmul.f32 %v1154, %v1153
    %v1156 = vadd.f32 %v1151, %v1155
    %s1157 = sld [smem:[#allocation11 + $0x82]]
    %v1158 = vld [vmem:[%s378] sm:$0xff]
    %v1159 = vstv %s1157
    %v1160 = vmul.f32 %v1159, %v1158
    %v1161 = vadd.f32 %v1156, %v1160
    %s1162 = sld [smem:[#allocation11 + $0x83]]
    %v1163 = vld [vmem:[%s378 + $0x1] sm:$0xff]
    %v1164 = vstv %s1162
    %v1165 = vmul.f32 %v1164, %v1163
    %v1166 = vadd.f32 %v1161, %v1165
    %s1167 = sld [smem:[#allocation11 + $0x84]]
    %v1168 = vld [vmem:[%s378 + $0x2] sm:$0xff]
    %v1169 = vstv %s1167
    %v1170 = vmul.f32 %v1169, %v1168
    %v1171 = vadd.f32 %v1166, %v1170
    %s1172 = sld [smem:[#allocation11 + $0x85]]
    %v1173 = vld [vmem:[%s378 + $0x3] sm:$0xff]
    %v1174 = vstv %s1172
    %v1175 = vmul.f32 %v1174, %v1173
    %v1176 = vadd.f32 %v1171, %v1175
    %s1177 = sld [smem:[#allocation11 + $0x86]]
    %v1178 = vld [vmem:[%s378 + $0x4] sm:$0xff]
    %v1179 = vstv %s1177
    %v1180 = vmul.f32 %v1179, %v1178
    %v1181 = vadd.f32 %v1176, %v1180
    %s1182 = sld [smem:[#allocation11 + $0x87]]
    %v1183 = vld [vmem:[%s467] sm:$0xff]
    %v1184 = vstv %s1182
    %v1185 = vmul.f32 %v1184, %v1183
    %v1186 = vadd.f32 %v1181, %v1185
    %s1187 = sld [smem:[#allocation11 + $0x88]]
    %v1188 = vld [vmem:[%s467 + $0x1] sm:$0xff]
    %v1189 = vstv %s1187
    %v1190 = vmul.f32 %v1189, %v1188
    %v1191 = vadd.f32 %v1186, %v1190
    %s1192 = sld [smem:[#allocation11 + $0x89]]
    %v1193 = vld [vmem:[%s467 + $0x2] sm:$0xff]
    %v1194 = vstv %s1192
    %v1195 = vmul.f32 %v1194, %v1193
    %v1196 = vadd.f32 %v1191, %v1195
    %s1197 = sld [smem:[#allocation11 + $0x8a]]
    %v1198 = vld [vmem:[%s467 + $0x3] sm:$0xff]
    %v1199 = vstv %s1197
    %v1200 = vmul.f32 %v1199, %v1198
    %v1201 = vadd.f32 %v1196, %v1200
    %s1202 = sld [smem:[#allocation11 + $0x8b]]
    %v1203 = vld [vmem:[%s467 + $0x4] sm:$0xff]
    %v1204 = vstv %s1202
    %v1205 = vmul.f32 %v1204, %v1203
    %v1206 = vadd.f32 %v1201, %v1205
    %v1207 = vmul.f32 %v1206, 0.01
    %v1208 = vmax.f32 %v1206, %v1207
    %s1209 = scalar_lea.vmem [#allocation14], 48
    %1210 = vst [vmem:[%s1209] sm:$0xff] %v1208
    %s1211 = sld [smem:[#allocation12 + $0x7]]
    %v1212 = vstv %s1211
    %s1213 = sld [smem:[#allocation11 + $0x8c]]
    %v1214 = vld [vmem:[#allocation3] sm:$0xff]
    %v1215 = vstv %s1213
    %v1216 = vmul.f32 %v1215, %v1214
    %v1217 = vadd.f32 %v1212, %v1216
    %s1218 = sld [smem:[#allocation11 + $0x8d]]
    %v1219 = vld [vmem:[#allocation3 + $0x1] sm:$0xff]
    %v1220 = vstv %s1218
    %v1221 = vmul.f32 %v1220, %v1219
    %v1222 = vadd.f32 %v1217, %v1221
    %s1223 = sld [smem:[#allocation11 + $0x8e]]
    %v1224 = vld [vmem:[#allocation3 + $0x2] sm:$0xff]
    %v1225 = vstv %s1223
    %v1226 = vmul.f32 %v1225, %v1224
    %v1227 = vadd.f32 %v1222, %v1226
    %s1228 = sld [smem:[#allocation11 + $0x8f]]
    %v1229 = vld [vmem:[#allocation3 + $0x3] sm:$0xff]
    %v1230 = vstv %s1228
    %v1231 = vmul.f32 %v1230, %v1229
    %v1232 = vadd.f32 %v1227, %v1231
    %s1233 = sld [smem:[#allocation11 + $0x90]]
    %v1234 = vld [vmem:[#allocation3 + $0x4] sm:$0xff]
    %v1235 = vstv %s1233
    %v1236 = vmul.f32 %v1235, %v1234
    %v1237 = vadd.f32 %v1232, %v1236
    %s1238 = sld [smem:[#allocation11 + $0x91]]
    %v1239 = vld [vmem:[%s289] sm:$0xff]
    %v1240 = vstv %s1238
    %v1241 = vmul.f32 %v1240, %v1239
    %v1242 = vadd.f32 %v1237, %v1241
    %s1243 = sld [smem:[#allocation11 + $0x92]]
    %v1244 = vld [vmem:[%s289 + $0x1] sm:$0xff]
    %v1245 = vstv %s1243
    %v1246 = vmul.f32 %v1245, %v1244
    %v1247 = vadd.f32 %v1242, %v1246
    %s1248 = sld [smem:[#allocation11 + $0x93]]
    %v1249 = vld [vmem:[%s289 + $0x2] sm:$0xff]
    %v1250 = vstv %s1248
    %v1251 = vmul.f32 %v1250, %v1249
    %v1252 = vadd.f32 %v1247, %v1251
    %s1253 = sld [smem:[#allocation11 + $0x94]]
    %v1254 = vld [vmem:[%s289 + $0x3] sm:$0xff]
    %v1255 = vstv %s1253
    %v1256 = vmul.f32 %v1255, %v1254
    %v1257 = vadd.f32 %v1252, %v1256
    %s1258 = sld [smem:[#allocation11 + $0x95]]
    %v1259 = vld [vmem:[%s289 + $0x4] sm:$0xff]
    %v1260 = vstv %s1258
    %v1261 = vmul.f32 %v1260, %v1259
    %v1262 = vadd.f32 %v1257, %v1261
    %s1263 = sld [smem:[#allocation11 + $0x96]]
    %v1264 = vld [vmem:[%s378] sm:$0xff]
    %v1265 = vstv %s1263
    %v1266 = vmul.f32 %v1265, %v1264
    %v1267 = vadd.f32 %v1262, %v1266
    %s1268 = sld [smem:[#allocation11 + $0x97]]
    %v1269 = vld [vmem:[%s378 + $0x1] sm:$0xff]
    %v1270 = vstv %s1268
    %v1271 = vmul.f32 %v1270, %v1269
    %v1272 = vadd.f32 %v1267, %v1271
    %s1273 = sld [smem:[#allocation11 + $0x98]]
    %v1274 = vld [vmem:[%s378 + $0x2] sm:$0xff]
    %v1275 = vstv %s1273
    %v1276 = vmul.f32 %v1275, %v1274
    %v1277 = vadd.f32 %v1272, %v1276
    %s1278 = sld [smem:[#allocation11 + $0x99]]
    %v1279 = vld [vmem:[%s378 + $0x3] sm:$0xff]
    %v1280 = vstv %s1278
    %v1281 = vmul.f32 %v1280, %v1279
    %v1282 = vadd.f32 %v1277, %v1281
    %s1283 = sld [smem:[#allocation11 + $0x9a]]
    %v1284 = vld [vmem:[%s378 + $0x4] sm:$0xff]
    %v1285 = vstv %s1283
    %v1286 = vmul.f32 %v1285, %v1284
    %v1287 = vadd.f32 %v1282, %v1286
    %s1288 = sld [smem:[#allocation11 + $0x9b]]
    %v1289 = vld [vmem:[%s467] sm:$0xff]
    %v1290 = vstv %s1288
    %v1291 = vmul.f32 %v1290, %v1289
    %v1292 = vadd.f32 %v1287, %v1291
    %s1293 = sld [smem:[#allocation11 + $0x9c]]
    %v1294 = vld [vmem:[%s467 + $0x1] sm:$0xff]
    %v1295 = vstv %s1293
    %v1296 = vmul.f32 %v1295, %v1294
    %v1297 = vadd.f32 %v1292, %v1296
    %s1298 = sld [smem:[#allocation11 + $0x9d]]
    %v1299 = vld [vmem:[%s467 + $0x2] sm:$0xff]
    %v1300 = vstv %s1298
    %v1301 = vmul.f32 %v1300, %v1299
    %v1302 = vadd.f32 %v1297, %v1301
    %s1303 = sld [smem:[#allocation11 + $0x9e]]
    %v1304 = vld [vmem:[%s467 + $0x3] sm:$0xff]
    %v1305 = vstv %s1303
    %v1306 = vmul.f32 %v1305, %v1304
    %v1307 = vadd.f32 %v1302, %v1306
    %s1308 = sld [smem:[#allocation11 + $0x9f]]
    %v1309 = vld [vmem:[%s467 + $0x4] sm:$0xff]
    %v1310 = vstv %s1308
    %v1311 = vmul.f32 %v1310, %v1309
    %v1312 = vadd.f32 %v1307, %v1311
    %v1313 = vmul.f32 %v1312, 0.01
    %v1314 = vmax.f32 %v1312, %v1313
    %s1315 = scalar_lea.vmem [#allocation14], 56
    %1316 = vst [vmem:[%s1315] sm:$0xff] %v1314
    // Predicated region
    $region42: #{tpu_custom_call.1} parent=1 // pred_check
      _
    $region43: #{tpu_custom_call.1} parent=1 // pred_check_branch
      %1318 = sbr.rel (0) target = $region45
    $region44: #{tpu_custom_call.1} parent=1 // pred_region
      %s1320 = ssub.s32 1024, 1024
      %1321 = vsyncadd [#allocation6], %s1320
      %s1322 = sshll.u32 [#allocation14], 4
      %s1323 = int_to_ptr.vmem [resolvable:$true] %s1322
      %1328 = dma.vmem_to_hbm [thread:$0]  %s1323, 1024, %s5, [#allocation6], 128, 128, 8
    $region45: #{tpu_custom_call.1} parent=1 // pred_fallthru
      _
    // Predicated region
    $region46: #{tpu_custom_call.1} parent=1 // pred_check
      _
    $region47: #{tpu_custom_call.1} parent=1 // pred_check_branch
      %1330 = sbr.rel (0) target = $region49
    $region48: #{tpu_custom_call.1} parent=1 // pred_region
      %1331 = dma.done [#allocation6], 1024
    $region49: #{tpu_custom_call.1} parent=1 // pred_fallthru
      _
    %1332 = vsyncpa [#allocation5], 1
    %1333 = vsyncpa [#allocation6], 1
    %1334 = vsyncpa [#allocation7], 1
    %1335 = vsyncpa [#allocation10], 1
    %1336 = vsyncpa [#allocation13], 1

</llo_original>
